<compile_context>
chip_gen: v6e
topology: v6e:2x2x1
jax: 0.10.0
libtpu: 0.0.40
codegen_flags: <defaults>
</compile_context>

<pallas_src>
import functools

import jax
import jax.numpy as jnp
from jax.experimental import pallas as pl
from jax.experimental.pallas import tpu as pltpu

NUM_FILTERS = 256
EMBED = 768
KSIZES = (2, 3, 4)
NUM_CLASSES = 4
FC_PAD = 128                                    # pad Linear(768 -> 4) to 128 lanes
TOTAL_CONV_COLS = sum(KSIZES) * NUM_FILTERS     # (2+3+4)*256 = 2304
FEAT = NUM_FILTERS * len(KSIZES)                # 768


def _cnn_kernel(x_ref, w_ref, b2_ref, b3_ref, b4_ref, wfc_ref, bfc_ref,
                o_ref, feat_ref):
    """Fused TextCNN forward for one batch block.

    x_ref   : (Bb, S, 768)     input block (f32 or bf16)
    w_ref   : (768, 2304)      stacked conv weights, columns = (k, offset j, filter)
    b*_ref  : (1, 256)         per-k conv biases (f32)
    wfc_ref : (768, 128)       FC weight padded with zero columns
    bfc_ref : (1, 128)         FC bias, padded entries = -1e30
    o_ref   : (Bb, 128)        softmax probs (real classes in lanes 0..3)
    feat_ref: (Bb, 768)        VMEM scratch for the concatenated pooled features
    """
    Bb, S, E = x_ref.shape
    F = NUM_FILTERS

    # One big MXU matmul over flattened (batch*time) rows.
    xf = x_ref[...].reshape(Bb * S, E)
    h = jnp.dot(xf, w_ref[...], preferred_element_type=jnp.float32)  # (Bb*S, 2304)
    h = h.reshape(Bb, S, TOTAL_CONV_COLS)

    # Recover each conv-k output by shift-and-add of the per-offset partials,
    # then max-pool over time, then bias + ReLU (monotone => same result).
    col = 0
    for idx, (k, b_ref) in enumerate(zip(KSIZES, (b2_ref, b3_ref, b4_ref))):
        T = S - k + 1
        acc = h[:, 0:T, col:col + F]
        for j in range(1, k):
            acc = acc + h[:, j:j + T, col + j * F:col + (j + 1) * F]
        p = jnp.max(acc, axis=1)                                    # (Bb, 256)
        feat_ref[:, idx * F:(idx + 1) * F] = jnp.maximum(p + b_ref[...], 0.0)
        col += k * F

    # TODO(synk): dropout(p=0.1) is identity in eval mode; training-mode RNG mask not implemented.
    feat = feat_ref[...]
    logits = jnp.dot(feat.astype(wfc_ref.dtype), wfc_ref[...],
                     preferred_element_type=jnp.float32) + bfc_ref[...]  # (Bb, 128)

    m = jnp.max(logits, axis=1, keepdims=True)
    e = jnp.exp(logits - m)                     # padded lanes: exp(-1e30 - m) == 0
    o_ref[...] = e * pl.reciprocal(jnp.sum(e, axis=1, keepdims=True), approx=True)


@functools.partial(jax.jit, static_argnames=("matmul_dtype",))
def cnn_forward(x, params, matmul_dtype=jnp.float32):
    """x: (B, S, 768) float32.  Returns softmax probs (B, 4)."""
    B, S, E = x.shape
    assert E == EMBED
    assert S >= max(KSIZES), "sequence length must be >= 4 for the k=4 conv"

    (_, b2), (_, b3), (_, b4) = params["convs"]
    wfc, bfc = params["fc"]

    # Stack conv weights: per k, (k*768, 256) -> (k, 768, 256) -> (768, k*256),
    # concatenated over k -> (768, 2304).  Column block (k, j) = offset-j slice.
    w_blocks = []
    for k, (w, _) in zip(KSIZES, params["convs"]):
        w_blocks.append(
            jnp.transpose(w.reshape(k, EMBED, NUM_FILTERS), (1, 0, 2))
            .reshape(EMBED, k * NUM_FILTERS))
    w_all = jnp.concatenate(w_blocks, axis=1).astype(matmul_dtype)

    # FC padded to 128 output lanes; padded bias = -1e30 kills those columns in softmax.
    wfc_pad = jnp.zeros((FEAT, FC_PAD), jnp.float32).at[:, :NUM_CLASSES].set(wfc)
    wfc_pad = wfc_pad.astype(matmul_dtype)
    bfc_pad = jnp.full((1, FC_PAD), -1e30, jnp.float32).at[:, :NUM_CLASSES].set(bfc)

    x_in = x.astype(matmul_dtype)

    block_b = B if B <= 32 else 32
    nb = pl.cdiv(B, block_b)

    itemsize = jnp.dtype(matmul_dtype).itemsize
    cost = pl.CostEstimate(
        flops=2 * B * S * EMBED * TOTAL_CONV_COLS + 2 * B * FEAT * FC_PAD,
        transcendentals=B * FC_PAD,
        bytes_accessed=(B * S * EMBED * itemsize
                        + EMBED * TOTAL_CONV_COLS * itemsize
                        + FEAT * FC_PAD * itemsize
                        + 3 * NUM_FILTERS * 4 + FC_PAD * 4
                        + B * FC_PAD * 4),
    )

    in_specs = [
        pl.BlockSpec((block_b, S, EMBED), lambda i: (i, 0, 0)),          # x (tiled over batch)
        pl.BlockSpec((EMBED, TOTAL_CONV_COLS), lambda i: (0, 0)),        # stacked conv W (resident)
        pl.BlockSpec((1, NUM_FILTERS), lambda i: (0, 0)),                # b2
        pl.BlockSpec((1, NUM_FILTERS), lambda i: (0, 0)),                # b3
        pl.BlockSpec((1, NUM_FILTERS), lambda i: (0, 0)),                # b4
        pl.BlockSpec((FEAT, FC_PAD), lambda i: (0, 0)),                  # fc W (resident)
        pl.BlockSpec((1, FC_PAD), lambda i: (0, 0)),                     # fc b
    ]
    out_specs = pl.BlockSpec((block_b, FC_PAD), lambda i: (i, 0))

    out = pl.pallas_call(
        _cnn_kernel,
        out_shape=jax.ShapeDtypeStruct((B, FC_PAD), jnp.float32),
        grid_spec=pltpu.PrefetchScalarGridSpec(
            num_scalar_prefetch=0,
            grid=(nb,),
            in_specs=in_specs,
            out_specs=out_specs,
            scratch_shapes=[pltpu.VMEM((block_b, FEAT), jnp.float32)],
        ),
        compiler_params=pltpu.CompilerParams(
            dimension_semantics=("parallel",)),
        cost_estimate=cost,
    )(x_in, w_all, b2, b3, b4, wfc_pad, bfc_pad)

    return out[:, :NUM_CLASSES]


def init_params(key):
    """Deterministic init mimicking PyTorch default (uniform(-1/sqrt(fan_in), ...)).

    Conv weight stored as (k*768, 256) == torch_weight.reshape(256, k*768).T,
    FC weight stored as (768, 4) == torch_linear.weight.T.
    """
    params = {"convs": [], "fc": None}
    keys = jax.random.split(key, 2 * len(KSIZES) + 2)
    ki = 0
    for k in KSIZES:
        fan_in = k * EMBED
        bound = 1.0 / jnp.sqrt(fan_in)
        w = jax.random.uniform(keys[ki], (fan_in, NUM_FILTERS),
                               minval=-bound, maxval=bound, dtype=jnp.float32)
        b = jax.random.uniform(keys[ki + 1], (1, NUM_FILTERS),
                               minval=-bound, maxval=bound, dtype=jnp.float32)
        params["convs"].append((w, b))
        ki += 2
    fan_in = NUM_FILTERS * len(KSIZES)
    bound = 1.0 / jnp.sqrt(fan_in)
    wfc = jax.random.uniform(keys[ki], (fan_in, NUM_CLASSES),
                             minval=-bound, maxval=bound, dtype=jnp.float32)
    bfc = jax.random.uniform(keys[ki + 1], (1, NUM_CLASSES),
                             minval=-bound, maxval=bound, dtype=jnp.float32)
    params["fc"] = (wfc, bfc)
    return params


if __name__ == "__main__":
    key = jax.random.PRNGKey(0)
    k_param, k_x = jax.random.split(key)

    B, S = 2, 8  # batch=2, seq_len=8, embed=768 (fixed by the module's conv width)
    x = jax.random.normal(k_x, (B, S, EMBED), dtype=jnp.float32)
    params = init_params(k_param)

    # bf16 MXU operands (f32 accumulation) on bf16-native generations, f32 otherwise.
    kind = jax.devices()[0].device_kind.lower()
    matmul_dtype = jnp.bfloat16 if ("v6" in kind or "v7" in kind) else jnp.float32

    out = cnn_forward(x, params, matmul_dtype=matmul_dtype)
    out = jax.block_until_ready(out)

    assert out.shape == (B, NUM_CLASSES)
    # rows sum to ~1 (approx EUP reciprocal + optional bf16 matmuls => loose tol)
    assert jnp.allclose(jnp.sum(out, axis=1), 1.0, atol=1e-2)
    print("KERNEL_OK")
</pallas_src>

<mosaic_0001>
module attributes {stable_mosaic.version = 11 : i64} {
  func.func @_cnn_kernel(%arg0: i32, %arg1: memref<2x8x768xf32, #tpu.memory_space<vmem>>, %arg2: memref<768x2304xf32, #tpu.memory_space<vmem>>, %arg3: memref<1x256xf32, #tpu.memory_space<vmem>>, %arg4: memref<1x256xf32, #tpu.memory_space<vmem>>, %arg5: memref<1x256xf32, #tpu.memory_space<vmem>>, %arg6: memref<768x128xf32, #tpu.memory_space<vmem>>, %arg7: memref<1x128xf32, #tpu.memory_space<vmem>>, %arg8: memref<2x128xf32, #tpu.memory_space<vmem>>, %arg9: memref<2x768xf32, #tpu.memory_space<vmem>>) attributes {dimension_semantics = [#tpu.dimension_semantics<parallel>], iteration_bounds = array<i64: 1>, scalar_prefetch = 0 : i64, scratch_operands = 1 : i64, tpu.core_type = #tpu.core_type<tc>, window_params = [{transform_indices = @transform_0, window_bounds = array<i64: 2, 8, 768>}, {pipeline_mode = #tpu.pipeline_mode<synchronous>, transform_indices = @transform_1, window_bounds = array<i64: 768, 2304>}, {pipeline_mode = #tpu.pipeline_mode<synchronous>, transform_indices = @transform_2, window_bounds = array<i64: 1, 256>}, {pipeline_mode = #tpu.pipeline_mode<synchronous>, transform_indices = @transform_3, window_bounds = array<i64: 1, 256>}, {pipeline_mode = #tpu.pipeline_mode<synchronous>, transform_indices = @transform_4, window_bounds = array<i64: 1, 256>}, {pipeline_mode = #tpu.pipeline_mode<synchronous>, transform_indices = @transform_5, window_bounds = array<i64: 768, 128>}, {pipeline_mode = #tpu.pipeline_mode<synchronous>, transform_indices = @transform_6, window_bounds = array<i64: 1, 128>}, {transform_indices = @transform_7, window_bounds = array<i64: 2, 128>}]} {
    %c0 = arith.constant 0 : index
    %c0_0 = arith.constant 0 : index
    %c0_1 = arith.constant 0 : index
    %0 = vector.load %arg1[%c0, %c0_0, %c0_1] : memref<2x8x768xf32, #tpu.memory_space<vmem>>, vector<2x8x768xf32>
    %1 = vector.shape_cast %0 : vector<2x8x768xf32> to vector<16x768xf32>
    %c0_2 = arith.constant 0 : index
    %c0_3 = arith.constant 0 : index
    %2 = vector.load %arg2[%c0_2, %c0_3] : memref<768x2304xf32, #tpu.memory_space<vmem>>, vector<768x2304xf32>
    %cst = arith.constant dense<0.000000e+00> : vector<16x2304xf32>
    %3 = tpu.matmul %1, %2, %cst {dimension_numbers = #tpu.dot_dimension_numbers<[1], [0], [0], [1], [0, 0, 1, 1], [], []>} : vector<16x768xf32>, vector<768x2304xf32>, vector<16x2304xf32> -> vector<16x2304xf32>
    %4 = vector.shape_cast %3 : vector<16x2304xf32> to vector<2x8x2304xf32>
    %5 = vector.extract_strided_slice %4 {offsets = [0, 0, 0], sizes = [2, 7, 256], strides = [1, 1, 1]} : vector<2x8x2304xf32> to vector<2x7x256xf32>
    %6 = vector.extract_strided_slice %4 {offsets = [0, 1, 256], sizes = [2, 7, 256], strides = [1, 1, 1]} : vector<2x8x2304xf32> to vector<2x7x256xf32>
    %7 = arith.addf %5, %6 : vector<2x7x256xf32>
    %cst_4 = arith.constant dense<0xFF800000> : vector<2x256xf32>
    %8 = vector.multi_reduction <maximumf>, %7, %cst_4 [1] : vector<2x7x256xf32> to vector<2x256xf32>
    %c0_5 = arith.constant 0 : index
    %c0_6 = arith.constant 0 : index
    %9 = vector.load %arg3[%c0_5, %c0_6] : memref<1x256xf32, #tpu.memory_space<vmem>>, vector<1x256xf32>
    %10 = vector.broadcast %9 : vector<1x256xf32> to vector<2x256xf32>
    %11 = arith.addf %8, %10 : vector<2x256xf32>
    %cst_7 = arith.constant 0.000000e+00 : f32
    %12 = vector.broadcast %cst_7 : f32 to vector<2x256xf32>
    %13 = arith.maximumf %11, %12 : vector<2x256xf32>
    %c0_8 = arith.constant 0 : index
    %c0_9 = arith.constant 0 : index
    %14 = vector.load %arg9[%c0_8, %c0_9] : memref<2x768xf32, #tpu.memory_space<vmem>>, vector<2x256xf32>
    tpu.vector_store %arg9[%c0_8, %c0_9], %13 {strides = array<i32>} : memref<2x768xf32, #tpu.memory_space<vmem>>, vector<2x256xf32>,
    %15 = vector.extract_strided_slice %4 {offsets = [0, 0, 512], sizes = [2, 6, 256], strides = [1, 1, 1]} : vector<2x8x2304xf32> to vector<2x6x256xf32>
    %16 = vector.extract_strided_slice %4 {offsets = [0, 1, 768], sizes = [2, 6, 256], strides = [1, 1, 1]} : vector<2x8x2304xf32> to vector<2x6x256xf32>
    %17 = arith.addf %15, %16 : vector<2x6x256xf32>
    %18 = vector.extract_strided_slice %4 {offsets = [0, 2, 1024], sizes = [2, 6, 256], strides = [1, 1, 1]} : vector<2x8x2304xf32> to vector<2x6x256xf32>
    %19 = arith.addf %17, %18 : vector<2x6x256xf32>
    %cst_10 = arith.constant dense<0xFF800000> : vector<2x256xf32>
    %20 = vector.multi_reduction <maximumf>, %19, %cst_10 [1] : vector<2x6x256xf32> to vector<2x256xf32>
    %c0_11 = arith.constant 0 : index
    %c0_12 = arith.constant 0 : index
    %21 = vector.load %arg4[%c0_11, %c0_12] : memref<1x256xf32, #tpu.memory_space<vmem>>, vector<1x256xf32>
    %22 = vector.broadcast %21 : vector<1x256xf32> to vector<2x256xf32>
    %23 = arith.addf %20, %22 : vector<2x256xf32>
    %cst_13 = arith.constant 0.000000e+00 : f32
    %24 = vector.broadcast %cst_13 : f32 to vector<2x256xf32>
    %25 = arith.maximumf %23, %24 : vector<2x256xf32>
    %c0_14 = arith.constant 0 : index
    %c256 = arith.constant 256 : index
    %26 = vector.load %arg9[%c0_14, %c256] : memref<2x768xf32, #tpu.memory_space<vmem>>, vector<2x256xf32>
    tpu.vector_store %arg9[%c0_14, %c256], %25 {strides = array<i32>} : memref<2x768xf32, #tpu.memory_space<vmem>>, vector<2x256xf32>,
    %27 = vector.extract_strided_slice %4 {offsets = [0, 0, 1280], sizes = [2, 5, 256], strides = [1, 1, 1]} : vector<2x8x2304xf32> to vector<2x5x256xf32>
    %28 = vector.extract_strided_slice %4 {offsets = [0, 1, 1536], sizes = [2, 5, 256], strides = [1, 1, 1]} : vector<2x8x2304xf32> to vector<2x5x256xf32>
    %29 = arith.addf %27, %28 : vector<2x5x256xf32>
    %30 = vector.extract_strided_slice %4 {offsets = [0, 2, 1792], sizes = [2, 5, 256], strides = [1, 1, 1]} : vector<2x8x2304xf32> to vector<2x5x256xf32>
    %31 = arith.addf %29, %30 : vector<2x5x256xf32>
    %32 = vector.extract_strided_slice %4 {offsets = [0, 3, 2048], sizes = [2, 5, 256], strides = [1, 1, 1]} : vector<2x8x2304xf32> to vector<2x5x256xf32>
    %33 = arith.addf %31, %32 : vector<2x5x256xf32>
    %cst_15 = arith.constant dense<0xFF800000> : vector<2x256xf32>
    %34 = vector.multi_reduction <maximumf>, %33, %cst_15 [1] : vector<2x5x256xf32> to vector<2x256xf32>
    %c0_16 = arith.constant 0 : index
    %c0_17 = arith.constant 0 : index
    %35 = vector.load %arg5[%c0_16, %c0_17] : memref<1x256xf32, #tpu.memory_space<vmem>>, vector<1x256xf32>
    %36 = vector.broadcast %35 : vector<1x256xf32> to vector<2x256xf32>
    %37 = arith.addf %34, %36 : vector<2x256xf32>
    %cst_18 = arith.constant 0.000000e+00 : f32
    %38 = vector.broadcast %cst_18 : f32 to vector<2x256xf32>
    %39 = arith.maximumf %37, %38 : vector<2x256xf32>
    %c0_19 = arith.constant 0 : index
    %c512 = arith.constant 512 : index
    %40 = vector.load %arg9[%c0_19, %c512] : memref<2x768xf32, #tpu.memory_space<vmem>>, vector<2x256xf32>
    tpu.vector_store %arg9[%c0_19, %c512], %39 {strides = array<i32>} : memref<2x768xf32, #tpu.memory_space<vmem>>, vector<2x256xf32>,
    %c0_20 = arith.constant 0 : index
    %c0_21 = arith.constant 0 : index
    %41 = vector.load %arg9[%c0_20, %c0_21] : memref<2x768xf32, #tpu.memory_space<vmem>>, vector<2x768xf32>
    %c0_22 = arith.constant 0 : index
    %c0_23 = arith.constant 0 : index
    %42 = vector.load %arg6[%c0_22, %c0_23] : memref<768x128xf32, #tpu.memory_space<vmem>>, vector<768x128xf32>
    %cst_24 = arith.constant dense<0.000000e+00> : vector<2x128xf32>
    %43 = tpu.matmul %41, %42, %cst_24 {dimension_numbers = #tpu.dot_dimension_numbers<[1], [0], [0], [1], [0, 0, 1, 1], [], []>} : vector<2x768xf32>, vector<768x128xf32>, vector<2x128xf32> -> vector<2x128xf32>
    %c0_25 = arith.constant 0 : index
    %c0_26 = arith.constant 0 : index
    %44 = vector.load %arg7[%c0_25, %c0_26] : memref<1x128xf32, #tpu.memory_space<vmem>>, vector<1x128xf32>
    %45 = vector.broadcast %44 : vector<1x128xf32> to vector<2x128xf32>
    %46 = arith.addf %43, %45 : vector<2x128xf32>
    %cst_27 = arith.constant dense<0xFF800000> : vector<2xf32>
    %47 = vector.multi_reduction <maximumf>, %46, %cst_27 [1] : vector<2x128xf32> to vector<2xf32>
    %48 = vector.shape_cast %47 : vector<2xf32> to vector<2x1xf32>
    %49 = vector.broadcast %48 : vector<2x1xf32> to vector<2x128xf32>
    %50 = arith.subf %46, %49 : vector<2x128xf32>
    %51 = math.exp %50 : vector<2x128xf32>
    %cst_28 = arith.constant dense<0.000000e+00> : vector<2xf32>
    %52 = vector.multi_reduction <add>, %51, %cst_28 [1] : vector<2x128xf32> to vector<2xf32>
    %53 = vector.shape_cast %52 : vector<2xf32> to vector<2x1xf32>
    %54 = tpu.reciprocal %53 {approx = true} : vector<2x1xf32> -> vector<2x1xf32>
    %55 = vector.broadcast %54 : vector<2x1xf32> to vector<2x128xf32>
    %56 = arith.mulf %51, %55 : vector<2x128xf32>
    %c0_29 = arith.constant 0 : index
    %c0_30 = arith.constant 0 : index
    %57 = vector.load %arg8[%c0_29, %c0_30] : memref<2x128xf32, #tpu.memory_space<vmem>>, vector<2x128xf32>
    tpu.vector_store %arg8[%c0_29, %c0_30], %56 {strides = array<i32>} : memref<2x128xf32, #tpu.memory_space<vmem>>, vector<2x128xf32>,
    return
  }
  func.func @transform_0(%arg0: i32) -> (i32, i32, i32) {
    %c0_i32 = arith.constant 0 : i32
    %c0_i32_0 = arith.constant 0 : i32
    %c0_i32_1 = arith.constant 0 : i32
    return %arg0, %c0_i32, %c0_i32_0 : i32, i32, i32
  }
  func.func @transform_1(%arg0: i32) -> (i32, i32) {
    %c0_i32 = arith.constant 0 : i32
    %c0_i32_0 = arith.constant 0 : i32
    %c0_i32_1 = arith.constant 0 : i32
    return %c0_i32, %c0_i32_0 : i32, i32
  }
  func.func @transform_2(%arg0: i32) -> (i32, i32) {
    %c0_i32 = arith.constant 0 : i32
    %c0_i32_0 = arith.constant 0 : i32
    %c0_i32_1 = arith.constant 0 : i32
    return %c0_i32, %c0_i32_0 : i32, i32
  }
  func.func @transform_3(%arg0: i32) -> (i32, i32) {
    %c0_i32 = arith.constant 0 : i32
    %c0_i32_0 = arith.constant 0 : i32
    %c0_i32_1 = arith.constant 0 : i32
    return %c0_i32, %c0_i32_0 : i32, i32
  }
  func.func @transform_4(%arg0: i32) -> (i32, i32) {
    %c0_i32 = arith.constant 0 : i32
    %c0_i32_0 = arith.constant 0 : i32
    %c0_i32_1 = arith.constant 0 : i32
    return %c0_i32, %c0_i32_0 : i32, i32
  }
  func.func @transform_5(%arg0: i32) -> (i32, i32) {
    %c0_i32 = arith.constant 0 : i32
    %c0_i32_0 = arith.constant 0 : i32
    %c0_i32_1 = arith.constant 0 : i32
    return %c0_i32, %c0_i32_0 : i32, i32
  }
  func.func @transform_6(%arg0: i32) -> (i32, i32) {
    %c0_i32 = arith.constant 0 : i32
    %c0_i32_0 = arith.constant 0 : i32
    %c0_i32_1 = arith.constant 0 : i32
    return %c0_i32, %c0_i32_0 : i32, i32
  }
  func.func @transform_7(%arg0: i32) -> (i32, i32) {
    %c0_i32 = arith.constant 0 : i32
    %c0_i32_0 = arith.constant 0 : i32
    return %arg0, %c0_i32 : i32, i32
  }
}

</mosaic_0001>

<llo_original>
// kernel: cnn_forward.1
$region0: #{cnn_forward.1}
  #allocation0 [shape = 'u32[]', space=smem, size = 0x4, offset = 0x4, fixed_abs, tag = 'smem constant byte address 0x4 - core index']
  #allocation1 [shape = 'u32[144,128]{1,0:T(1,128)}', space=vmem, size = 0x12000, scoped, tag = 'internal scratch']
  #allocation2 [shape = 'f32[2,768]{1,0:T(2,128)}', space=vmem, size = 0x1800, scoped, tag = 'scratch operand']
  %s0 = inlined_call_operand.vmem [shape: f32[2,8,768], index: 0, kind: input, shape index: {}]
  %s1 = inlined_call_operand.vmem [shape: f32[768,2304], index: 1, kind: input, shape index: {}]
  %s2 = inlined_call_operand.vmem [shape: f32[1,256], index: 2, kind: input, shape index: {}]
  %s3 = inlined_call_operand.vmem [shape: f32[1,256], index: 3, kind: input, shape index: {}]
  %s4 = inlined_call_operand.vmem [shape: f32[1,256], index: 4, kind: input, shape index: {}]
  %s5 = inlined_call_operand.vmem [shape: f32[768,128], index: 5, kind: input, shape index: {}]
  %s6 = inlined_call_operand.vmem [shape: f32[1,128], index: 6, kind: input, shape index: {}]
  %s7 = inlined_call_operand.hbm [shape: f32[2,128], index: 7, kind: output, shape index: {}]
  %s8 = sld [smem:[#allocation0]]
  $region38: #{cnn_forward.1} parent=0
    _
  %s10 = ssub.s32 1, %s8
  %s11 = scalar_select 0, %s10, %s8
  $region1: #{cnn_forward.1} parent=0
    #allocation3 [shape = 'u8[1024]{0}', space=vmem, size = 0x400, scoped, tag = 'output window, operand 0, single buffered']
    #allocation4 [shape = 's32[1]{0}', space=sflag, size = 0x4, scoped, tag = 'scoped memory for cnn_forward.1']
    %12 = vsyncpa [#allocation4], 0
    // Predicated region
    $region2: #{cnn_forward.1} parent=1 // pred_check
      _
    $region3: #{cnn_forward.1} parent=1 // pred_check_branch
      %14 = sbr.rel (0) target = $region5
    $region4: #{cnn_forward.1} parent=1 // pred_region
      _
    $region5: #{cnn_forward.1} parent=1 // pred_fallthru
      _
    // Predicated region
    $region6: #{cnn_forward.1} parent=1 // pred_check
      _
    $region7: #{cnn_forward.1} parent=1 // pred_check_branch
      %16 = sbr.rel (0) target = $region9
    $region8: #{cnn_forward.1} parent=1 // pred_region
      _
    $region9: #{cnn_forward.1} parent=1 // pred_fallthru
      _
    // Predicated region
    $region10: #{cnn_forward.1} parent=1 // pred_check
      _
    $region11: #{cnn_forward.1} parent=1 // pred_check_branch
      %18 = sbr.rel (0) target = $region13
    $region12: #{cnn_forward.1} parent=1 // pred_region
      _
    $region13: #{cnn_forward.1} parent=1 // pred_fallthru
      _
    // Predicated region
    $region14: #{cnn_forward.1} parent=1 // pred_check
      _
    $region15: #{cnn_forward.1} parent=1 // pred_check_branch
      %20 = sbr.rel (0) target = $region17
    $region16: #{cnn_forward.1} parent=1 // pred_region
      _
    $region17: #{cnn_forward.1} parent=1 // pred_fallthru
      _
    // Predicated region
    $region18: #{cnn_forward.1} parent=1 // pred_check
      _
    $region19: #{cnn_forward.1} parent=1 // pred_check_branch
      %22 = sbr.rel (0) target = $region21
    $region20: #{cnn_forward.1} parent=1 // pred_region
      _
    $region21: #{cnn_forward.1} parent=1 // pred_fallthru
      _
    // Predicated region
    $region22: #{cnn_forward.1} parent=1 // pred_check
      _
    $region23: #{cnn_forward.1} parent=1 // pred_check_branch
      %24 = sbr.rel (0) target = $region25
    $region24: #{cnn_forward.1} parent=1 // pred_region
      _
    $region25: #{cnn_forward.1} parent=1 // pred_fallthru
      _
    // Predicated region
    $region26: #{cnn_forward.1} parent=1 // pred_check
      _
    $region27: #{cnn_forward.1} parent=1 // pred_check_branch
      %26 = sbr.rel (0) target = $region29
    $region28: #{cnn_forward.1} parent=1 // pred_region
      _
    $region29: #{cnn_forward.1} parent=1 // pred_fallthru
      _
    %v27 = vld [vmem:[%s0] sm:$0xff]
    %v28 = vld [vmem:[%s0 + $0x8] sm:$0xff]
    %v29 = vld [vmem:[%s0 + $0x10] sm:$0xff]
    %v30 = vld [vmem:[%s0 + $0x18] sm:$0xff]
    %v31 = vld [vmem:[%s0 + $0x20] sm:$0xff]
    %v32 = vld [vmem:[%s0 + $0x28] sm:$0xff]
    %v33 = vld [vmem:[%s0 + $0x30] sm:$0xff]
    %v34 = vld [vmem:[%s0 + $0x38] sm:$0xff]
    %v35 = vld [vmem:[%s0 + $0x40] sm:$0xff]
    %v36 = vld [vmem:[%s0 + $0x48] sm:$0xff]
    %v37 = vld [vmem:[%s0 + $0x50] sm:$0xff]
    %v38 = vld [vmem:[%s0 + $0x58] sm:$0xff]
    %v39 = vld [vmem:[%s1] sm:$0xff]
    %v40 = vld [vmem:[%s1 + $0x8] sm:$0xff]
    %v41 = vld [vmem:[%s1 + $0x10] sm:$0xff]
    %v42 = vld [vmem:[%s1 + $0x18] sm:$0xff]
    %v43 = vld [vmem:[%s1 + $0x20] sm:$0xff]
    %v44 = vld [vmem:[%s1 + $0x28] sm:$0xff]
    %v45 = vld [vmem:[%s1 + $0x30] sm:$0xff]
    %v46 = vld [vmem:[%s1 + $0x38] sm:$0xff]
    %v47 = vld [vmem:[%s1 + $0x40] sm:$0xff]
    %v48 = vld [vmem:[%s1 + $0x48] sm:$0xff]
    %v49 = vld [vmem:[%s1 + $0x50] sm:$0xff]
    %v50 = vld [vmem:[%s1 + $0x58] sm:$0xff]
    %v51 = vld [vmem:[%s1 + $0x60] sm:$0xff]
    %v52 = vld [vmem:[%s1 + $0x68] sm:$0xff]
    %v53 = vld [vmem:[%s1 + $0x70] sm:$0xff]
    %v54 = vld [vmem:[%s1 + $0x78] sm:$0xff]
    %v55 = vld [vmem:[%s1 + $0x80] sm:$0xff]
    %v56 = vld [vmem:[%s1 + $0x88] sm:$0xff]
    %v57 = vld [vmem:[%s1 + $0x90] sm:$0xff]
    %v58 = vld [vmem:[%s1 + $0x98] sm:$0xff]
    %v59 = vld [vmem:[%s1 + $0xa0] sm:$0xff]
    %v60 = vld [vmem:[%s1 + $0xa8] sm:$0xff]
    %v61 = vld [vmem:[%s1 + $0xb0] sm:$0xff]
    %v62 = vld [vmem:[%s1 + $0xb8] sm:$0xff]
    %v63 = vld [vmem:[%s1 + $0xc0] sm:$0xff]
    %v64 = vld [vmem:[%s1 + $0xc8] sm:$0xff]
    %v65 = vld [vmem:[%s1 + $0xd0] sm:$0xff]
    %v66 = vld [vmem:[%s1 + $0xd8] sm:$0xff]
    %v67 = vld [vmem:[%s1 + $0xe0] sm:$0xff]
    %v68 = vld [vmem:[%s1 + $0xe8] sm:$0xff]
    %v69 = vld [vmem:[%s1 + $0xf0] sm:$0xff]
    %v70 = vld [vmem:[%s1 + $0xf8] sm:$0xff]
    %v71 = vld [vmem:[%s1 + $0x100] sm:$0xff]
    %v72 = vld [vmem:[%s1 + $0x108] sm:$0xff]
    %v73 = vld [vmem:[%s1 + $0x110] sm:$0xff]
    %v74 = vld [vmem:[%s1 + $0x118] sm:$0xff]
    %v75 = vld [vmem:[%s1 + $0x120] sm:$0xff]
    %v76 = vld [vmem:[%s1 + $0x128] sm:$0xff]
    %v77 = vld [vmem:[%s1 + $0x130] sm:$0xff]
    %v78 = vld [vmem:[%s1 + $0x138] sm:$0xff]
    %v79 = vld [vmem:[%s1 + $0x140] sm:$0xff]
    %v80 = vld [vmem:[%s1 + $0x148] sm:$0xff]
    %v81 = vld [vmem:[%s1 + $0x150] sm:$0xff]
    %v82 = vld [vmem:[%s1 + $0x158] sm:$0xff]
    %v83 = vld [vmem:[%s1 + $0x160] sm:$0xff]
    %v84 = vld [vmem:[%s1 + $0x168] sm:$0xff]
    %v85 = vld [vmem:[%s1 + $0x170] sm:$0xff]
    %v86 = vld [vmem:[%s1 + $0x178] sm:$0xff]
    %v87 = vld [vmem:[%s1 + $0x180] sm:$0xff]
    %v88 = vld [vmem:[%s1 + $0x188] sm:$0xff]
    %v89 = vld [vmem:[%s1 + $0x190] sm:$0xff]
    %v90 = vld [vmem:[%s1 + $0x198] sm:$0xff]
    %v91 = vld [vmem:[%s1 + $0x1a0] sm:$0xff]
    %v92 = vld [vmem:[%s1 + $0x1a8] sm:$0xff]
    %v93 = vld [vmem:[%s1 + $0x1b0] sm:$0xff]
    %v94 = vld [vmem:[%s1 + $0x1b8] sm:$0xff]
    %v95 = vld [vmem:[%s1 + $0x1c0] sm:$0xff]
    %v96 = vld [vmem:[%s1 + $0x1c8] sm:$0xff]
    %v97 = vld [vmem:[%s1 + $0x1d0] sm:$0xff]
    %v98 = vld [vmem:[%s1 + $0x1d8] sm:$0xff]
    %v99 = vld [vmem:[%s1 + $0x1e0] sm:$0xff]
    %v100 = vld [vmem:[%s1 + $0x1e8] sm:$0xff]
    %v101 = vld [vmem:[%s1 + $0x1f0] sm:$0xff]
    %v102 = vld [vmem:[%s1 + $0x1f8] sm:$0xff]
    %v103 = vld [vmem:[%s1 + $0x200] sm:$0xff]
    %v104 = vld [vmem:[%s1 + $0x208] sm:$0xff]
    %v105 = vld [vmem:[%s1 + $0x210] sm:$0xff]
    %v106 = vld [vmem:[%s1 + $0x218] sm:$0xff]
    %v107 = vld [vmem:[%s1 + $0x220] sm:$0xff]
    %v108 = vld [vmem:[%s1 + $0x228] sm:$0xff]
    %v109 = vld [vmem:[%s1 + $0x230] sm:$0xff]
    %v110 = vld [vmem:[%s1 + $0x238] sm:$0xff]
    %v111 = vld [vmem:[%s1 + $0x240] sm:$0xff]
    %v112 = vld [vmem:[%s1 + $0x248] sm:$0xff]
    %v113 = vld [vmem:[%s1 + $0x250] sm:$0xff]
    %v114 = vld [vmem:[%s1 + $0x258] sm:$0xff]
    %v115 = vld [vmem:[%s1 + $0x260] sm:$0xff]
    %v116 = vld [vmem:[%s1 + $0x268] sm:$0xff]
    %v117 = vld [vmem:[%s1 + $0x270] sm:$0xff]
    %v118 = vld [vmem:[%s1 + $0x278] sm:$0xff]
    %v119 = vld [vmem:[%s1 + $0x280] sm:$0xff]
    %v120 = vld [vmem:[%s1 + $0x288] sm:$0xff]
    %v121 = vld [vmem:[%s1 + $0x290] sm:$0xff]
    %v122 = vld [vmem:[%s1 + $0x298] sm:$0xff]
    %v123 = vld [vmem:[%s1 + $0x2a0] sm:$0xff]
    %v124 = vld [vmem:[%s1 + $0x2a8] sm:$0xff]
    %v125 = vld [vmem:[%s1 + $0x2b0] sm:$0xff]
    %v126 = vld [vmem:[%s1 + $0x2b8] sm:$0xff]
    %v127 = vld [vmem:[%s1 + $0x2c0] sm:$0xff]
    %v128 = vld [vmem:[%s1 + $0x2c8] sm:$0xff]
    %v129 = vld [vmem:[%s1 + $0x2d0] sm:$0xff]
    %v130 = vld [vmem:[%s1 + $0x2d8] sm:$0xff]
    %v131 = vld [vmem:[%s1 + $0x2e0] sm:$0xff]
    %v132 = vld [vmem:[%s1 + $0x2e8] sm:$0xff]
    %v133 = vld [vmem:[%s1 + $0x2f0] sm:$0xff]
    %v134 = vld [vmem:[%s1 + $0x2f8] sm:$0xff]
    %v135 = vld [vmem:[%s1 + $0x300] sm:$0xff]
    %v136 = vld [vmem:[%s1 + $0x308] sm:$0xff]
    %v137 = vld [vmem:[%s1 + $0x310] sm:$0xff]
    %v138 = vld [vmem:[%s1 + $0x318] sm:$0xff]
    %v139 = vld [vmem:[%s1 + $0x320] sm:$0xff]
    %v140 = vld [vmem:[%s1 + $0x328] sm:$0xff]
    %v141 = vld [vmem:[%s1 + $0x330] sm:$0xff]
    %v142 = vld [vmem:[%s1 + $0x338] sm:$0xff]
    %v143 = vld [vmem:[%s1 + $0x340] sm:$0xff]
    %v144 = vld [vmem:[%s1 + $0x348] sm:$0xff]
    %v145 = vld [vmem:[%s1 + $0x350] sm:$0xff]
    %v146 = vld [vmem:[%s1 + $0x358] sm:$0xff]
    %v147 = vld [vmem:[%s1 + $0x360] sm:$0xff]
    %v148 = vld [vmem:[%s1 + $0x368] sm:$0xff]
    %v149 = vld [vmem:[%s1 + $0x370] sm:$0xff]
    %v150 = vld [vmem:[%s1 + $0x378] sm:$0xff]
    %v151 = vld [vmem:[%s1 + $0x380] sm:$0xff]
    %v152 = vld [vmem:[%s1 + $0x388] sm:$0xff]
    %v153 = vld [vmem:[%s1 + $0x390] sm:$0xff]
    %v154 = vld [vmem:[%s1 + $0x398] sm:$0xff]
    %v155 = vld [vmem:[%s1 + $0x3a0] sm:$0xff]
    %v156 = vld [vmem:[%s1 + $0x3a8] sm:$0xff]
    %v157 = vld [vmem:[%s1 + $0x3b0] sm:$0xff]
    %v158 = vld [vmem:[%s1 + $0x3b8] sm:$0xff]
    %v159 = vld [vmem:[%s1 + $0x3c0] sm:$0xff]
    %v160 = vld [vmem:[%s1 + $0x3c8] sm:$0xff]
    %v161 = vld [vmem:[%s1 + $0x3d0] sm:$0xff]
    %v162 = vld [vmem:[%s1 + $0x3d8] sm:$0xff]
    %v163 = vld [vmem:[%s1 + $0x3e0] sm:$0xff]
    %v164 = vld [vmem:[%s1 + $0x3e8] sm:$0xff]
    %v165 = vld [vmem:[%s1 + $0x3f0] sm:$0xff]
    %v166 = vld [vmem:[%s1 + $0x3f8] sm:$0xff]
    %v167 = vld [vmem:[%s1 + $0x400] sm:$0xff]
    %v168 = vld [vmem:[%s1 + $0x408] sm:$0xff]
    %v169 = vld [vmem:[%s1 + $0x410] sm:$0xff]
    %v170 = vld [vmem:[%s1 + $0x418] sm:$0xff]
    %v171 = vld [vmem:[%s1 + $0x420] sm:$0xff]
    %v172 = vld [vmem:[%s1 + $0x428] sm:$0xff]
    %v173 = vld [vmem:[%s1 + $0x430] sm:$0xff]
    %v174 = vld [vmem:[%s1 + $0x438] sm:$0xff]
    %v175 = vld [vmem:[%s1 + $0x440] sm:$0xff]
    %v176 = vld [vmem:[%s1 + $0x448] sm:$0xff]
    %v177 = vld [vmem:[%s1 + $0x450] sm:$0xff]
    %v178 = vld [vmem:[%s1 + $0x458] sm:$0xff]
    %v179 = vld [vmem:[%s1 + $0x460] sm:$0xff]
    %v180 = vld [vmem:[%s1 + $0x468] sm:$0xff]
    %v181 = vld [vmem:[%s1 + $0x470] sm:$0xff]
    %v182 = vld [vmem:[%s1 + $0x478] sm:$0xff]
    %v183 = vld [vmem:[%s1 + $0x480] sm:$0xff]
    %v184 = vld [vmem:[%s1 + $0x488] sm:$0xff]
    %v185 = vld [vmem:[%s1 + $0x490] sm:$0xff]
    %v186 = vld [vmem:[%s1 + $0x498] sm:$0xff]
    %v187 = vld [vmem:[%s1 + $0x4a0] sm:$0xff]
    %v188 = vld [vmem:[%s1 + $0x4a8] sm:$0xff]
    %v189 = vld [vmem:[%s1 + $0x4b0] sm:$0xff]
    %v190 = vld [vmem:[%s1 + $0x4b8] sm:$0xff]
    %v191 = vld [vmem:[%s1 + $0x4c0] sm:$0xff]
    %v192 = vld [vmem:[%s1 + $0x4c8] sm:$0xff]
    %v193 = vld [vmem:[%s1 + $0x4d0] sm:$0xff]
    %v194 = vld [vmem:[%s1 + $0x4d8] sm:$0xff]
    %v195 = vld [vmem:[%s1 + $0x4e0] sm:$0xff]
    %v196 = vld [vmem:[%s1 + $0x4e8] sm:$0xff]
    %v197 = vld [vmem:[%s1 + $0x4f0] sm:$0xff]
    %v198 = vld [vmem:[%s1 + $0x4f8] sm:$0xff]
    %v199 = vld [vmem:[%s1 + $0x500] sm:$0xff]
    %v200 = vld [vmem:[%s1 + $0x508] sm:$0xff]
    %v201 = vld [vmem:[%s1 + $0x510] sm:$0xff]
    %v202 = vld [vmem:[%s1 + $0x518] sm:$0xff]
    %v203 = vld [vmem:[%s1 + $0x520] sm:$0xff]
    %v204 = vld [vmem:[%s1 + $0x528] sm:$0xff]
    %v205 = vld [vmem:[%s1 + $0x530] sm:$0xff]
    %v206 = vld [vmem:[%s1 + $0x538] sm:$0xff]
    %v207 = vld [vmem:[%s1 + $0x540] sm:$0xff]
    %v208 = vld [vmem:[%s1 + $0x548] sm:$0xff]
    %v209 = vld [vmem:[%s1 + $0x550] sm:$0xff]
    %v210 = vld [vmem:[%s1 + $0x558] sm:$0xff]
    %v211 = vld [vmem:[%s1 + $0x560] sm:$0xff]
    %v212 = vld [vmem:[%s1 + $0x568] sm:$0xff]
    %v213 = vld [vmem:[%s1 + $0x570] sm:$0xff]
    %v214 = vld [vmem:[%s1 + $0x578] sm:$0xff]
    %v215 = vld [vmem:[%s1 + $0x580] sm:$0xff]
    %v216 = vld [vmem:[%s1 + $0x588] sm:$0xff]
    %v217 = vld [vmem:[%s1 + $0x590] sm:$0xff]
    %v218 = vld [vmem:[%s1 + $0x598] sm:$0xff]
    %v219 = vld [vmem:[%s1 + $0x5a0] sm:$0xff]
    %v220 = vld [vmem:[%s1 + $0x5a8] sm:$0xff]
    %v221 = vld [vmem:[%s1 + $0x5b0] sm:$0xff]
    %v222 = vld [vmem:[%s1 + $0x5b8] sm:$0xff]
    %v223 = vld [vmem:[%s1 + $0x5c0] sm:$0xff]
    %v224 = vld [vmem:[%s1 + $0x5c8] sm:$0xff]
    %v225 = vld [vmem:[%s1 + $0x5d0] sm:$0xff]
    %v226 = vld [vmem:[%s1 + $0x5d8] sm:$0xff]
    %v227 = vld [vmem:[%s1 + $0x5e0] sm:$0xff]
    %v228 = vld [vmem:[%s1 + $0x5e8] sm:$0xff]
    %v229 = vld [vmem:[%s1 + $0x5f0] sm:$0xff]
    %v230 = vld [vmem:[%s1 + $0x5f8] sm:$0xff]
    %v231 = vld [vmem:[%s1 + $0x600] sm:$0xff]
    %v232 = vld [vmem:[%s1 + $0x608] sm:$0xff]
    %v233 = vld [vmem:[%s1 + $0x610] sm:$0xff]
    %v234 = vld [vmem:[%s1 + $0x618] sm:$0xff]
    %v235 = vld [vmem:[%s1 + $0x620] sm:$0xff]
    %v236 = vld [vmem:[%s1 + $0x628] sm:$0xff]
    %v237 = vld [vmem:[%s1 + $0x630] sm:$0xff]
    %v238 = vld [vmem:[%s1 + $0x638] sm:$0xff]
    %v239 = vld [vmem:[%s1 + $0x640] sm:$0xff]
    %v240 = vld [vmem:[%s1 + $0x648] sm:$0xff]
    %v241 = vld [vmem:[%s1 + $0x650] sm:$0xff]
    %v242 = vld [vmem:[%s1 + $0x658] sm:$0xff]
    %v243 = vld [vmem:[%s1 + $0x660] sm:$0xff]
    %v244 = vld [vmem:[%s1 + $0x668] sm:$0xff]
    %v245 = vld [vmem:[%s1 + $0x670] sm:$0xff]
    %v246 = vld [vmem:[%s1 + $0x678] sm:$0xff]
    %v247 = vld [vmem:[%s1 + $0x680] sm:$0xff]
    %v248 = vld [vmem:[%s1 + $0x688] sm:$0xff]
    %v249 = vld [vmem:[%s1 + $0x690] sm:$0xff]
    %v250 = vld [vmem:[%s1 + $0x698] sm:$0xff]
    %v251 = vld [vmem:[%s1 + $0x6a0] sm:$0xff]
    %v252 = vld [vmem:[%s1 + $0x6a8] sm:$0xff]
    %v253 = vld [vmem:[%s1 + $0x6b0] sm:$0xff]
    %v254 = vld [vmem:[%s1 + $0x6b8] sm:$0xff]
    %v255 = vld [vmem:[%s1 + $0x6c0] sm:$0xff]
    %v256 = vld [vmem:[%s1 + $0x6c8] sm:$0xff]
    %v257 = vld [vmem:[%s1 + $0x6d0] sm:$0xff]
    %v258 = vld [vmem:[%s1 + $0x6d8] sm:$0xff]
    %v259 = vld [vmem:[%s1 + $0x6e0] sm:$0xff]
    %v260 = vld [vmem:[%s1 + $0x6e8] sm:$0xff]
    %v261 = vld [vmem:[%s1 + $0x6f0] sm:$0xff]
    %v262 = vld [vmem:[%s1 + $0x6f8] sm:$0xff]
    %v263 = vld [vmem:[%s1 + $0x700] sm:$0xff]
    %v264 = vld [vmem:[%s1 + $0x708] sm:$0xff]
    %v265 = vld [vmem:[%s1 + $0x710] sm:$0xff]
    %v266 = vld [vmem:[%s1 + $0x718] sm:$0xff]
    %v267 = vld [vmem:[%s1 + $0x720] sm:$0xff]
    %v268 = vld [vmem:[%s1 + $0x728] sm:$0xff]
    %v269 = vld [vmem:[%s1 + $0x730] sm:$0xff]
    %v270 = vld [vmem:[%s1 + $0x738] sm:$0xff]
    %v271 = vld [vmem:[%s1 + $0x740] sm:$0xff]
    %v272 = vld [vmem:[%s1 + $0x748] sm:$0xff]
    %v273 = vld [vmem:[%s1 + $0x750] sm:$0xff]
    %v274 = vld [vmem:[%s1 + $0x758] sm:$0xff]
    %v275 = vld [vmem:[%s1 + $0x760] sm:$0xff]
    %v276 = vld [vmem:[%s1 + $0x768] sm:$0xff]
    %v277 = vld [vmem:[%s1 + $0x770] sm:$0xff]
    %v278 = vld [vmem:[%s1 + $0x778] sm:$0xff]
    %v279 = vld [vmem:[%s1 + $0x780] sm:$0xff]
    %v280 = vld [vmem:[%s1 + $0x788] sm:$0xff]
    %v281 = vld [vmem:[%s1 + $0x790] sm:$0xff]
    %v282 = vld [vmem:[%s1 + $0x798] sm:$0xff]
    %v283 = vld [vmem:[%s1 + $0x7a0] sm:$0xff]
    %v284 = vld [vmem:[%s1 + $0x7a8] sm:$0xff]
    %v285 = vld [vmem:[%s1 + $0x7b0] sm:$0xff]
    %v286 = vld [vmem:[%s1 + $0x7b8] sm:$0xff]
    %v287 = vld [vmem:[%s1 + $0x7c0] sm:$0xff]
    %v288 = vld [vmem:[%s1 + $0x7c8] sm:$0xff]
    %v289 = vld [vmem:[%s1 + $0x7d0] sm:$0xff]
    %v290 = vld [vmem:[%s1 + $0x7d8] sm:$0xff]
    %v291 = vld [vmem:[%s1 + $0x7e0] sm:$0xff]
    %v292 = vld [vmem:[%s1 + $0x7e8] sm:$0xff]
    %v293 = vld [vmem:[%s1 + $0x7f0] sm:$0xff]
    %v294 = vld [vmem:[%s1 + $0x7f8] sm:$0xff]
    %v295 = vld [vmem:[%s1 + $0x800] sm:$0xff]
    %v296 = vld [vmem:[%s1 + $0x808] sm:$0xff]
    %v297 = vld [vmem:[%s1 + $0x810] sm:$0xff]
    %v298 = vld [vmem:[%s1 + $0x818] sm:$0xff]
    %v299 = vld [vmem:[%s1 + $0x820] sm:$0xff]
    %v300 = vld [vmem:[%s1 + $0x828] sm:$0xff]
    %v301 = vld [vmem:[%s1 + $0x830] sm:$0xff]
    %v302 = vld [vmem:[%s1 + $0x838] sm:$0xff]
    %v303 = vld [vmem:[%s1 + $0x840] sm:$0xff]
    %v304 = vld [vmem:[%s1 + $0x848] sm:$0xff]
    %v305 = vld [vmem:[%s1 + $0x850] sm:$0xff]
    %v306 = vld [vmem:[%s1 + $0x858] sm:$0xff]
    %v307 = vld [vmem:[%s1 + $0x860] sm:$0xff]
    %v308 = vld [vmem:[%s1 + $0x868] sm:$0xff]
    %v309 = vld [vmem:[%s1 + $0x870] sm:$0xff]
    %v310 = vld [vmem:[%s1 + $0x878] sm:$0xff]
    %v311 = vld [vmem:[%s1 + $0x880] sm:$0xff]
    %v312 = vld [vmem:[%s1 + $0x888] sm:$0xff]
    %v313 = vld [vmem:[%s1 + $0x890] sm:$0xff]
    %v314 = vld [vmem:[%s1 + $0x898] sm:$0xff]
    %v315 = vld [vmem:[%s1 + $0x8a0] sm:$0xff]
    %v316 = vld [vmem:[%s1 + $0x8a8] sm:$0xff]
    %v317 = vld [vmem:[%s1 + $0x8b0] sm:$0xff]
    %v318 = vld [vmem:[%s1 + $0x8b8] sm:$0xff]
    %v319 = vld [vmem:[%s1 + $0x8c0] sm:$0xff]
    %v320 = vld [vmem:[%s1 + $0x8c8] sm:$0xff]
    %v321 = vld [vmem:[%s1 + $0x8d0] sm:$0xff]
    %v322 = vld [vmem:[%s1 + $0x8d8] sm:$0xff]
    %v323 = vld [vmem:[%s1 + $0x8e0] sm:$0xff]
    %v324 = vld [vmem:[%s1 + $0x8e8] sm:$0xff]
    %v325 = vld [vmem:[%s1 + $0x8f0] sm:$0xff]
    %v326 = vld [vmem:[%s1 + $0x8f8] sm:$0xff]
    %v327 = vld [vmem:[%s1 + $0x900] sm:$0xff]
    %v328 = vld [vmem:[%s1 + $0x908] sm:$0xff]
    %v329 = vld [vmem:[%s1 + $0x910] sm:$0xff]
    %v330 = vld [vmem:[%s1 + $0x918] sm:$0xff]
    %v331 = vld [vmem:[%s1 + $0x920] sm:$0xff]
    %v332 = vld [vmem:[%s1 + $0x928] sm:$0xff]
    %v333 = vld [vmem:[%s1 + $0x930] sm:$0xff]
    %v334 = vld [vmem:[%s1 + $0x938] sm:$0xff]
    %v335 = vld [vmem:[%s1 + $0x940] sm:$0xff]
    %v336 = vld [vmem:[%s1 + $0x948] sm:$0xff]
    %v337 = vld [vmem:[%s1 + $0x950] sm:$0xff]
    %v338 = vld [vmem:[%s1 + $0x958] sm:$0xff]
    %v339 = vld [vmem:[%s1 + $0x960] sm:$0xff]
    %v340 = vld [vmem:[%s1 + $0x968] sm:$0xff]
    %v341 = vld [vmem:[%s1 + $0x970] sm:$0xff]
    %v342 = vld [vmem:[%s1 + $0x978] sm:$0xff]
    %v343 = vld [vmem:[%s1 + $0x980] sm:$0xff]
    %v344 = vld [vmem:[%s1 + $0x988] sm:$0xff]
    %v345 = vld [vmem:[%s1 + $0x990] sm:$0xff]
    %v346 = vld [vmem:[%s1 + $0x998] sm:$0xff]
    %v347 = vld [vmem:[%s1 + $0x9a0] sm:$0xff]
    %v348 = vld [vmem:[%s1 + $0x9a8] sm:$0xff]
    %v349 = vld [vmem:[%s1 + $0x9b0] sm:$0xff]
    %v350 = vld [vmem:[%s1 + $0x9b8] sm:$0xff]
    %v351 = vld [vmem:[%s1 + $0x9c0] sm:$0xff]
    %v352 = vld [vmem:[%s1 + $0x9c8] sm:$0xff]
    %v353 = vld [vmem:[%s1 + $0x9d0] sm:$0xff]
    %v354 = vld [vmem:[%s1 + $0x9d8] sm:$0xff]
    %v355 = vld [vmem:[%s1 + $0x9e0] sm:$0xff]
    %v356 = vld [vmem:[%s1 + $0x9e8] sm:$0xff]
    %v357 = vld [vmem:[%s1 + $0x9f0] sm:$0xff]
    %v358 = vld [vmem:[%s1 + $0x9f8] sm:$0xff]
    %v359 = vld [vmem:[%s1 + $0xa00] sm:$0xff]
    %v360 = vld [vmem:[%s1 + $0xa08] sm:$0xff]
    %v361 = vld [vmem:[%s1 + $0xa10] sm:$0xff]
    %v362 = vld [vmem:[%s1 + $0xa18] sm:$0xff]
    %v363 = vld [vmem:[%s1 + $0xa20] sm:$0xff]
    %v364 = vld [vmem:[%s1 + $0xa28] sm:$0xff]
    %v365 = vld [vmem:[%s1 + $0xa30] sm:$0xff]
    %v366 = vld [vmem:[%s1 + $0xa38] sm:$0xff]
    %v367 = vld [vmem:[%s1 + $0xa40] sm:$0xff]
    %v368 = vld [vmem:[%s1 + $0xa48] sm:$0xff]
    %v369 = vld [vmem:[%s1 + $0xa50] sm:$0xff]
    %v370 = vld [vmem:[%s1 + $0xa58] sm:$0xff]
    %v371 = vld [vmem:[%s1 + $0xa60] sm:$0xff]
    %v372 = vld [vmem:[%s1 + $0xa68] sm:$0xff]
    %v373 = vld [vmem:[%s1 + $0xa70] sm:$0xff]
    %v374 = vld [vmem:[%s1 + $0xa78] sm:$0xff]
    %v375 = vld [vmem:[%s1 + $0xa80] sm:$0xff]
    %v376 = vld [vmem:[%s1 + $0xa88] sm:$0xff]
    %v377 = vld [vmem:[%s1 + $0xa90] sm:$0xff]
    %v378 = vld [vmem:[%s1 + $0xa98] sm:$0xff]
    %v379 = vld [vmem:[%s1 + $0xaa0] sm:$0xff]
    %v380 = vld [vmem:[%s1 + $0xaa8] sm:$0xff]
    %v381 = vld [vmem:[%s1 + $0xab0] sm:$0xff]
    %v382 = vld [vmem:[%s1 + $0xab8] sm:$0xff]
    %v383 = vld [vmem:[%s1 + $0xac0] sm:$0xff]
    %v384 = vld [vmem:[%s1 + $0xac8] sm:$0xff]
    %v385 = vld [vmem:[%s1 + $0xad0] sm:$0xff]
    %v386 = vld [vmem:[%s1 + $0xad8] sm:$0xff]
    %v387 = vld [vmem:[%s1 + $0xae0] sm:$0xff]
    %v388 = vld [vmem:[%s1 + $0xae8] sm:$0xff]
    %v389 = vld [vmem:[%s1 + $0xaf0] sm:$0xff]
    %v390 = vld [vmem:[%s1 + $0xaf8] sm:$0xff]
    %v391 = vld [vmem:[%s1 + $0xb00] sm:$0xff]
    %v392 = vld [vmem:[%s1 + $0xb08] sm:$0xff]
    %v393 = vld [vmem:[%s1 + $0xb10] sm:$0xff]
    %v394 = vld [vmem:[%s1 + $0xb18] sm:$0xff]
    %v395 = vld [vmem:[%s1 + $0xb20] sm:$0xff]
    %v396 = vld [vmem:[%s1 + $0xb28] sm:$0xff]
    %v397 = vld [vmem:[%s1 + $0xb30] sm:$0xff]
    %v398 = vld [vmem:[%s1 + $0xb38] sm:$0xff]
    %v399 = vld [vmem:[%s1 + $0xb40] sm:$0xff]
    %v400 = vld [vmem:[%s1 + $0xb48] sm:$0xff]
    %v401 = vld [vmem:[%s1 + $0xb50] sm:$0xff]
    %v402 = vld [vmem:[%s1 + $0xb58] sm:$0xff]
    %v403 = vld [vmem:[%s1 + $0xb60] sm:$0xff]
    %v404 = vld [vmem:[%s1 + $0xb68] sm:$0xff]
    %v405 = vld [vmem:[%s1 + $0xb70] sm:$0xff]
    %v406 = vld [vmem:[%s1 + $0xb78] sm:$0xff]
    %v407 = vld [vmem:[%s1 + $0xb80] sm:$0xff]
    %v408 = vld [vmem:[%s1 + $0xb88] sm:$0xff]
    %v409 = vld [vmem:[%s1 + $0xb90] sm:$0xff]
    %v410 = vld [vmem:[%s1 + $0xb98] sm:$0xff]
    %v411 = vld [vmem:[%s1 + $0xba0] sm:$0xff]
    %v412 = vld [vmem:[%s1 + $0xba8] sm:$0xff]
    %v413 = vld [vmem:[%s1 + $0xbb0] sm:$0xff]
    %v414 = vld [vmem:[%s1 + $0xbb8] sm:$0xff]
    %v415 = vld [vmem:[%s1 + $0xbc0] sm:$0xff]
    %v416 = vld [vmem:[%s1 + $0xbc8] sm:$0xff]
    %v417 = vld [vmem:[%s1 + $0xbd0] sm:$0xff]
    %v418 = vld [vmem:[%s1 + $0xbd8] sm:$0xff]
    %v419 = vld [vmem:[%s1 + $0xbe0] sm:$0xff]
    %v420 = vld [vmem:[%s1 + $0xbe8] sm:$0xff]
    %v421 = vld [vmem:[%s1 + $0xbf0] sm:$0xff]
    %v422 = vld [vmem:[%s1 + $0xbf8] sm:$0xff]
    %v423 = vld [vmem:[%s1 + $0xc00] sm:$0xff]
    %v424 = vld [vmem:[%s1 + $0xc08] sm:$0xff]
    %v425 = vld [vmem:[%s1 + $0xc10] sm:$0xff]
    %v426 = vld [vmem:[%s1 + $0xc18] sm:$0xff]
    %v427 = vld [vmem:[%s1 + $0xc20] sm:$0xff]
    %v428 = vld [vmem:[%s1 + $0xc28] sm:$0xff]
    %v429 = vld [vmem:[%s1 + $0xc30] sm:$0xff]
    %v430 = vld [vmem:[%s1 + $0xc38] sm:$0xff]
    %v431 = vld [vmem:[%s1 + $0xc40] sm:$0xff]
    %v432 = vld [vmem:[%s1 + $0xc48] sm:$0xff]
    %v433 = vld [vmem:[%s1 + $0xc50] sm:$0xff]
    %v434 = vld [vmem:[%s1 + $0xc58] sm:$0xff]
    %v435 = vld [vmem:[%s1 + $0xc60] sm:$0xff]
    %v436 = vld [vmem:[%s1 + $0xc68] sm:$0xff]
    %v437 = vld [vmem:[%s1 + $0xc70] sm:$0xff]
    %v438 = vld [vmem:[%s1 + $0xc78] sm:$0xff]
    %v439 = vld [vmem:[%s1 + $0xc80] sm:$0xff]
    %v440 = vld [vmem:[%s1 + $0xc88] sm:$0xff]
    %v441 = vld [vmem:[%s1 + $0xc90] sm:$0xff]
    %v442 = vld [vmem:[%s1 + $0xc98] sm:$0xff]
    %v443 = vld [vmem:[%s1 + $0xca0] sm:$0xff]
    %v444 = vld [vmem:[%s1 + $0xca8] sm:$0xff]
    %v445 = vld [vmem:[%s1 + $0xcb0] sm:$0xff]
    %v446 = vld [vmem:[%s1 + $0xcb8] sm:$0xff]
    %v447 = vld [vmem:[%s1 + $0xcc0] sm:$0xff]
    %v448 = vld [vmem:[%s1 + $0xcc8] sm:$0xff]
    %v449 = vld [vmem:[%s1 + $0xcd0] sm:$0xff]
    %v450 = vld [vmem:[%s1 + $0xcd8] sm:$0xff]
    %v451 = vld [vmem:[%s1 + $0xce0] sm:$0xff]
    %v452 = vld [vmem:[%s1 + $0xce8] sm:$0xff]
    %v453 = vld [vmem:[%s1 + $0xcf0] sm:$0xff]
    %v454 = vld [vmem:[%s1 + $0xcf8] sm:$0xff]
    %v455 = vld [vmem:[%s1 + $0xd00] sm:$0xff]
    %v456 = vld [vmem:[%s1 + $0xd08] sm:$0xff]
    %v457 = vld [vmem:[%s1 + $0xd10] sm:$0xff]
    %v458 = vld [vmem:[%s1 + $0xd18] sm:$0xff]
    %v459 = vld [vmem:[%s1 + $0xd20] sm:$0xff]
    %v460 = vld [vmem:[%s1 + $0xd28] sm:$0xff]
    %v461 = vld [vmem:[%s1 + $0xd30] sm:$0xff]
    %v462 = vld [vmem:[%s1 + $0xd38] sm:$0xff]
    %v463 = vld [vmem:[%s1 + $0xd40] sm:$0xff]
    %v464 = vld [vmem:[%s1 + $0xd48] sm:$0xff]
    %v465 = vld [vmem:[%s1 + $0xd50] sm:$0xff]
    %v466 = vld [vmem:[%s1 + $0xd58] sm:$0xff]
    %v467 = vld [vmem:[%s1 + $0xd60] sm:$0xff]
    %v468 = vld [vmem:[%s1 + $0xd68] sm:$0xff]
    %v469 = vld [vmem:[%s1 + $0xd70] sm:$0xff]
    %v470 = vld [vmem:[%s1 + $0xd78] sm:$0xff]
    %v471 = vld [vmem:[%s1 + $0xd80] sm:$0xff]
    %v472 = vld [vmem:[%s1 + $0xd88] sm:$0xff]
    %v473 = vld [vmem:[%s1 + $0xd90] sm:$0xff]
    %v474 = vld [vmem:[%s1 + $0xd98] sm:$0xff]
    %v475 = vld [vmem:[%s1 + $0xda0] sm:$0xff]
    %v476 = vld [vmem:[%s1 + $0xda8] sm:$0xff]
    %v477 = vld [vmem:[%s1 + $0xdb0] sm:$0xff]
    %v478 = vld [vmem:[%s1 + $0xdb8] sm:$0xff]
    %v479 = vld [vmem:[%s1 + $0xdc0] sm:$0xff]
    %v480 = vld [vmem:[%s1 + $0xdc8] sm:$0xff]
    %v481 = vld [vmem:[%s1 + $0xdd0] sm:$0xff]
    %v482 = vld [vmem:[%s1 + $0xdd8] sm:$0xff]
    %v483 = vld [vmem:[%s1 + $0xde0] sm:$0xff]
    %v484 = vld [vmem:[%s1 + $0xde8] sm:$0xff]
    %v485 = vld [vmem:[%s1 + $0xdf0] sm:$0xff]
    %v486 = vld [vmem:[%s1 + $0xdf8] sm:$0xff]
    %v487 = vld [vmem:[%s1 + $0xe00] sm:$0xff]
    %v488 = vld [vmem:[%s1 + $0xe08] sm:$0xff]
    %v489 = vld [vmem:[%s1 + $0xe10] sm:$0xff]
    %v490 = vld [vmem:[%s1 + $0xe18] sm:$0xff]
    %v491 = vld [vmem:[%s1 + $0xe20] sm:$0xff]
    %v492 = vld [vmem:[%s1 + $0xe28] sm:$0xff]
    %v493 = vld [vmem:[%s1 + $0xe30] sm:$0xff]
    %v494 = vld [vmem:[%s1 + $0xe38] sm:$0xff]
    %v495 = vld [vmem:[%s1 + $0xe40] sm:$0xff]
    %v496 = vld [vmem:[%s1 + $0xe48] sm:$0xff]
    %v497 = vld [vmem:[%s1 + $0xe50] sm:$0xff]
    %v498 = vld [vmem:[%s1 + $0xe58] sm:$0xff]
    %v499 = vld [vmem:[%s1 + $0xe60] sm:$0xff]
    %v500 = vld [vmem:[%s1 + $0xe68] sm:$0xff]
    %v501 = vld [vmem:[%s1 + $0xe70] sm:$0xff]
    %v502 = vld [vmem:[%s1 + $0xe78] sm:$0xff]
    %v503 = vld [vmem:[%s1 + $0xe80] sm:$0xff]
    %v504 = vld [vmem:[%s1 + $0xe88] sm:$0xff]
    %v505 = vld [vmem:[%s1 + $0xe90] sm:$0xff]
    %v506 = vld [vmem:[%s1 + $0xe98] sm:$0xff]
    %v507 = vld [vmem:[%s1 + $0xea0] sm:$0xff]
    %v508 = vld [vmem:[%s1 + $0xea8] sm:$0xff]
    %v509 = vld [vmem:[%s1 + $0xeb0] sm:$0xff]
    %v510 = vld [vmem:[%s1 + $0xeb8] sm:$0xff]
    %v511 = vld [vmem:[%s1 + $0xec0] sm:$0xff]
    %v512 = vld [vmem:[%s1 + $0xec8] sm:$0xff]
    %v513 = vld [vmem:[%s1 + $0xed0] sm:$0xff]
    %v514 = vld [vmem:[%s1 + $0xed8] sm:$0xff]
    %v515 = vld [vmem:[%s1 + $0xee0] sm:$0xff]
    %v516 = vld [vmem:[%s1 + $0xee8] sm:$0xff]
    %v517 = vld [vmem:[%s1 + $0xef0] sm:$0xff]
    %v518 = vld [vmem:[%s1 + $0xef8] sm:$0xff]
    %v519 = vld [vmem:[%s1 + $0xf00] sm:$0xff]
    %v520 = vld [vmem:[%s1 + $0xf08] sm:$0xff]
    %v521 = vld [vmem:[%s1 + $0xf10] sm:$0xff]
    %v522 = vld [vmem:[%s1 + $0xf18] sm:$0xff]
    %v523 = vld [vmem:[%s1 + $0xf20] sm:$0xff]
    %v524 = vld [vmem:[%s1 + $0xf28] sm:$0xff]
    %v525 = vld [vmem:[%s1 + $0xf30] sm:$0xff]
    %v526 = vld [vmem:[%s1 + $0xf38] sm:$0xff]
    %v527 = vld [vmem:[%s1 + $0xf40] sm:$0xff]
    %v528 = vld [vmem:[%s1 + $0xf48] sm:$0xff]
    %v529 = vld [vmem:[%s1 + $0xf50] sm:$0xff]
    %v530 = vld [vmem:[%s1 + $0xf58] sm:$0xff]
    %v531 = vld [vmem:[%s1 + $0xf60] sm:$0xff]
    %v532 = vld [vmem:[%s1 + $0xf68] sm:$0xff]
    %v533 = vld [vmem:[%s1 + $0xf70] sm:$0xff]
    %v534 = vld [vmem:[%s1 + $0xf78] sm:$0xff]
    %v535 = vld [vmem:[%s1 + $0xf80] sm:$0xff]
    %v536 = vld [vmem:[%s1 + $0xf88] sm:$0xff]
    %v537 = vld [vmem:[%s1 + $0xf90] sm:$0xff]
    %v538 = vld [vmem:[%s1 + $0xf98] sm:$0xff]
    %v539 = vld [vmem:[%s1 + $0xfa0] sm:$0xff]
    %v540 = vld [vmem:[%s1 + $0xfa8] sm:$0xff]
    %v541 = vld [vmem:[%s1 + $0xfb0] sm:$0xff]
    %v542 = vld [vmem:[%s1 + $0xfb8] sm:$0xff]
    %v543 = vld [vmem:[%s1 + $0xfc0] sm:$0xff]
    %v544 = vld [vmem:[%s1 + $0xfc8] sm:$0xff]
    %v545 = vld [vmem:[%s1 + $0xfd0] sm:$0xff]
    %v546 = vld [vmem:[%s1 + $0xfd8] sm:$0xff]
    %v547 = vld [vmem:[%s1 + $0xfe0] sm:$0xff]
    %v548 = vld [vmem:[%s1 + $0xfe8] sm:$0xff]
    %v549 = vld [vmem:[%s1 + $0xff0] sm:$0xff]
    %v550 = vld [vmem:[%s1 + $0xff8] sm:$0xff]
    %v551 = vld [vmem:[%s1 + $0x1000] sm:$0xff]
    %v552 = vld [vmem:[%s1 + $0x1008] sm:$0xff]
    %v553 = vld [vmem:[%s1 + $0x1010] sm:$0xff]
    %v554 = vld [vmem:[%s1 + $0x1018] sm:$0xff]
    %v555 = vld [vmem:[%s1 + $0x1020] sm:$0xff]
    %v556 = vld [vmem:[%s1 + $0x1028] sm:$0xff]
    %v557 = vld [vmem:[%s1 + $0x1030] sm:$0xff]
    %v558 = vld [vmem:[%s1 + $0x1038] sm:$0xff]
    %v559 = vld [vmem:[%s1 + $0x1040] sm:$0xff]
    %v560 = vld [vmem:[%s1 + $0x1048] sm:$0xff]
    %v561 = vld [vmem:[%s1 + $0x1050] sm:$0xff]
    %v562 = vld [vmem:[%s1 + $0x1058] sm:$0xff]
    %v563 = vld [vmem:[%s1 + $0x1060] sm:$0xff]
    %v564 = vld [vmem:[%s1 + $0x1068] sm:$0xff]
    %v565 = vld [vmem:[%s1 + $0x1070] sm:$0xff]
    %v566 = vld [vmem:[%s1 + $0x1078] sm:$0xff]
    %v567 = vld [vmem:[%s1 + $0x1080] sm:$0xff]
    %v568 = vld [vmem:[%s1 + $0x1088] sm:$0xff]
    %v569 = vld [vmem:[%s1 + $0x1090] sm:$0xff]
    %v570 = vld [vmem:[%s1 + $0x1098] sm:$0xff]
    %v571 = vld [vmem:[%s1 + $0x10a0] sm:$0xff]
    %v572 = vld [vmem:[%s1 + $0x10a8] sm:$0xff]
    %v573 = vld [vmem:[%s1 + $0x10b0] sm:$0xff]
    %v574 = vld [vmem:[%s1 + $0x10b8] sm:$0xff]
    %v575 = vld [vmem:[%s1 + $0x10c0] sm:$0xff]
    %v576 = vld [vmem:[%s1 + $0x10c8] sm:$0xff]
    %v577 = vld [vmem:[%s1 + $0x10d0] sm:$0xff]
    %v578 = vld [vmem:[%s1 + $0x10d8] sm:$0xff]
    %v579 = vld [vmem:[%s1 + $0x10e0] sm:$0xff]
    %v580 = vld [vmem:[%s1 + $0x10e8] sm:$0xff]
    %v581 = vld [vmem:[%s1 + $0x10f0] sm:$0xff]
    %v582 = vld [vmem:[%s1 + $0x10f8] sm:$0xff]
    %v583 = vld [vmem:[%s1 + $0x1100] sm:$0xff]
    %v584 = vld [vmem:[%s1 + $0x1108] sm:$0xff]
    %v585 = vld [vmem:[%s1 + $0x1110] sm:$0xff]
    %v586 = vld [vmem:[%s1 + $0x1118] sm:$0xff]
    %v587 = vld [vmem:[%s1 + $0x1120] sm:$0xff]
    %v588 = vld [vmem:[%s1 + $0x1128] sm:$0xff]
    %v589 = vld [vmem:[%s1 + $0x1130] sm:$0xff]
    %v590 = vld [vmem:[%s1 + $0x1138] sm:$0xff]
    %v591 = vld [vmem:[%s1 + $0x1140] sm:$0xff]
    %v592 = vld [vmem:[%s1 + $0x1148] sm:$0xff]
    %v593 = vld [vmem:[%s1 + $0x1150] sm:$0xff]
    %v594 = vld [vmem:[%s1 + $0x1158] sm:$0xff]
    %v595 = vld [vmem:[%s1 + $0x1160] sm:$0xff]
    %v596 = vld [vmem:[%s1 + $0x1168] sm:$0xff]
    %v597 = vld [vmem:[%s1 + $0x1170] sm:$0xff]
    %v598 = vld [vmem:[%s1 + $0x1178] sm:$0xff]
    %v599 = vld [vmem:[%s1 + $0x1180] sm:$0xff]
    %v600 = vld [vmem:[%s1 + $0x1188] sm:$0xff]
    %v601 = vld [vmem:[%s1 + $0x1190] sm:$0xff]
    %v602 = vld [vmem:[%s1 + $0x1198] sm:$0xff]
    %v603 = vld [vmem:[%s1 + $0x11a0] sm:$0xff]
    %v604 = vld [vmem:[%s1 + $0x11a8] sm:$0xff]
    %v605 = vld [vmem:[%s1 + $0x11b0] sm:$0xff]
    %v606 = vld [vmem:[%s1 + $0x11b8] sm:$0xff]
    %v607 = vld [vmem:[%s1 + $0x11c0] sm:$0xff]
    %v608 = vld [vmem:[%s1 + $0x11c8] sm:$0xff]
    %v609 = vld [vmem:[%s1 + $0x11d0] sm:$0xff]
    %v610 = vld [vmem:[%s1 + $0x11d8] sm:$0xff]
    %v611 = vld [vmem:[%s1 + $0x11e0] sm:$0xff]
    %v612 = vld [vmem:[%s1 + $0x11e8] sm:$0xff]
    %v613 = vld [vmem:[%s1 + $0x11f0] sm:$0xff]
    %v614 = vld [vmem:[%s1 + $0x11f8] sm:$0xff]
    %v615 = vld [vmem:[%s1 + $0x1200] sm:$0xff]
    %v616 = vld [vmem:[%s1 + $0x1208] sm:$0xff]
    %v617 = vld [vmem:[%s1 + $0x1210] sm:$0xff]
    %v618 = vld [vmem:[%s1 + $0x1218] sm:$0xff]
    %v619 = vld [vmem:[%s1 + $0x1220] sm:$0xff]
    %v620 = vld [vmem:[%s1 + $0x1228] sm:$0xff]
    %v621 = vld [vmem:[%s1 + $0x1230] sm:$0xff]
    %v622 = vld [vmem:[%s1 + $0x1238] sm:$0xff]
    %v623 = vld [vmem:[%s1 + $0x1240] sm:$0xff]
    %v624 = vld [vmem:[%s1 + $0x1248] sm:$0xff]
    %v625 = vld [vmem:[%s1 + $0x1250] sm:$0xff]
    %v626 = vld [vmem:[%s1 + $0x1258] sm:$0xff]
    %v627 = vld [vmem:[%s1 + $0x1260] sm:$0xff]
    %v628 = vld [vmem:[%s1 + $0x1268] sm:$0xff]
    %v629 = vld [vmem:[%s1 + $0x1270] sm:$0xff]
    %v630 = vld [vmem:[%s1 + $0x1278] sm:$0xff]
    %v631 = vld [vmem:[%s1 + $0x1280] sm:$0xff]
    %v632 = vld [vmem:[%s1 + $0x1288] sm:$0xff]
    %v633 = vld [vmem:[%s1 + $0x1290] sm:$0xff]
    %v634 = vld [vmem:[%s1 + $0x1298] sm:$0xff]
    %v635 = vld [vmem:[%s1 + $0x12a0] sm:$0xff]
    %v636 = vld [vmem:[%s1 + $0x12a8] sm:$0xff]
    %v637 = vld [vmem:[%s1 + $0x12b0] sm:$0xff]
    %v638 = vld [vmem:[%s1 + $0x12b8] sm:$0xff]
    %v639 = vld [vmem:[%s1 + $0x12c0] sm:$0xff]
    %v640 = vld [vmem:[%s1 + $0x12c8] sm:$0xff]
    %v641 = vld [vmem:[%s1 + $0x12d0] sm:$0xff]
    %v642 = vld [vmem:[%s1 + $0x12d8] sm:$0xff]
    %v643 = vld [vmem:[%s1 + $0x12e0] sm:$0xff]
    %v644 = vld [vmem:[%s1 + $0x12e8] sm:$0xff]
    %v645 = vld [vmem:[%s1 + $0x12f0] sm:$0xff]
    %v646 = vld [vmem:[%s1 + $0x12f8] sm:$0xff]
    %v647 = vld [vmem:[%s1 + $0x1300] sm:$0xff]
    %v648 = vld [vmem:[%s1 + $0x1308] sm:$0xff]
    %v649 = vld [vmem:[%s1 + $0x1310] sm:$0xff]
    %v650 = vld [vmem:[%s1 + $0x1318] sm:$0xff]
    %v651 = vld [vmem:[%s1 + $0x1320] sm:$0xff]
    %v652 = vld [vmem:[%s1 + $0x1328] sm:$0xff]
    %v653 = vld [vmem:[%s1 + $0x1330] sm:$0xff]
    %v654 = vld [vmem:[%s1 + $0x1338] sm:$0xff]
    %v655 = vld [vmem:[%s1 + $0x1340] sm:$0xff]
    %v656 = vld [vmem:[%s1 + $0x1348] sm:$0xff]
    %v657 = vld [vmem:[%s1 + $0x1350] sm:$0xff]
    %v658 = vld [vmem:[%s1 + $0x1358] sm:$0xff]
    %v659 = vld [vmem:[%s1 + $0x1360] sm:$0xff]
    %v660 = vld [vmem:[%s1 + $0x1368] sm:$0xff]
    %v661 = vld [vmem:[%s1 + $0x1370] sm:$0xff]
    %v662 = vld [vmem:[%s1 + $0x1378] sm:$0xff]
    %v663 = vld [vmem:[%s1 + $0x1380] sm:$0xff]
    %v664 = vld [vmem:[%s1 + $0x1388] sm:$0xff]
    %v665 = vld [vmem:[%s1 + $0x1390] sm:$0xff]
    %v666 = vld [vmem:[%s1 + $0x1398] sm:$0xff]
    %v667 = vld [vmem:[%s1 + $0x13a0] sm:$0xff]
    %v668 = vld [vmem:[%s1 + $0x13a8] sm:$0xff]
    %v669 = vld [vmem:[%s1 + $0x13b0] sm:$0xff]
    %v670 = vld [vmem:[%s1 + $0x13b8] sm:$0xff]
    %v671 = vld [vmem:[%s1 + $0x13c0] sm:$0xff]
    %v672 = vld [vmem:[%s1 + $0x13c8] sm:$0xff]
    %v673 = vld [vmem:[%s1 + $0x13d0] sm:$0xff]
    %v674 = vld [vmem:[%s1 + $0x13d8] sm:$0xff]
    %v675 = vld [vmem:[%s1 + $0x13e0] sm:$0xff]
    %v676 = vld [vmem:[%s1 + $0x13e8] sm:$0xff]
    %v677 = vld [vmem:[%s1 + $0x13f0] sm:$0xff]
    %v678 = vld [vmem:[%s1 + $0x13f8] sm:$0xff]
    %v679 = vld [vmem:[%s1 + $0x1400] sm:$0xff]
    %v680 = vld [vmem:[%s1 + $0x1408] sm:$0xff]
    %v681 = vld [vmem:[%s1 + $0x1410] sm:$0xff]
    %v682 = vld [vmem:[%s1 + $0x1418] sm:$0xff]
    %v683 = vld [vmem:[%s1 + $0x1420] sm:$0xff]
    %v684 = vld [vmem:[%s1 + $0x1428] sm:$0xff]
    %v685 = vld [vmem:[%s1 + $0x1430] sm:$0xff]
    %v686 = vld [vmem:[%s1 + $0x1438] sm:$0xff]
    %v687 = vld [vmem:[%s1 + $0x1440] sm:$0xff]
    %v688 = vld [vmem:[%s1 + $0x1448] sm:$0xff]
    %v689 = vld [vmem:[%s1 + $0x1450] sm:$0xff]
    %v690 = vld [vmem:[%s1 + $0x1458] sm:$0xff]
    %v691 = vld [vmem:[%s1 + $0x1460] sm:$0xff]
    %v692 = vld [vmem:[%s1 + $0x1468] sm:$0xff]
    %v693 = vld [vmem:[%s1 + $0x1470] sm:$0xff]
    %v694 = vld [vmem:[%s1 + $0x1478] sm:$0xff]
    %v695 = vld [vmem:[%s1 + $0x1480] sm:$0xff]
    %v696 = vld [vmem:[%s1 + $0x1488] sm:$0xff]
    %v697 = vld [vmem:[%s1 + $0x1490] sm:$0xff]
    %v698 = vld [vmem:[%s1 + $0x1498] sm:$0xff]
    %v699 = vld [vmem:[%s1 + $0x14a0] sm:$0xff]
    %v700 = vld [vmem:[%s1 + $0x14a8] sm:$0xff]
    %v701 = vld [vmem:[%s1 + $0x14b0] sm:$0xff]
    %v702 = vld [vmem:[%s1 + $0x14b8] sm:$0xff]
    %v703 = vld [vmem:[%s1 + $0x14c0] sm:$0xff]
    %v704 = vld [vmem:[%s1 + $0x14c8] sm:$0xff]
    %v705 = vld [vmem:[%s1 + $0x14d0] sm:$0xff]
    %v706 = vld [vmem:[%s1 + $0x14d8] sm:$0xff]
    %v707 = vld [vmem:[%s1 + $0x14e0] sm:$0xff]
    %v708 = vld [vmem:[%s1 + $0x14e8] sm:$0xff]
    %v709 = vld [vmem:[%s1 + $0x14f0] sm:$0xff]
    %v710 = vld [vmem:[%s1 + $0x14f8] sm:$0xff]
    %v711 = vld [vmem:[%s1 + $0x1500] sm:$0xff]
    %v712 = vld [vmem:[%s1 + $0x1508] sm:$0xff]
    %v713 = vld [vmem:[%s1 + $0x1510] sm:$0xff]
    %v714 = vld [vmem:[%s1 + $0x1518] sm:$0xff]
    %v715 = vld [vmem:[%s1 + $0x1520] sm:$0xff]
    %v716 = vld [vmem:[%s1 + $0x1528] sm:$0xff]
    %v717 = vld [vmem:[%s1 + $0x1530] sm:$0xff]
    %v718 = vld [vmem:[%s1 + $0x1538] sm:$0xff]
    %v719 = vld [vmem:[%s1 + $0x1540] sm:$0xff]
    %v720 = vld [vmem:[%s1 + $0x1548] sm:$0xff]
    %v721 = vld [vmem:[%s1 + $0x1550] sm:$0xff]
    %v722 = vld [vmem:[%s1 + $0x1558] sm:$0xff]
    %v723 = vld [vmem:[%s1 + $0x1560] sm:$0xff]
    %v724 = vld [vmem:[%s1 + $0x1568] sm:$0xff]
    %v725 = vld [vmem:[%s1 + $0x1570] sm:$0xff]
    %v726 = vld [vmem:[%s1 + $0x1578] sm:$0xff]
    %v727 = vld [vmem:[%s1 + $0x1580] sm:$0xff]
    %v728 = vld [vmem:[%s1 + $0x1588] sm:$0xff]
    %v729 = vld [vmem:[%s1 + $0x1590] sm:$0xff]
    %v730 = vld [vmem:[%s1 + $0x1598] sm:$0xff]
    %v731 = vld [vmem:[%s1 + $0x15a0] sm:$0xff]
    %v732 = vld [vmem:[%s1 + $0x15a8] sm:$0xff]
    %v733 = vld [vmem:[%s1 + $0x15b0] sm:$0xff]
    %v734 = vld [vmem:[%s1 + $0x15b8] sm:$0xff]
    %v735 = vld [vmem:[%s1 + $0x15c0] sm:$0xff]
    %v736 = vld [vmem:[%s1 + $0x15c8] sm:$0xff]
    %v737 = vld [vmem:[%s1 + $0x15d0] sm:$0xff]
    %v738 = vld [vmem:[%s1 + $0x15d8] sm:$0xff]
    %v739 = vld [vmem:[%s1 + $0x15e0] sm:$0xff]
    %v740 = vld [vmem:[%s1 + $0x15e8] sm:$0xff]
    %v741 = vld [vmem:[%s1 + $0x15f0] sm:$0xff]
    %v742 = vld [vmem:[%s1 + $0x15f8] sm:$0xff]
    %v743 = vld [vmem:[%s1 + $0x1600] sm:$0xff]
    %v744 = vld [vmem:[%s1 + $0x1608] sm:$0xff]
    %v745 = vld [vmem:[%s1 + $0x1610] sm:$0xff]
    %v746 = vld [vmem:[%s1 + $0x1618] sm:$0xff]
    %v747 = vld [vmem:[%s1 + $0x1620] sm:$0xff]
    %v748 = vld [vmem:[%s1 + $0x1628] sm:$0xff]
    %v749 = vld [vmem:[%s1 + $0x1630] sm:$0xff]
    %v750 = vld [vmem:[%s1 + $0x1638] sm:$0xff]
    %v751 = vld [vmem:[%s1 + $0x1640] sm:$0xff]
    %v752 = vld [vmem:[%s1 + $0x1648] sm:$0xff]
    %v753 = vld [vmem:[%s1 + $0x1650] sm:$0xff]
    %v754 = vld [vmem:[%s1 + $0x1658] sm:$0xff]
    %v755 = vld [vmem:[%s1 + $0x1660] sm:$0xff]
    %v756 = vld [vmem:[%s1 + $0x1668] sm:$0xff]
    %v757 = vld [vmem:[%s1 + $0x1670] sm:$0xff]
    %v758 = vld [vmem:[%s1 + $0x1678] sm:$0xff]
    %v759 = vld [vmem:[%s1 + $0x1680] sm:$0xff]
    %v760 = vld [vmem:[%s1 + $0x1688] sm:$0xff]
    %v761 = vld [vmem:[%s1 + $0x1690] sm:$0xff]
    %v762 = vld [vmem:[%s1 + $0x1698] sm:$0xff]
    %v763 = vld [vmem:[%s1 + $0x16a0] sm:$0xff]
    %v764 = vld [vmem:[%s1 + $0x16a8] sm:$0xff]
    %v765 = vld [vmem:[%s1 + $0x16b0] sm:$0xff]
    %v766 = vld [vmem:[%s1 + $0x16b8] sm:$0xff]
    %v767 = vld [vmem:[%s1 + $0x16c0] sm:$0xff]
    %v768 = vld [vmem:[%s1 + $0x16c8] sm:$0xff]
    %v769 = vld [vmem:[%s1 + $0x16d0] sm:$0xff]
    %v770 = vld [vmem:[%s1 + $0x16d8] sm:$0xff]
    %v771 = vld [vmem:[%s1 + $0x16e0] sm:$0xff]
    %v772 = vld [vmem:[%s1 + $0x16e8] sm:$0xff]
    %v773 = vld [vmem:[%s1 + $0x16f0] sm:$0xff]
    %v774 = vld [vmem:[%s1 + $0x16f8] sm:$0xff]
    %v775 = vld [vmem:[%s1 + $0x1700] sm:$0xff]
    %v776 = vld [vmem:[%s1 + $0x1708] sm:$0xff]
    %v777 = vld [vmem:[%s1 + $0x1710] sm:$0xff]
    %v778 = vld [vmem:[%s1 + $0x1718] sm:$0xff]
    %v779 = vld [vmem:[%s1 + $0x1720] sm:$0xff]
    %v780 = vld [vmem:[%s1 + $0x1728] sm:$0xff]
    %v781 = vld [vmem:[%s1 + $0x1730] sm:$0xff]
    %v782 = vld [vmem:[%s1 + $0x1738] sm:$0xff]
    %v783 = vld [vmem:[%s1 + $0x1740] sm:$0xff]
    %v784 = vld [vmem:[%s1 + $0x1748] sm:$0xff]
    %v785 = vld [vmem:[%s1 + $0x1750] sm:$0xff]
    %v786 = vld [vmem:[%s1 + $0x1758] sm:$0xff]
    %v787 = vld [vmem:[%s1 + $0x1760] sm:$0xff]
    %v788 = vld [vmem:[%s1 + $0x1768] sm:$0xff]
    %v789 = vld [vmem:[%s1 + $0x1770] sm:$0xff]
    %v790 = vld [vmem:[%s1 + $0x1778] sm:$0xff]
    %v791 = vld [vmem:[%s1 + $0x1780] sm:$0xff]
    %v792 = vld [vmem:[%s1 + $0x1788] sm:$0xff]
    %v793 = vld [vmem:[%s1 + $0x1790] sm:$0xff]
    %v794 = vld [vmem:[%s1 + $0x1798] sm:$0xff]
    %v795 = vld [vmem:[%s1 + $0x17a0] sm:$0xff]
    %v796 = vld [vmem:[%s1 + $0x17a8] sm:$0xff]
    %v797 = vld [vmem:[%s1 + $0x17b0] sm:$0xff]
    %v798 = vld [vmem:[%s1 + $0x17b8] sm:$0xff]
    %v799 = vld [vmem:[%s1 + $0x17c0] sm:$0xff]
    %v800 = vld [vmem:[%s1 + $0x17c8] sm:$0xff]
    %v801 = vld [vmem:[%s1 + $0x17d0] sm:$0xff]
    %v802 = vld [vmem:[%s1 + $0x17d8] sm:$0xff]
    %v803 = vld [vmem:[%s1 + $0x17e0] sm:$0xff]
    %v804 = vld [vmem:[%s1 + $0x17e8] sm:$0xff]
    %v805 = vld [vmem:[%s1 + $0x17f0] sm:$0xff]
    %v806 = vld [vmem:[%s1 + $0x17f8] sm:$0xff]
    %v807 = vld [vmem:[%s1 + $0x1800] sm:$0xff]
    %v808 = vld [vmem:[%s1 + $0x1808] sm:$0xff]
    %v809 = vld [vmem:[%s1 + $0x1810] sm:$0xff]
    %v810 = vld [vmem:[%s1 + $0x1818] sm:$0xff]
    %v811 = vld [vmem:[%s1 + $0x1820] sm:$0xff]
    %v812 = vld [vmem:[%s1 + $0x1828] sm:$0xff]
    %v813 = vld [vmem:[%s1 + $0x1830] sm:$0xff]
    %v814 = vld [vmem:[%s1 + $0x1838] sm:$0xff]
    %v815 = vld [vmem:[%s1 + $0x1840] sm:$0xff]
    %v816 = vld [vmem:[%s1 + $0x1848] sm:$0xff]
    %v817 = vld [vmem:[%s1 + $0x1850] sm:$0xff]
    %v818 = vld [vmem:[%s1 + $0x1858] sm:$0xff]
    %v819 = vld [vmem:[%s1 + $0x1860] sm:$0xff]
    %v820 = vld [vmem:[%s1 + $0x1868] sm:$0xff]
    %v821 = vld [vmem:[%s1 + $0x1870] sm:$0xff]
    %v822 = vld [vmem:[%s1 + $0x1878] sm:$0xff]
    %v823 = vld [vmem:[%s1 + $0x1880] sm:$0xff]
    %v824 = vld [vmem:[%s1 + $0x1888] sm:$0xff]
    %v825 = vld [vmem:[%s1 + $0x1890] sm:$0xff]
    %v826 = vld [vmem:[%s1 + $0x1898] sm:$0xff]
    %v827 = vld [vmem:[%s1 + $0x18a0] sm:$0xff]
    %v828 = vld [vmem:[%s1 + $0x18a8] sm:$0xff]
    %v829 = vld [vmem:[%s1 + $0x18b0] sm:$0xff]
    %v830 = vld [vmem:[%s1 + $0x18b8] sm:$0xff]
    %v831 = vld [vmem:[%s1 + $0x18c0] sm:$0xff]
    %v832 = vld [vmem:[%s1 + $0x18c8] sm:$0xff]
    %v833 = vld [vmem:[%s1 + $0x18d0] sm:$0xff]
    %v834 = vld [vmem:[%s1 + $0x18d8] sm:$0xff]
    %v835 = vld [vmem:[%s1 + $0x18e0] sm:$0xff]
    %v836 = vld [vmem:[%s1 + $0x18e8] sm:$0xff]
    %v837 = vld [vmem:[%s1 + $0x18f0] sm:$0xff]
    %v838 = vld [vmem:[%s1 + $0x18f8] sm:$0xff]
    %v839 = vld [vmem:[%s1 + $0x1900] sm:$0xff]
    %v840 = vld [vmem:[%s1 + $0x1908] sm:$0xff]
    %v841 = vld [vmem:[%s1 + $0x1910] sm:$0xff]
    %v842 = vld [vmem:[%s1 + $0x1918] sm:$0xff]
    %v843 = vld [vmem:[%s1 + $0x1920] sm:$0xff]
    %v844 = vld [vmem:[%s1 + $0x1928] sm:$0xff]
    %v845 = vld [vmem:[%s1 + $0x1930] sm:$0xff]
    %v846 = vld [vmem:[%s1 + $0x1938] sm:$0xff]
    %v847 = vld [vmem:[%s1 + $0x1940] sm:$0xff]
    %v848 = vld [vmem:[%s1 + $0x1948] sm:$0xff]
    %v849 = vld [vmem:[%s1 + $0x1950] sm:$0xff]
    %v850 = vld [vmem:[%s1 + $0x1958] sm:$0xff]
    %v851 = vld [vmem:[%s1 + $0x1960] sm:$0xff]
    %v852 = vld [vmem:[%s1 + $0x1968] sm:$0xff]
    %v853 = vld [vmem:[%s1 + $0x1970] sm:$0xff]
    %v854 = vld [vmem:[%s1 + $0x1978] sm:$0xff]
    %v855 = vld [vmem:[%s1 + $0x1980] sm:$0xff]
    %v856 = vld [vmem:[%s1 + $0x1988] sm:$0xff]
    %v857 = vld [vmem:[%s1 + $0x1990] sm:$0xff]
    %v858 = vld [vmem:[%s1 + $0x1998] sm:$0xff]
    %v859 = vld [vmem:[%s1 + $0x19a0] sm:$0xff]
    %v860 = vld [vmem:[%s1 + $0x19a8] sm:$0xff]
    %v861 = vld [vmem:[%s1 + $0x19b0] sm:$0xff]
    %v862 = vld [vmem:[%s1 + $0x19b8] sm:$0xff]
    %v863 = vld [vmem:[%s1 + $0x19c0] sm:$0xff]
    %v864 = vld [vmem:[%s1 + $0x19c8] sm:$0xff]
    %v865 = vld [vmem:[%s1 + $0x19d0] sm:$0xff]
    %v866 = vld [vmem:[%s1 + $0x19d8] sm:$0xff]
    %v867 = vld [vmem:[%s1 + $0x19e0] sm:$0xff]
    %v868 = vld [vmem:[%s1 + $0x19e8] sm:$0xff]
    %v869 = vld [vmem:[%s1 + $0x19f0] sm:$0xff]
    %v870 = vld [vmem:[%s1 + $0x19f8] sm:$0xff]
    %v871 = vld [vmem:[%s1 + $0x1a00] sm:$0xff]
    %v872 = vld [vmem:[%s1 + $0x1a08] sm:$0xff]
    %v873 = vld [vmem:[%s1 + $0x1a10] sm:$0xff]
    %v874 = vld [vmem:[%s1 + $0x1a18] sm:$0xff]
    %v875 = vld [vmem:[%s1 + $0x1a20] sm:$0xff]
    %v876 = vld [vmem:[%s1 + $0x1a28] sm:$0xff]
    %v877 = vld [vmem:[%s1 + $0x1a30] sm:$0xff]
    %v878 = vld [vmem:[%s1 + $0x1a38] sm:$0xff]
    %v879 = vld [vmem:[%s1 + $0x1a40] sm:$0xff]
    %v880 = vld [vmem:[%s1 + $0x1a48] sm:$0xff]
    %v881 = vld [vmem:[%s1 + $0x1a50] sm:$0xff]
    %v882 = vld [vmem:[%s1 + $0x1a58] sm:$0xff]
    %v883 = vld [vmem:[%s1 + $0x1a60] sm:$0xff]
    %v884 = vld [vmem:[%s1 + $0x1a68] sm:$0xff]
    %v885 = vld [vmem:[%s1 + $0x1a70] sm:$0xff]
    %v886 = vld [vmem:[%s1 + $0x1a78] sm:$0xff]
    %v887 = vld [vmem:[%s1 + $0x1a80] sm:$0xff]
    %v888 = vld [vmem:[%s1 + $0x1a88] sm:$0xff]
    %v889 = vld [vmem:[%s1 + $0x1a90] sm:$0xff]
    %v890 = vld [vmem:[%s1 + $0x1a98] sm:$0xff]
    %v891 = vld [vmem:[%s1 + $0x1aa0] sm:$0xff]
    %v892 = vld [vmem:[%s1 + $0x1aa8] sm:$0xff]
    %v893 = vld [vmem:[%s1 + $0x1ab0] sm:$0xff]
    %v894 = vld [vmem:[%s1 + $0x1ab8] sm:$0xff]
    %v895 = vld [vmem:[%s1 + $0x1ac0] sm:$0xff]
    %v896 = vld [vmem:[%s1 + $0x1ac8] sm:$0xff]
    %v897 = vld [vmem:[%s1 + $0x1ad0] sm:$0xff]
    %v898 = vld [vmem:[%s1 + $0x1ad8] sm:$0xff]
    %v899 = vld [vmem:[%s1 + $0x1ae0] sm:$0xff]
    %v900 = vld [vmem:[%s1 + $0x1ae8] sm:$0xff]
    %v901 = vld [vmem:[%s1 + $0x1af0] sm:$0xff]
    %v902 = vld [vmem:[%s1 + $0x1af8] sm:$0xff]
    %v903 = vld [vmem:[%s1 + $0x1b00] sm:$0xff]
    %v904 = vld [vmem:[%s1 + $0x1b08] sm:$0xff]
    %v905 = vld [vmem:[%s1 + $0x1b10] sm:$0xff]
    %v906 = vld [vmem:[%s1 + $0x1b18] sm:$0xff]
    %v907 = vld [vmem:[%s1 + $0x1b20] sm:$0xff]
    %v908 = vld [vmem:[%s1 + $0x1b28] sm:$0xff]
    %v909 = vld [vmem:[%s1 + $0x1b30] sm:$0xff]
    %v910 = vld [vmem:[%s1 + $0x1b38] sm:$0xff]
    %v911 = vld [vmem:[%s1 + $0x1b40] sm:$0xff]
    %v912 = vld [vmem:[%s1 + $0x1b48] sm:$0xff]
    %v913 = vld [vmem:[%s1 + $0x1b50] sm:$0xff]
    %v914 = vld [vmem:[%s1 + $0x1b58] sm:$0xff]
    %v915 = vld [vmem:[%s1 + $0x1b60] sm:$0xff]
    %v916 = vld [vmem:[%s1 + $0x1b68] sm:$0xff]
    %v917 = vld [vmem:[%s1 + $0x1b70] sm:$0xff]
    %v918 = vld [vmem:[%s1 + $0x1b78] sm:$0xff]
    %v919 = vld [vmem:[%s1 + $0x1b80] sm:$0xff]
    %v920 = vld [vmem:[%s1 + $0x1b88] sm:$0xff]
    %v921 = vld [vmem:[%s1 + $0x1b90] sm:$0xff]
    %v922 = vld [vmem:[%s1 + $0x1b98] sm:$0xff]
    %v923 = vld [vmem:[%s1 + $0x1ba0] sm:$0xff]
    %v924 = vld [vmem:[%s1 + $0x1ba8] sm:$0xff]
    %v925 = vld [vmem:[%s1 + $0x1bb0] sm:$0xff]
    %v926 = vld [vmem:[%s1 + $0x1bb8] sm:$0xff]
    %v927 = vld [vmem:[%s1 + $0x1bc0] sm:$0xff]
    %v928 = vld [vmem:[%s1 + $0x1bc8] sm:$0xff]
    %v929 = vld [vmem:[%s1 + $0x1bd0] sm:$0xff]
    %v930 = vld [vmem:[%s1 + $0x1bd8] sm:$0xff]
    %v931 = vld [vmem:[%s1 + $0x1be0] sm:$0xff]
    %v932 = vld [vmem:[%s1 + $0x1be8] sm:$0xff]
    %v933 = vld [vmem:[%s1 + $0x1bf0] sm:$0xff]
    %v934 = vld [vmem:[%s1 + $0x1bf8] sm:$0xff]
    %v935 = vld [vmem:[%s1 + $0x1c00] sm:$0xff]
    %v936 = vld [vmem:[%s1 + $0x1c08] sm:$0xff]
    %v937 = vld [vmem:[%s1 + $0x1c10] sm:$0xff]
    %v938 = vld [vmem:[%s1 + $0x1c18] sm:$0xff]
    %v939 = vld [vmem:[%s1 + $0x1c20] sm:$0xff]
    %v940 = vld [vmem:[%s1 + $0x1c28] sm:$0xff]
    %v941 = vld [vmem:[%s1 + $0x1c30] sm:$0xff]
    %v942 = vld [vmem:[%s1 + $0x1c38] sm:$0xff]
    %v943 = vld [vmem:[%s1 + $0x1c40] sm:$0xff]
    %v944 = vld [vmem:[%s1 + $0x1c48] sm:$0xff]
    %v945 = vld [vmem:[%s1 + $0x1c50] sm:$0xff]
    %v946 = vld [vmem:[%s1 + $0x1c58] sm:$0xff]
    %v947 = vld [vmem:[%s1 + $0x1c60] sm:$0xff]
    %v948 = vld [vmem:[%s1 + $0x1c68] sm:$0xff]
    %v949 = vld [vmem:[%s1 + $0x1c70] sm:$0xff]
    %v950 = vld [vmem:[%s1 + $0x1c78] sm:$0xff]
    %v951 = vld [vmem:[%s1 + $0x1c80] sm:$0xff]
    %v952 = vld [vmem:[%s1 + $0x1c88] sm:$0xff]
    %v953 = vld [vmem:[%s1 + $0x1c90] sm:$0xff]
    %v954 = vld [vmem:[%s1 + $0x1c98] sm:$0xff]
    %v955 = vld [vmem:[%s1 + $0x1ca0] sm:$0xff]
    %v956 = vld [vmem:[%s1 + $0x1ca8] sm:$0xff]
    %v957 = vld [vmem:[%s1 + $0x1cb0] sm:$0xff]
    %v958 = vld [vmem:[%s1 + $0x1cb8] sm:$0xff]
    %v959 = vld [vmem:[%s1 + $0x1cc0] sm:$0xff]
    %v960 = vld [vmem:[%s1 + $0x1cc8] sm:$0xff]
    %v961 = vld [vmem:[%s1 + $0x1cd0] sm:$0xff]
    %v962 = vld [vmem:[%s1 + $0x1cd8] sm:$0xff]
    %v963 = vld [vmem:[%s1 + $0x1ce0] sm:$0xff]
    %v964 = vld [vmem:[%s1 + $0x1ce8] sm:$0xff]
    %v965 = vld [vmem:[%s1 + $0x1cf0] sm:$0xff]
    %v966 = vld [vmem:[%s1 + $0x1cf8] sm:$0xff]
    %v967 = vld [vmem:[%s1 + $0x1d00] sm:$0xff]
    %v968 = vld [vmem:[%s1 + $0x1d08] sm:$0xff]
    %v969 = vld [vmem:[%s1 + $0x1d10] sm:$0xff]
    %v970 = vld [vmem:[%s1 + $0x1d18] sm:$0xff]
    %v971 = vld [vmem:[%s1 + $0x1d20] sm:$0xff]
    %v972 = vld [vmem:[%s1 + $0x1d28] sm:$0xff]
    %v973 = vld [vmem:[%s1 + $0x1d30] sm:$0xff]
    %v974 = vld [vmem:[%s1 + $0x1d38] sm:$0xff]
    %v975 = vld [vmem:[%s1 + $0x1d40] sm:$0xff]
    %v976 = vld [vmem:[%s1 + $0x1d48] sm:$0xff]
    %v977 = vld [vmem:[%s1 + $0x1d50] sm:$0xff]
    %v978 = vld [vmem:[%s1 + $0x1d58] sm:$0xff]
    %v979 = vld [vmem:[%s1 + $0x1d60] sm:$0xff]
    %v980 = vld [vmem:[%s1 + $0x1d68] sm:$0xff]
    %v981 = vld [vmem:[%s1 + $0x1d70] sm:$0xff]
    %v982 = vld [vmem:[%s1 + $0x1d78] sm:$0xff]
    %v983 = vld [vmem:[%s1 + $0x1d80] sm:$0xff]
    %v984 = vld [vmem:[%s1 + $0x1d88] sm:$0xff]
    %v985 = vld [vmem:[%s1 + $0x1d90] sm:$0xff]
    %v986 = vld [vmem:[%s1 + $0x1d98] sm:$0xff]
    %v987 = vld [vmem:[%s1 + $0x1da0] sm:$0xff]
    %v988 = vld [vmem:[%s1 + $0x1da8] sm:$0xff]
    %v989 = vld [vmem:[%s1 + $0x1db0] sm:$0xff]
    %v990 = vld [vmem:[%s1 + $0x1db8] sm:$0xff]
    %v991 = vld [vmem:[%s1 + $0x1dc0] sm:$0xff]
    %v992 = vld [vmem:[%s1 + $0x1dc8] sm:$0xff]
    %v993 = vld [vmem:[%s1 + $0x1dd0] sm:$0xff]
    %v994 = vld [vmem:[%s1 + $0x1dd8] sm:$0xff]
    %v995 = vld [vmem:[%s1 + $0x1de0] sm:$0xff]
    %v996 = vld [vmem:[%s1 + $0x1de8] sm:$0xff]
    %v997 = vld [vmem:[%s1 + $0x1df0] sm:$0xff]
    %v998 = vld [vmem:[%s1 + $0x1df8] sm:$0xff]
    %v999 = vld [vmem:[%s1 + $0x1e00] sm:$0xff]
    %v1000 = vld [vmem:[%s1 + $0x1e08] sm:$0xff]
    %v1001 = vld [vmem:[%s1 + $0x1e10] sm:$0xff]
    %v1002 = vld [vmem:[%s1 + $0x1e18] sm:$0xff]
    %v1003 = vld [vmem:[%s1 + $0x1e20] sm:$0xff]
    %v1004 = vld [vmem:[%s1 + $0x1e28] sm:$0xff]
    %v1005 = vld [vmem:[%s1 + $0x1e30] sm:$0xff]
    %v1006 = vld [vmem:[%s1 + $0x1e38] sm:$0xff]
    %v1007 = vld [vmem:[%s1 + $0x1e40] sm:$0xff]
    %v1008 = vld [vmem:[%s1 + $0x1e48] sm:$0xff]
    %v1009 = vld [vmem:[%s1 + $0x1e50] sm:$0xff]
    %v1010 = vld [vmem:[%s1 + $0x1e58] sm:$0xff]
    %v1011 = vld [vmem:[%s1 + $0x1e60] sm:$0xff]
    %v1012 = vld [vmem:[%s1 + $0x1e68] sm:$0xff]
    %v1013 = vld [vmem:[%s1 + $0x1e70] sm:$0xff]
    %v1014 = vld [vmem:[%s1 + $0x1e78] sm:$0xff]
    %v1015 = vld [vmem:[%s1 + $0x1e80] sm:$0xff]
    %v1016 = vld [vmem:[%s1 + $0x1e88] sm:$0xff]
    %v1017 = vld [vmem:[%s1 + $0x1e90] sm:$0xff]
    %v1018 = vld [vmem:[%s1 + $0x1e98] sm:$0xff]
    %v1019 = vld [vmem:[%s1 + $0x1ea0] sm:$0xff]
    %v1020 = vld [vmem:[%s1 + $0x1ea8] sm:$0xff]
    %v1021 = vld [vmem:[%s1 + $0x1eb0] sm:$0xff]
    %v1022 = vld [vmem:[%s1 + $0x1eb8] sm:$0xff]
    %v1023 = vld [vmem:[%s1 + $0x1ec0] sm:$0xff]
    %v1024 = vld [vmem:[%s1 + $0x1ec8] sm:$0xff]
    %v1025 = vld [vmem:[%s1 + $0x1ed0] sm:$0xff]
    %v1026 = vld [vmem:[%s1 + $0x1ed8] sm:$0xff]
    %v1027 = vld [vmem:[%s1 + $0x1ee0] sm:$0xff]
    %v1028 = vld [vmem:[%s1 + $0x1ee8] sm:$0xff]
    %v1029 = vld [vmem:[%s1 + $0x1ef0] sm:$0xff]
    %v1030 = vld [vmem:[%s1 + $0x1ef8] sm:$0xff]
    %v1031 = vld [vmem:[%s1 + $0x1f00] sm:$0xff]
    %v1032 = vld [vmem:[%s1 + $0x1f08] sm:$0xff]
    %v1033 = vld [vmem:[%s1 + $0x1f10] sm:$0xff]
    %v1034 = vld [vmem:[%s1 + $0x1f18] sm:$0xff]
    %v1035 = vld [vmem:[%s1 + $0x1f20] sm:$0xff]
    %v1036 = vld [vmem:[%s1 + $0x1f28] sm:$0xff]
    %v1037 = vld [vmem:[%s1 + $0x1f30] sm:$0xff]
    %v1038 = vld [vmem:[%s1 + $0x1f38] sm:$0xff]
    %v1039 = vld [vmem:[%s1 + $0x1f40] sm:$0xff]
    %v1040 = vld [vmem:[%s1 + $0x1f48] sm:$0xff]
    %v1041 = vld [vmem:[%s1 + $0x1f50] sm:$0xff]
    %v1042 = vld [vmem:[%s1 + $0x1f58] sm:$0xff]
    %v1043 = vld [vmem:[%s1 + $0x1f60] sm:$0xff]
    %v1044 = vld [vmem:[%s1 + $0x1f68] sm:$0xff]
    %v1045 = vld [vmem:[%s1 + $0x1f70] sm:$0xff]
    %v1046 = vld [vmem:[%s1 + $0x1f78] sm:$0xff]
    %v1047 = vld [vmem:[%s1 + $0x1f80] sm:$0xff]
    %v1048 = vld [vmem:[%s1 + $0x1f88] sm:$0xff]
    %v1049 = vld [vmem:[%s1 + $0x1f90] sm:$0xff]
    %v1050 = vld [vmem:[%s1 + $0x1f98] sm:$0xff]
    %v1051 = vld [vmem:[%s1 + $0x1fa0] sm:$0xff]
    %v1052 = vld [vmem:[%s1 + $0x1fa8] sm:$0xff]
    %v1053 = vld [vmem:[%s1 + $0x1fb0] sm:$0xff]
    %v1054 = vld [vmem:[%s1 + $0x1fb8] sm:$0xff]
    %v1055 = vld [vmem:[%s1 + $0x1fc0] sm:$0xff]
    %v1056 = vld [vmem:[%s1 + $0x1fc8] sm:$0xff]
    %v1057 = vld [vmem:[%s1 + $0x1fd0] sm:$0xff]
    %v1058 = vld [vmem:[%s1 + $0x1fd8] sm:$0xff]
    %v1059 = vld [vmem:[%s1 + $0x1fe0] sm:$0xff]
    %v1060 = vld [vmem:[%s1 + $0x1fe8] sm:$0xff]
    %v1061 = vld [vmem:[%s1 + $0x1ff0] sm:$0xff]
    %v1062 = vld [vmem:[%s1 + $0x1ff8] sm:$0xff]
    %v1063 = vld [vmem:[%s1 + $0x2000] sm:$0xff]
    %v1064 = vld [vmem:[%s1 + $0x2008] sm:$0xff]
    %v1065 = vld [vmem:[%s1 + $0x2010] sm:$0xff]
    %v1066 = vld [vmem:[%s1 + $0x2018] sm:$0xff]
    %v1067 = vld [vmem:[%s1 + $0x2020] sm:$0xff]
    %v1068 = vld [vmem:[%s1 + $0x2028] sm:$0xff]
    %v1069 = vld [vmem:[%s1 + $0x2030] sm:$0xff]
    %v1070 = vld [vmem:[%s1 + $0x2038] sm:$0xff]
    %v1071 = vld [vmem:[%s1 + $0x2040] sm:$0xff]
    %v1072 = vld [vmem:[%s1 + $0x2048] sm:$0xff]
    %v1073 = vld [vmem:[%s1 + $0x2050] sm:$0xff]
    %v1074 = vld [vmem:[%s1 + $0x2058] sm:$0xff]
    %v1075 = vld [vmem:[%s1 + $0x2060] sm:$0xff]
    %v1076 = vld [vmem:[%s1 + $0x2068] sm:$0xff]
    %v1077 = vld [vmem:[%s1 + $0x2070] sm:$0xff]
    %v1078 = vld [vmem:[%s1 + $0x2078] sm:$0xff]
    %v1079 = vld [vmem:[%s1 + $0x2080] sm:$0xff]
    %v1080 = vld [vmem:[%s1 + $0x2088] sm:$0xff]
    %v1081 = vld [vmem:[%s1 + $0x2090] sm:$0xff]
    %v1082 = vld [vmem:[%s1 + $0x2098] sm:$0xff]
    %v1083 = vld [vmem:[%s1 + $0x20a0] sm:$0xff]
    %v1084 = vld [vmem:[%s1 + $0x20a8] sm:$0xff]
    %v1085 = vld [vmem:[%s1 + $0x20b0] sm:$0xff]
    %v1086 = vld [vmem:[%s1 + $0x20b8] sm:$0xff]
    %v1087 = vld [vmem:[%s1 + $0x20c0] sm:$0xff]
    %v1088 = vld [vmem:[%s1 + $0x20c8] sm:$0xff]
    %v1089 = vld [vmem:[%s1 + $0x20d0] sm:$0xff]
    %v1090 = vld [vmem:[%s1 + $0x20d8] sm:$0xff]
    %v1091 = vld [vmem:[%s1 + $0x20e0] sm:$0xff]
    %v1092 = vld [vmem:[%s1 + $0x20e8] sm:$0xff]
    %v1093 = vld [vmem:[%s1 + $0x20f0] sm:$0xff]
    %v1094 = vld [vmem:[%s1 + $0x20f8] sm:$0xff]
    %v1095 = vld [vmem:[%s1 + $0x2100] sm:$0xff]
    %v1096 = vld [vmem:[%s1 + $0x2108] sm:$0xff]
    %v1097 = vld [vmem:[%s1 + $0x2110] sm:$0xff]
    %v1098 = vld [vmem:[%s1 + $0x2118] sm:$0xff]
    %v1099 = vld [vmem:[%s1 + $0x2120] sm:$0xff]
    %v1100 = vld [vmem:[%s1 + $0x2128] sm:$0xff]
    %v1101 = vld [vmem:[%s1 + $0x2130] sm:$0xff]
    %v1102 = vld [vmem:[%s1 + $0x2138] sm:$0xff]
    %v1103 = vld [vmem:[%s1 + $0x2140] sm:$0xff]
    %v1104 = vld [vmem:[%s1 + $0x2148] sm:$0xff]
    %v1105 = vld [vmem:[%s1 + $0x2150] sm:$0xff]
    %v1106 = vld [vmem:[%s1 + $0x2158] sm:$0xff]
    %v1107 = vld [vmem:[%s1 + $0x2160] sm:$0xff]
    %v1108 = vld [vmem:[%s1 + $0x2168] sm:$0xff]
    %v1109 = vld [vmem:[%s1 + $0x2170] sm:$0xff]
    %v1110 = vld [vmem:[%s1 + $0x2178] sm:$0xff]
    %v1111 = vld [vmem:[%s1 + $0x2180] sm:$0xff]
    %v1112 = vld [vmem:[%s1 + $0x2188] sm:$0xff]
    %v1113 = vld [vmem:[%s1 + $0x2190] sm:$0xff]
    %v1114 = vld [vmem:[%s1 + $0x2198] sm:$0xff]
    %v1115 = vld [vmem:[%s1 + $0x21a0] sm:$0xff]
    %v1116 = vld [vmem:[%s1 + $0x21a8] sm:$0xff]
    %v1117 = vld [vmem:[%s1 + $0x21b0] sm:$0xff]
    %v1118 = vld [vmem:[%s1 + $0x21b8] sm:$0xff]
    %v1119 = vld [vmem:[%s1 + $0x21c0] sm:$0xff]
    %v1120 = vld [vmem:[%s1 + $0x21c8] sm:$0xff]
    %v1121 = vld [vmem:[%s1 + $0x21d0] sm:$0xff]
    %v1122 = vld [vmem:[%s1 + $0x21d8] sm:$0xff]
    %v1123 = vld [vmem:[%s1 + $0x21e0] sm:$0xff]
    %v1124 = vld [vmem:[%s1 + $0x21e8] sm:$0xff]
    %v1125 = vld [vmem:[%s1 + $0x21f0] sm:$0xff]
    %v1126 = vld [vmem:[%s1 + $0x21f8] sm:$0xff]
    %v1127 = vld [vmem:[%s1 + $0x2200] sm:$0xff]
    %v1128 = vld [vmem:[%s1 + $0x2208] sm:$0xff]
    %v1129 = vld [vmem:[%s1 + $0x2210] sm:$0xff]
    %v1130 = vld [vmem:[%s1 + $0x2218] sm:$0xff]
    %v1131 = vld [vmem:[%s1 + $0x2220] sm:$0xff]
    %v1132 = vld [vmem:[%s1 + $0x2228] sm:$0xff]
    %v1133 = vld [vmem:[%s1 + $0x2230] sm:$0xff]
    %v1134 = vld [vmem:[%s1 + $0x2238] sm:$0xff]
    %v1135 = vld [vmem:[%s1 + $0x2240] sm:$0xff]
    %v1136 = vld [vmem:[%s1 + $0x2248] sm:$0xff]
    %v1137 = vld [vmem:[%s1 + $0x2250] sm:$0xff]
    %v1138 = vld [vmem:[%s1 + $0x2258] sm:$0xff]
    %v1139 = vld [vmem:[%s1 + $0x2260] sm:$0xff]
    %v1140 = vld [vmem:[%s1 + $0x2268] sm:$0xff]
    %v1141 = vld [vmem:[%s1 + $0x2270] sm:$0xff]
    %v1142 = vld [vmem:[%s1 + $0x2278] sm:$0xff]
    %v1143 = vld [vmem:[%s1 + $0x2280] sm:$0xff]
    %v1144 = vld [vmem:[%s1 + $0x2288] sm:$0xff]
    %v1145 = vld [vmem:[%s1 + $0x2290] sm:$0xff]
    %v1146 = vld [vmem:[%s1 + $0x2298] sm:$0xff]
    %v1147 = vld [vmem:[%s1 + $0x22a0] sm:$0xff]
    %v1148 = vld [vmem:[%s1 + $0x22a8] sm:$0xff]
    %v1149 = vld [vmem:[%s1 + $0x22b0] sm:$0xff]
    %v1150 = vld [vmem:[%s1 + $0x22b8] sm:$0xff]
    %v1151 = vld [vmem:[%s1 + $0x22c0] sm:$0xff]
    %v1152 = vld [vmem:[%s1 + $0x22c8] sm:$0xff]
    %v1153 = vld [vmem:[%s1 + $0x22d0] sm:$0xff]
    %v1154 = vld [vmem:[%s1 + $0x22d8] sm:$0xff]
    %v1155 = vld [vmem:[%s1 + $0x22e0] sm:$0xff]
    %v1156 = vld [vmem:[%s1 + $0x22e8] sm:$0xff]
    %v1157 = vld [vmem:[%s1 + $0x22f0] sm:$0xff]
    %v1158 = vld [vmem:[%s1 + $0x22f8] sm:$0xff]
    %v1159 = vld [vmem:[%s1 + $0x2300] sm:$0xff]
    %v1160 = vld [vmem:[%s1 + $0x2308] sm:$0xff]
    %v1161 = vld [vmem:[%s1 + $0x2310] sm:$0xff]
    %v1162 = vld [vmem:[%s1 + $0x2318] sm:$0xff]
    %v1163 = vld [vmem:[%s1 + $0x2320] sm:$0xff]
    %v1164 = vld [vmem:[%s1 + $0x2328] sm:$0xff]
    %v1165 = vld [vmem:[%s1 + $0x2330] sm:$0xff]
    %v1166 = vld [vmem:[%s1 + $0x2338] sm:$0xff]
    %v1167 = vld [vmem:[%s1 + $0x2340] sm:$0xff]
    %v1168 = vld [vmem:[%s1 + $0x2348] sm:$0xff]
    %v1169 = vld [vmem:[%s1 + $0x2350] sm:$0xff]
    %v1170 = vld [vmem:[%s1 + $0x2358] sm:$0xff]
    %v1171 = vld [vmem:[%s1 + $0x2360] sm:$0xff]
    %v1172 = vld [vmem:[%s1 + $0x2368] sm:$0xff]
    %v1173 = vld [vmem:[%s1 + $0x2370] sm:$0xff]
    %v1174 = vld [vmem:[%s1 + $0x2378] sm:$0xff]
    %v1175 = vld [vmem:[%s1 + $0x2380] sm:$0xff]
    %v1176 = vld [vmem:[%s1 + $0x2388] sm:$0xff]
    %v1177 = vld [vmem:[%s1 + $0x2390] sm:$0xff]
    %v1178 = vld [vmem:[%s1 + $0x2398] sm:$0xff]
    %v1179 = vld [vmem:[%s1 + $0x23a0] sm:$0xff]
    %v1180 = vld [vmem:[%s1 + $0x23a8] sm:$0xff]
    %v1181 = vld [vmem:[%s1 + $0x23b0] sm:$0xff]
    %v1182 = vld [vmem:[%s1 + $0x23b8] sm:$0xff]
    %v1183 = vld [vmem:[%s1 + $0x23c0] sm:$0xff]
    %v1184 = vld [vmem:[%s1 + $0x23c8] sm:$0xff]
    %v1185 = vld [vmem:[%s1 + $0x23d0] sm:$0xff]
    %v1186 = vld [vmem:[%s1 + $0x23d8] sm:$0xff]
    %v1187 = vld [vmem:[%s1 + $0x23e0] sm:$0xff]
    %v1188 = vld [vmem:[%s1 + $0x23e8] sm:$0xff]
    %v1189 = vld [vmem:[%s1 + $0x23f0] sm:$0xff]
    %v1190 = vld [vmem:[%s1 + $0x23f8] sm:$0xff]
    %v1191 = vld [vmem:[%s1 + $0x2400] sm:$0xff]
    %v1192 = vld [vmem:[%s1 + $0x2408] sm:$0xff]
    %v1193 = vld [vmem:[%s1 + $0x2410] sm:$0xff]
    %v1194 = vld [vmem:[%s1 + $0x2418] sm:$0xff]
    %v1195 = vld [vmem:[%s1 + $0x2420] sm:$0xff]
    %v1196 = vld [vmem:[%s1 + $0x2428] sm:$0xff]
    %v1197 = vld [vmem:[%s1 + $0x2430] sm:$0xff]
    %v1198 = vld [vmem:[%s1 + $0x2438] sm:$0xff]
    %v1199 = vld [vmem:[%s1 + $0x2440] sm:$0xff]
    %v1200 = vld [vmem:[%s1 + $0x2448] sm:$0xff]
    %v1201 = vld [vmem:[%s1 + $0x2450] sm:$0xff]
    %v1202 = vld [vmem:[%s1 + $0x2458] sm:$0xff]
    %v1203 = vld [vmem:[%s1 + $0x2460] sm:$0xff]
    %v1204 = vld [vmem:[%s1 + $0x2468] sm:$0xff]
    %v1205 = vld [vmem:[%s1 + $0x2470] sm:$0xff]
    %v1206 = vld [vmem:[%s1 + $0x2478] sm:$0xff]
    %v1207 = vld [vmem:[%s1 + $0x2480] sm:$0xff]
    %v1208 = vld [vmem:[%s1 + $0x2488] sm:$0xff]
    %v1209 = vld [vmem:[%s1 + $0x2490] sm:$0xff]
    %v1210 = vld [vmem:[%s1 + $0x2498] sm:$0xff]
    %v1211 = vld [vmem:[%s1 + $0x24a0] sm:$0xff]
    %v1212 = vld [vmem:[%s1 + $0x24a8] sm:$0xff]
    %v1213 = vld [vmem:[%s1 + $0x24b0] sm:$0xff]
    %v1214 = vld [vmem:[%s1 + $0x24b8] sm:$0xff]
    %v1215 = vld [vmem:[%s1 + $0x24c0] sm:$0xff]
    %v1216 = vld [vmem:[%s1 + $0x24c8] sm:$0xff]
    %v1217 = vld [vmem:[%s1 + $0x24d0] sm:$0xff]
    %v1218 = vld [vmem:[%s1 + $0x24d8] sm:$0xff]
    %v1219 = vld [vmem:[%s1 + $0x24e0] sm:$0xff]
    %v1220 = vld [vmem:[%s1 + $0x24e8] sm:$0xff]
    %v1221 = vld [vmem:[%s1 + $0x24f0] sm:$0xff]
    %v1222 = vld [vmem:[%s1 + $0x24f8] sm:$0xff]
    %v1223 = vld [vmem:[%s1 + $0x2500] sm:$0xff]
    %v1224 = vld [vmem:[%s1 + $0x2508] sm:$0xff]
    %v1225 = vld [vmem:[%s1 + $0x2510] sm:$0xff]
    %v1226 = vld [vmem:[%s1 + $0x2518] sm:$0xff]
    %v1227 = vld [vmem:[%s1 + $0x2520] sm:$0xff]
    %v1228 = vld [vmem:[%s1 + $0x2528] sm:$0xff]
    %v1229 = vld [vmem:[%s1 + $0x2530] sm:$0xff]
    %v1230 = vld [vmem:[%s1 + $0x2538] sm:$0xff]
    %v1231 = vld [vmem:[%s1 + $0x2540] sm:$0xff]
    %v1232 = vld [vmem:[%s1 + $0x2548] sm:$0xff]
    %v1233 = vld [vmem:[%s1 + $0x2550] sm:$0xff]
    %v1234 = vld [vmem:[%s1 + $0x2558] sm:$0xff]
    %v1235 = vld [vmem:[%s1 + $0x2560] sm:$0xff]
    %v1236 = vld [vmem:[%s1 + $0x2568] sm:$0xff]
    %v1237 = vld [vmem:[%s1 + $0x2570] sm:$0xff]
    %v1238 = vld [vmem:[%s1 + $0x2578] sm:$0xff]
    %v1239 = vld [vmem:[%s1 + $0x2580] sm:$0xff]
    %v1240 = vld [vmem:[%s1 + $0x2588] sm:$0xff]
    %v1241 = vld [vmem:[%s1 + $0x2590] sm:$0xff]
    %v1242 = vld [vmem:[%s1 + $0x2598] sm:$0xff]
    %v1243 = vld [vmem:[%s1 + $0x25a0] sm:$0xff]
    %v1244 = vld [vmem:[%s1 + $0x25a8] sm:$0xff]
    %v1245 = vld [vmem:[%s1 + $0x25b0] sm:$0xff]
    %v1246 = vld [vmem:[%s1 + $0x25b8] sm:$0xff]
    %v1247 = vld [vmem:[%s1 + $0x25c0] sm:$0xff]
    %v1248 = vld [vmem:[%s1 + $0x25c8] sm:$0xff]
    %v1249 = vld [vmem:[%s1 + $0x25d0] sm:$0xff]
    %v1250 = vld [vmem:[%s1 + $0x25d8] sm:$0xff]
    %v1251 = vld [vmem:[%s1 + $0x25e0] sm:$0xff]
    %v1252 = vld [vmem:[%s1 + $0x25e8] sm:$0xff]
    %v1253 = vld [vmem:[%s1 + $0x25f0] sm:$0xff]
    %v1254 = vld [vmem:[%s1 + $0x25f8] sm:$0xff]
    %v1255 = vld [vmem:[%s1 + $0x2600] sm:$0xff]
    %v1256 = vld [vmem:[%s1 + $0x2608] sm:$0xff]
    %v1257 = vld [vmem:[%s1 + $0x2610] sm:$0xff]
    %v1258 = vld [vmem:[%s1 + $0x2618] sm:$0xff]
    %v1259 = vld [vmem:[%s1 + $0x2620] sm:$0xff]
    %v1260 = vld [vmem:[%s1 + $0x2628] sm:$0xff]
    %v1261 = vld [vmem:[%s1 + $0x2630] sm:$0xff]
    %v1262 = vld [vmem:[%s1 + $0x2638] sm:$0xff]
    %v1263 = vld [vmem:[%s1 + $0x2640] sm:$0xff]
    %v1264 = vld [vmem:[%s1 + $0x2648] sm:$0xff]
    %v1265 = vld [vmem:[%s1 + $0x2650] sm:$0xff]
    %v1266 = vld [vmem:[%s1 + $0x2658] sm:$0xff]
    %v1267 = vld [vmem:[%s1 + $0x2660] sm:$0xff]
    %v1268 = vld [vmem:[%s1 + $0x2668] sm:$0xff]
    %v1269 = vld [vmem:[%s1 + $0x2670] sm:$0xff]
    %v1270 = vld [vmem:[%s1 + $0x2678] sm:$0xff]
    %v1271 = vld [vmem:[%s1 + $0x2680] sm:$0xff]
    %v1272 = vld [vmem:[%s1 + $0x2688] sm:$0xff]
    %v1273 = vld [vmem:[%s1 + $0x2690] sm:$0xff]
    %v1274 = vld [vmem:[%s1 + $0x2698] sm:$0xff]
    %v1275 = vld [vmem:[%s1 + $0x26a0] sm:$0xff]
    %v1276 = vld [vmem:[%s1 + $0x26a8] sm:$0xff]
    %v1277 = vld [vmem:[%s1 + $0x26b0] sm:$0xff]
    %v1278 = vld [vmem:[%s1 + $0x26b8] sm:$0xff]
    %v1279 = vld [vmem:[%s1 + $0x26c0] sm:$0xff]
    %v1280 = vld [vmem:[%s1 + $0x26c8] sm:$0xff]
    %v1281 = vld [vmem:[%s1 + $0x26d0] sm:$0xff]
    %v1282 = vld [vmem:[%s1 + $0x26d8] sm:$0xff]
    %v1283 = vld [vmem:[%s1 + $0x26e0] sm:$0xff]
    %v1284 = vld [vmem:[%s1 + $0x26e8] sm:$0xff]
    %v1285 = vld [vmem:[%s1 + $0x26f0] sm:$0xff]
    %v1286 = vld [vmem:[%s1 + $0x26f8] sm:$0xff]
    %v1287 = vld [vmem:[%s1 + $0x2700] sm:$0xff]
    %v1288 = vld [vmem:[%s1 + $0x2708] sm:$0xff]
    %v1289 = vld [vmem:[%s1 + $0x2710] sm:$0xff]
    %v1290 = vld [vmem:[%s1 + $0x2718] sm:$0xff]
    %v1291 = vld [vmem:[%s1 + $0x2720] sm:$0xff]
    %v1292 = vld [vmem:[%s1 + $0x2728] sm:$0xff]
    %v1293 = vld [vmem:[%s1 + $0x2730] sm:$0xff]
    %v1294 = vld [vmem:[%s1 + $0x2738] sm:$0xff]
    %v1295 = vld [vmem:[%s1 + $0x2740] sm:$0xff]
    %v1296 = vld [vmem:[%s1 + $0x2748] sm:$0xff]
    %v1297 = vld [vmem:[%s1 + $0x2750] sm:$0xff]
    %v1298 = vld [vmem:[%s1 + $0x2758] sm:$0xff]
    %v1299 = vld [vmem:[%s1 + $0x2760] sm:$0xff]
    %v1300 = vld [vmem:[%s1 + $0x2768] sm:$0xff]
    %v1301 = vld [vmem:[%s1 + $0x2770] sm:$0xff]
    %v1302 = vld [vmem:[%s1 + $0x2778] sm:$0xff]
    %v1303 = vld [vmem:[%s1 + $0x2780] sm:$0xff]
    %v1304 = vld [vmem:[%s1 + $0x2788] sm:$0xff]
    %v1305 = vld [vmem:[%s1 + $0x2790] sm:$0xff]
    %v1306 = vld [vmem:[%s1 + $0x2798] sm:$0xff]
    %v1307 = vld [vmem:[%s1 + $0x27a0] sm:$0xff]
    %v1308 = vld [vmem:[%s1 + $0x27a8] sm:$0xff]
    %v1309 = vld [vmem:[%s1 + $0x27b0] sm:$0xff]
    %v1310 = vld [vmem:[%s1 + $0x27b8] sm:$0xff]
    %v1311 = vld [vmem:[%s1 + $0x27c0] sm:$0xff]
    %v1312 = vld [vmem:[%s1 + $0x27c8] sm:$0xff]
    %v1313 = vld [vmem:[%s1 + $0x27d0] sm:$0xff]
    %v1314 = vld [vmem:[%s1 + $0x27d8] sm:$0xff]
    %v1315 = vld [vmem:[%s1 + $0x27e0] sm:$0xff]
    %v1316 = vld [vmem:[%s1 + $0x27e8] sm:$0xff]
    %v1317 = vld [vmem:[%s1 + $0x27f0] sm:$0xff]
    %v1318 = vld [vmem:[%s1 + $0x27f8] sm:$0xff]
    %v1319 = vld [vmem:[%s1 + $0x2800] sm:$0xff]
    %v1320 = vld [vmem:[%s1 + $0x2808] sm:$0xff]
    %v1321 = vld [vmem:[%s1 + $0x2810] sm:$0xff]
    %v1322 = vld [vmem:[%s1 + $0x2818] sm:$0xff]
    %v1323 = vld [vmem:[%s1 + $0x2820] sm:$0xff]
    %v1324 = vld [vmem:[%s1 + $0x2828] sm:$0xff]
    %v1325 = vld [vmem:[%s1 + $0x2830] sm:$0xff]
    %v1326 = vld [vmem:[%s1 + $0x2838] sm:$0xff]
    %v1327 = vld [vmem:[%s1 + $0x2840] sm:$0xff]
    %v1328 = vld [vmem:[%s1 + $0x2848] sm:$0xff]
    %v1329 = vld [vmem:[%s1 + $0x2850] sm:$0xff]
    %v1330 = vld [vmem:[%s1 + $0x2858] sm:$0xff]
    %v1331 = vld [vmem:[%s1 + $0x2860] sm:$0xff]
    %v1332 = vld [vmem:[%s1 + $0x2868] sm:$0xff]
    %v1333 = vld [vmem:[%s1 + $0x2870] sm:$0xff]
    %v1334 = vld [vmem:[%s1 + $0x2878] sm:$0xff]
    %v1335 = vld [vmem:[%s1 + $0x2880] sm:$0xff]
    %v1336 = vld [vmem:[%s1 + $0x2888] sm:$0xff]
    %v1337 = vld [vmem:[%s1 + $0x2890] sm:$0xff]
    %v1338 = vld [vmem:[%s1 + $0x2898] sm:$0xff]
    %v1339 = vld [vmem:[%s1 + $0x28a0] sm:$0xff]
    %v1340 = vld [vmem:[%s1 + $0x28a8] sm:$0xff]
    %v1341 = vld [vmem:[%s1 + $0x28b0] sm:$0xff]
    %v1342 = vld [vmem:[%s1 + $0x28b8] sm:$0xff]
    %v1343 = vld [vmem:[%s1 + $0x28c0] sm:$0xff]
    %v1344 = vld [vmem:[%s1 + $0x28c8] sm:$0xff]
    %v1345 = vld [vmem:[%s1 + $0x28d0] sm:$0xff]
    %v1346 = vld [vmem:[%s1 + $0x28d8] sm:$0xff]
    %v1347 = vld [vmem:[%s1 + $0x28e0] sm:$0xff]
    %v1348 = vld [vmem:[%s1 + $0x28e8] sm:$0xff]
    %v1349 = vld [vmem:[%s1 + $0x28f0] sm:$0xff]
    %v1350 = vld [vmem:[%s1 + $0x28f8] sm:$0xff]
    %v1351 = vld [vmem:[%s1 + $0x2900] sm:$0xff]
    %v1352 = vld [vmem:[%s1 + $0x2908] sm:$0xff]
    %v1353 = vld [vmem:[%s1 + $0x2910] sm:$0xff]
    %v1354 = vld [vmem:[%s1 + $0x2918] sm:$0xff]
    %v1355 = vld [vmem:[%s1 + $0x2920] sm:$0xff]
    %v1356 = vld [vmem:[%s1 + $0x2928] sm:$0xff]
    %v1357 = vld [vmem:[%s1 + $0x2930] sm:$0xff]
    %v1358 = vld [vmem:[%s1 + $0x2938] sm:$0xff]
    %v1359 = vld [vmem:[%s1 + $0x2940] sm:$0xff]
    %v1360 = vld [vmem:[%s1 + $0x2948] sm:$0xff]
    %v1361 = vld [vmem:[%s1 + $0x2950] sm:$0xff]
    %v1362 = vld [vmem:[%s1 + $0x2958] sm:$0xff]
    %v1363 = vld [vmem:[%s1 + $0x2960] sm:$0xff]
    %v1364 = vld [vmem:[%s1 + $0x2968] sm:$0xff]
    %v1365 = vld [vmem:[%s1 + $0x2970] sm:$0xff]
    %v1366 = vld [vmem:[%s1 + $0x2978] sm:$0xff]
    %v1367 = vld [vmem:[%s1 + $0x2980] sm:$0xff]
    %v1368 = vld [vmem:[%s1 + $0x2988] sm:$0xff]
    %v1369 = vld [vmem:[%s1 + $0x2990] sm:$0xff]
    %v1370 = vld [vmem:[%s1 + $0x2998] sm:$0xff]
    %v1371 = vld [vmem:[%s1 + $0x29a0] sm:$0xff]
    %v1372 = vld [vmem:[%s1 + $0x29a8] sm:$0xff]
    %v1373 = vld [vmem:[%s1 + $0x29b0] sm:$0xff]
    %v1374 = vld [vmem:[%s1 + $0x29b8] sm:$0xff]
    %v1375 = vld [vmem:[%s1 + $0x29c0] sm:$0xff]
    %v1376 = vld [vmem:[%s1 + $0x29c8] sm:$0xff]
    %v1377 = vld [vmem:[%s1 + $0x29d0] sm:$0xff]
    %v1378 = vld [vmem:[%s1 + $0x29d8] sm:$0xff]
    %v1379 = vld [vmem:[%s1 + $0x29e0] sm:$0xff]
    %v1380 = vld [vmem:[%s1 + $0x29e8] sm:$0xff]
    %v1381 = vld [vmem:[%s1 + $0x29f0] sm:$0xff]
    %v1382 = vld [vmem:[%s1 + $0x29f8] sm:$0xff]
    %v1383 = vld [vmem:[%s1 + $0x2a00] sm:$0xff]
    %v1384 = vld [vmem:[%s1 + $0x2a08] sm:$0xff]
    %v1385 = vld [vmem:[%s1 + $0x2a10] sm:$0xff]
    %v1386 = vld [vmem:[%s1 + $0x2a18] sm:$0xff]
    %v1387 = vld [vmem:[%s1 + $0x2a20] sm:$0xff]
    %v1388 = vld [vmem:[%s1 + $0x2a28] sm:$0xff]
    %v1389 = vld [vmem:[%s1 + $0x2a30] sm:$0xff]
    %v1390 = vld [vmem:[%s1 + $0x2a38] sm:$0xff]
    %v1391 = vld [vmem:[%s1 + $0x2a40] sm:$0xff]
    %v1392 = vld [vmem:[%s1 + $0x2a48] sm:$0xff]
    %v1393 = vld [vmem:[%s1 + $0x2a50] sm:$0xff]
    %v1394 = vld [vmem:[%s1 + $0x2a58] sm:$0xff]
    %v1395 = vld [vmem:[%s1 + $0x2a60] sm:$0xff]
    %v1396 = vld [vmem:[%s1 + $0x2a68] sm:$0xff]
    %v1397 = vld [vmem:[%s1 + $0x2a70] sm:$0xff]
    %v1398 = vld [vmem:[%s1 + $0x2a78] sm:$0xff]
    %v1399 = vld [vmem:[%s1 + $0x2a80] sm:$0xff]
    %v1400 = vld [vmem:[%s1 + $0x2a88] sm:$0xff]
    %v1401 = vld [vmem:[%s1 + $0x2a90] sm:$0xff]
    %v1402 = vld [vmem:[%s1 + $0x2a98] sm:$0xff]
    %v1403 = vld [vmem:[%s1 + $0x2aa0] sm:$0xff]
    %v1404 = vld [vmem:[%s1 + $0x2aa8] sm:$0xff]
    %v1405 = vld [vmem:[%s1 + $0x2ab0] sm:$0xff]
    %v1406 = vld [vmem:[%s1 + $0x2ab8] sm:$0xff]
    %v1407 = vld [vmem:[%s1 + $0x2ac0] sm:$0xff]
    %v1408 = vld [vmem:[%s1 + $0x2ac8] sm:$0xff]
    %v1409 = vld [vmem:[%s1 + $0x2ad0] sm:$0xff]
    %v1410 = vld [vmem:[%s1 + $0x2ad8] sm:$0xff]
    %v1411 = vld [vmem:[%s1 + $0x2ae0] sm:$0xff]
    %v1412 = vld [vmem:[%s1 + $0x2ae8] sm:$0xff]
    %v1413 = vld [vmem:[%s1 + $0x2af0] sm:$0xff]
    %v1414 = vld [vmem:[%s1 + $0x2af8] sm:$0xff]
    %v1415 = vld [vmem:[%s1 + $0x2b00] sm:$0xff]
    %v1416 = vld [vmem:[%s1 + $0x2b08] sm:$0xff]
    %v1417 = vld [vmem:[%s1 + $0x2b10] sm:$0xff]
    %v1418 = vld [vmem:[%s1 + $0x2b18] sm:$0xff]
    %v1419 = vld [vmem:[%s1 + $0x2b20] sm:$0xff]
    %v1420 = vld [vmem:[%s1 + $0x2b28] sm:$0xff]
    %v1421 = vld [vmem:[%s1 + $0x2b30] sm:$0xff]
    %v1422 = vld [vmem:[%s1 + $0x2b38] sm:$0xff]
    %v1423 = vld [vmem:[%s1 + $0x2b40] sm:$0xff]
    %v1424 = vld [vmem:[%s1 + $0x2b48] sm:$0xff]
    %v1425 = vld [vmem:[%s1 + $0x2b50] sm:$0xff]
    %v1426 = vld [vmem:[%s1 + $0x2b58] sm:$0xff]
    %v1427 = vld [vmem:[%s1 + $0x2b60] sm:$0xff]
    %v1428 = vld [vmem:[%s1 + $0x2b68] sm:$0xff]
    %v1429 = vld [vmem:[%s1 + $0x2b70] sm:$0xff]
    %v1430 = vld [vmem:[%s1 + $0x2b78] sm:$0xff]
    %v1431 = vld [vmem:[%s1 + $0x2b80] sm:$0xff]
    %v1432 = vld [vmem:[%s1 + $0x2b88] sm:$0xff]
    %v1433 = vld [vmem:[%s1 + $0x2b90] sm:$0xff]
    %v1434 = vld [vmem:[%s1 + $0x2b98] sm:$0xff]
    %v1435 = vld [vmem:[%s1 + $0x2ba0] sm:$0xff]
    %v1436 = vld [vmem:[%s1 + $0x2ba8] sm:$0xff]
    %v1437 = vld [vmem:[%s1 + $0x2bb0] sm:$0xff]
    %v1438 = vld [vmem:[%s1 + $0x2bb8] sm:$0xff]
    %v1439 = vld [vmem:[%s1 + $0x2bc0] sm:$0xff]
    %v1440 = vld [vmem:[%s1 + $0x2bc8] sm:$0xff]
    %v1441 = vld [vmem:[%s1 + $0x2bd0] sm:$0xff]
    %v1442 = vld [vmem:[%s1 + $0x2bd8] sm:$0xff]
    %v1443 = vld [vmem:[%s1 + $0x2be0] sm:$0xff]
    %v1444 = vld [vmem:[%s1 + $0x2be8] sm:$0xff]
    %v1445 = vld [vmem:[%s1 + $0x2bf0] sm:$0xff]
    %v1446 = vld [vmem:[%s1 + $0x2bf8] sm:$0xff]
    %v1447 = vld [vmem:[%s1 + $0x2c00] sm:$0xff]
    %v1448 = vld [vmem:[%s1 + $0x2c08] sm:$0xff]
    %v1449 = vld [vmem:[%s1 + $0x2c10] sm:$0xff]
    %v1450 = vld [vmem:[%s1 + $0x2c18] sm:$0xff]
    %v1451 = vld [vmem:[%s1 + $0x2c20] sm:$0xff]
    %v1452 = vld [vmem:[%s1 + $0x2c28] sm:$0xff]
    %v1453 = vld [vmem:[%s1 + $0x2c30] sm:$0xff]
    %v1454 = vld [vmem:[%s1 + $0x2c38] sm:$0xff]
    %v1455 = vld [vmem:[%s1 + $0x2c40] sm:$0xff]
    %v1456 = vld [vmem:[%s1 + $0x2c48] sm:$0xff]
    %v1457 = vld [vmem:[%s1 + $0x2c50] sm:$0xff]
    %v1458 = vld [vmem:[%s1 + $0x2c58] sm:$0xff]
    %v1459 = vld [vmem:[%s1 + $0x2c60] sm:$0xff]
    %v1460 = vld [vmem:[%s1 + $0x2c68] sm:$0xff]
    %v1461 = vld [vmem:[%s1 + $0x2c70] sm:$0xff]
    %v1462 = vld [vmem:[%s1 + $0x2c78] sm:$0xff]
    %v1463 = vld [vmem:[%s1 + $0x2c80] sm:$0xff]
    %v1464 = vld [vmem:[%s1 + $0x2c88] sm:$0xff]
    %v1465 = vld [vmem:[%s1 + $0x2c90] sm:$0xff]
    %v1466 = vld [vmem:[%s1 + $0x2c98] sm:$0xff]
    %v1467 = vld [vmem:[%s1 + $0x2ca0] sm:$0xff]
    %v1468 = vld [vmem:[%s1 + $0x2ca8] sm:$0xff]
    %v1469 = vld [vmem:[%s1 + $0x2cb0] sm:$0xff]
    %v1470 = vld [vmem:[%s1 + $0x2cb8] sm:$0xff]
    %v1471 = vld [vmem:[%s1 + $0x2cc0] sm:$0xff]
    %v1472 = vld [vmem:[%s1 + $0x2cc8] sm:$0xff]
    %v1473 = vld [vmem:[%s1 + $0x2cd0] sm:$0xff]
    %v1474 = vld [vmem:[%s1 + $0x2cd8] sm:$0xff]
    %v1475 = vld [vmem:[%s1 + $0x2ce0] sm:$0xff]
    %v1476 = vld [vmem:[%s1 + $0x2ce8] sm:$0xff]
    %v1477 = vld [vmem:[%s1 + $0x2cf0] sm:$0xff]
    %v1478 = vld [vmem:[%s1 + $0x2cf8] sm:$0xff]
    %v1479 = vld [vmem:[%s1 + $0x2d00] sm:$0xff]
    %v1480 = vld [vmem:[%s1 + $0x2d08] sm:$0xff]
    %v1481 = vld [vmem:[%s1 + $0x2d10] sm:$0xff]
    %v1482 = vld [vmem:[%s1 + $0x2d18] sm:$0xff]
    %v1483 = vld [vmem:[%s1 + $0x2d20] sm:$0xff]
    %v1484 = vld [vmem:[%s1 + $0x2d28] sm:$0xff]
    %v1485 = vld [vmem:[%s1 + $0x2d30] sm:$0xff]
    %v1486 = vld [vmem:[%s1 + $0x2d38] sm:$0xff]
    %v1487 = vld [vmem:[%s1 + $0x2d40] sm:$0xff]
    %v1488 = vld [vmem:[%s1 + $0x2d48] sm:$0xff]
    %v1489 = vld [vmem:[%s1 + $0x2d50] sm:$0xff]
    %v1490 = vld [vmem:[%s1 + $0x2d58] sm:$0xff]
    %v1491 = vld [vmem:[%s1 + $0x2d60] sm:$0xff]
    %v1492 = vld [vmem:[%s1 + $0x2d68] sm:$0xff]
    %v1493 = vld [vmem:[%s1 + $0x2d70] sm:$0xff]
    %v1494 = vld [vmem:[%s1 + $0x2d78] sm:$0xff]
    %v1495 = vld [vmem:[%s1 + $0x2d80] sm:$0xff]
    %v1496 = vld [vmem:[%s1 + $0x2d88] sm:$0xff]
    %v1497 = vld [vmem:[%s1 + $0x2d90] sm:$0xff]
    %v1498 = vld [vmem:[%s1 + $0x2d98] sm:$0xff]
    %v1499 = vld [vmem:[%s1 + $0x2da0] sm:$0xff]
    %v1500 = vld [vmem:[%s1 + $0x2da8] sm:$0xff]
    %v1501 = vld [vmem:[%s1 + $0x2db0] sm:$0xff]
    %v1502 = vld [vmem:[%s1 + $0x2db8] sm:$0xff]
    %v1503 = vld [vmem:[%s1 + $0x2dc0] sm:$0xff]
    %v1504 = vld [vmem:[%s1 + $0x2dc8] sm:$0xff]
    %v1505 = vld [vmem:[%s1 + $0x2dd0] sm:$0xff]
    %v1506 = vld [vmem:[%s1 + $0x2dd8] sm:$0xff]
    %v1507 = vld [vmem:[%s1 + $0x2de0] sm:$0xff]
    %v1508 = vld [vmem:[%s1 + $0x2de8] sm:$0xff]
    %v1509 = vld [vmem:[%s1 + $0x2df0] sm:$0xff]
    %v1510 = vld [vmem:[%s1 + $0x2df8] sm:$0xff]
    %v1511 = vld [vmem:[%s1 + $0x2e00] sm:$0xff]
    %v1512 = vld [vmem:[%s1 + $0x2e08] sm:$0xff]
    %v1513 = vld [vmem:[%s1 + $0x2e10] sm:$0xff]
    %v1514 = vld [vmem:[%s1 + $0x2e18] sm:$0xff]
    %v1515 = vld [vmem:[%s1 + $0x2e20] sm:$0xff]
    %v1516 = vld [vmem:[%s1 + $0x2e28] sm:$0xff]
    %v1517 = vld [vmem:[%s1 + $0x2e30] sm:$0xff]
    %v1518 = vld [vmem:[%s1 + $0x2e38] sm:$0xff]
    %v1519 = vld [vmem:[%s1 + $0x2e40] sm:$0xff]
    %v1520 = vld [vmem:[%s1 + $0x2e48] sm:$0xff]
    %v1521 = vld [vmem:[%s1 + $0x2e50] sm:$0xff]
    %v1522 = vld [vmem:[%s1 + $0x2e58] sm:$0xff]
    %v1523 = vld [vmem:[%s1 + $0x2e60] sm:$0xff]
    %v1524 = vld [vmem:[%s1 + $0x2e68] sm:$0xff]
    %v1525 = vld [vmem:[%s1 + $0x2e70] sm:$0xff]
    %v1526 = vld [vmem:[%s1 + $0x2e78] sm:$0xff]
    %v1527 = vld [vmem:[%s1 + $0x2e80] sm:$0xff]
    %v1528 = vld [vmem:[%s1 + $0x2e88] sm:$0xff]
    %v1529 = vld [vmem:[%s1 + $0x2e90] sm:$0xff]
    %v1530 = vld [vmem:[%s1 + $0x2e98] sm:$0xff]
    %v1531 = vld [vmem:[%s1 + $0x2ea0] sm:$0xff]
    %v1532 = vld [vmem:[%s1 + $0x2ea8] sm:$0xff]
    %v1533 = vld [vmem:[%s1 + $0x2eb0] sm:$0xff]
    %v1534 = vld [vmem:[%s1 + $0x2eb8] sm:$0xff]
    %v1535 = vld [vmem:[%s1 + $0x2ec0] sm:$0xff]
    %v1536 = vld [vmem:[%s1 + $0x2ec8] sm:$0xff]
    %v1537 = vld [vmem:[%s1 + $0x2ed0] sm:$0xff]
    %v1538 = vld [vmem:[%s1 + $0x2ed8] sm:$0xff]
    %v1539 = vld [vmem:[%s1 + $0x2ee0] sm:$0xff]
    %v1540 = vld [vmem:[%s1 + $0x2ee8] sm:$0xff]
    %v1541 = vld [vmem:[%s1 + $0x2ef0] sm:$0xff]
    %v1542 = vld [vmem:[%s1 + $0x2ef8] sm:$0xff]
    %v1543 = vld [vmem:[%s1 + $0x2f00] sm:$0xff]
    %v1544 = vld [vmem:[%s1 + $0x2f08] sm:$0xff]
    %v1545 = vld [vmem:[%s1 + $0x2f10] sm:$0xff]
    %v1546 = vld [vmem:[%s1 + $0x2f18] sm:$0xff]
    %v1547 = vld [vmem:[%s1 + $0x2f20] sm:$0xff]
    %v1548 = vld [vmem:[%s1 + $0x2f28] sm:$0xff]
    %v1549 = vld [vmem:[%s1 + $0x2f30] sm:$0xff]
    %v1550 = vld [vmem:[%s1 + $0x2f38] sm:$0xff]
    %v1551 = vld [vmem:[%s1 + $0x2f40] sm:$0xff]
    %v1552 = vld [vmem:[%s1 + $0x2f48] sm:$0xff]
    %v1553 = vld [vmem:[%s1 + $0x2f50] sm:$0xff]
    %v1554 = vld [vmem:[%s1 + $0x2f58] sm:$0xff]
    %v1555 = vld [vmem:[%s1 + $0x2f60] sm:$0xff]
    %v1556 = vld [vmem:[%s1 + $0x2f68] sm:$0xff]
    %v1557 = vld [vmem:[%s1 + $0x2f70] sm:$0xff]
    %v1558 = vld [vmem:[%s1 + $0x2f78] sm:$0xff]
    %v1559 = vld [vmem:[%s1 + $0x2f80] sm:$0xff]
    %v1560 = vld [vmem:[%s1 + $0x2f88] sm:$0xff]
    %v1561 = vld [vmem:[%s1 + $0x2f90] sm:$0xff]
    %v1562 = vld [vmem:[%s1 + $0x2f98] sm:$0xff]
    %v1563 = vld [vmem:[%s1 + $0x2fa0] sm:$0xff]
    %v1564 = vld [vmem:[%s1 + $0x2fa8] sm:$0xff]
    %v1565 = vld [vmem:[%s1 + $0x2fb0] sm:$0xff]
    %v1566 = vld [vmem:[%s1 + $0x2fb8] sm:$0xff]
    %v1567 = vld [vmem:[%s1 + $0x2fc0] sm:$0xff]
    %v1568 = vld [vmem:[%s1 + $0x2fc8] sm:$0xff]
    %v1569 = vld [vmem:[%s1 + $0x2fd0] sm:$0xff]
    %v1570 = vld [vmem:[%s1 + $0x2fd8] sm:$0xff]
    %v1571 = vld [vmem:[%s1 + $0x2fe0] sm:$0xff]
    %v1572 = vld [vmem:[%s1 + $0x2fe8] sm:$0xff]
    %v1573 = vld [vmem:[%s1 + $0x2ff0] sm:$0xff]
    %v1574 = vld [vmem:[%s1 + $0x2ff8] sm:$0xff]
    %v1575 = vld [vmem:[%s1 + $0x3000] sm:$0xff]
    %v1576 = vld [vmem:[%s1 + $0x3008] sm:$0xff]
    %v1577 = vld [vmem:[%s1 + $0x3010] sm:$0xff]
    %v1578 = vld [vmem:[%s1 + $0x3018] sm:$0xff]
    %v1579 = vld [vmem:[%s1 + $0x3020] sm:$0xff]
    %v1580 = vld [vmem:[%s1 + $0x3028] sm:$0xff]
    %v1581 = vld [vmem:[%s1 + $0x3030] sm:$0xff]
    %v1582 = vld [vmem:[%s1 + $0x3038] sm:$0xff]
    %v1583 = vld [vmem:[%s1 + $0x3040] sm:$0xff]
    %v1584 = vld [vmem:[%s1 + $0x3048] sm:$0xff]
    %v1585 = vld [vmem:[%s1 + $0x3050] sm:$0xff]
    %v1586 = vld [vmem:[%s1 + $0x3058] sm:$0xff]
    %v1587 = vld [vmem:[%s1 + $0x3060] sm:$0xff]
    %v1588 = vld [vmem:[%s1 + $0x3068] sm:$0xff]
    %v1589 = vld [vmem:[%s1 + $0x3070] sm:$0xff]
    %v1590 = vld [vmem:[%s1 + $0x3078] sm:$0xff]
    %v1591 = vld [vmem:[%s1 + $0x3080] sm:$0xff]
    %v1592 = vld [vmem:[%s1 + $0x3088] sm:$0xff]
    %v1593 = vld [vmem:[%s1 + $0x3090] sm:$0xff]
    %v1594 = vld [vmem:[%s1 + $0x3098] sm:$0xff]
    %v1595 = vld [vmem:[%s1 + $0x30a0] sm:$0xff]
    %v1596 = vld [vmem:[%s1 + $0x30a8] sm:$0xff]
    %v1597 = vld [vmem:[%s1 + $0x30b0] sm:$0xff]
    %v1598 = vld [vmem:[%s1 + $0x30b8] sm:$0xff]
    %v1599 = vld [vmem:[%s1 + $0x30c0] sm:$0xff]
    %v1600 = vld [vmem:[%s1 + $0x30c8] sm:$0xff]
    %v1601 = vld [vmem:[%s1 + $0x30d0] sm:$0xff]
    %v1602 = vld [vmem:[%s1 + $0x30d8] sm:$0xff]
    %v1603 = vld [vmem:[%s1 + $0x30e0] sm:$0xff]
    %v1604 = vld [vmem:[%s1 + $0x30e8] sm:$0xff]
    %v1605 = vld [vmem:[%s1 + $0x30f0] sm:$0xff]
    %v1606 = vld [vmem:[%s1 + $0x30f8] sm:$0xff]
    %v1607 = vld [vmem:[%s1 + $0x3100] sm:$0xff]
    %v1608 = vld [vmem:[%s1 + $0x3108] sm:$0xff]
    %v1609 = vld [vmem:[%s1 + $0x3110] sm:$0xff]
    %v1610 = vld [vmem:[%s1 + $0x3118] sm:$0xff]
    %v1611 = vld [vmem:[%s1 + $0x3120] sm:$0xff]
    %v1612 = vld [vmem:[%s1 + $0x3128] sm:$0xff]
    %v1613 = vld [vmem:[%s1 + $0x3130] sm:$0xff]
    %v1614 = vld [vmem:[%s1 + $0x3138] sm:$0xff]
    %v1615 = vld [vmem:[%s1 + $0x3140] sm:$0xff]
    %v1616 = vld [vmem:[%s1 + $0x3148] sm:$0xff]
    %v1617 = vld [vmem:[%s1 + $0x3150] sm:$0xff]
    %v1618 = vld [vmem:[%s1 + $0x3158] sm:$0xff]
    %v1619 = vld [vmem:[%s1 + $0x3160] sm:$0xff]
    %v1620 = vld [vmem:[%s1 + $0x3168] sm:$0xff]
    %v1621 = vld [vmem:[%s1 + $0x3170] sm:$0xff]
    %v1622 = vld [vmem:[%s1 + $0x3178] sm:$0xff]
    %v1623 = vld [vmem:[%s1 + $0x3180] sm:$0xff]
    %v1624 = vld [vmem:[%s1 + $0x3188] sm:$0xff]
    %v1625 = vld [vmem:[%s1 + $0x3190] sm:$0xff]
    %v1626 = vld [vmem:[%s1 + $0x3198] sm:$0xff]
    %v1627 = vld [vmem:[%s1 + $0x31a0] sm:$0xff]
    %v1628 = vld [vmem:[%s1 + $0x31a8] sm:$0xff]
    %v1629 = vld [vmem:[%s1 + $0x31b0] sm:$0xff]
    %v1630 = vld [vmem:[%s1 + $0x31b8] sm:$0xff]
    %v1631 = vld [vmem:[%s1 + $0x31c0] sm:$0xff]
    %v1632 = vld [vmem:[%s1 + $0x31c8] sm:$0xff]
    %v1633 = vld [vmem:[%s1 + $0x31d0] sm:$0xff]
    %v1634 = vld [vmem:[%s1 + $0x31d8] sm:$0xff]
    %v1635 = vld [vmem:[%s1 + $0x31e0] sm:$0xff]
    %v1636 = vld [vmem:[%s1 + $0x31e8] sm:$0xff]
    %v1637 = vld [vmem:[%s1 + $0x31f0] sm:$0xff]
    %v1638 = vld [vmem:[%s1 + $0x31f8] sm:$0xff]
    %v1639 = vld [vmem:[%s1 + $0x3200] sm:$0xff]
    %v1640 = vld [vmem:[%s1 + $0x3208] sm:$0xff]
    %v1641 = vld [vmem:[%s1 + $0x3210] sm:$0xff]
    %v1642 = vld [vmem:[%s1 + $0x3218] sm:$0xff]
    %v1643 = vld [vmem:[%s1 + $0x3220] sm:$0xff]
    %v1644 = vld [vmem:[%s1 + $0x3228] sm:$0xff]
    %v1645 = vld [vmem:[%s1 + $0x3230] sm:$0xff]
    %v1646 = vld [vmem:[%s1 + $0x3238] sm:$0xff]
    %v1647 = vld [vmem:[%s1 + $0x3240] sm:$0xff]
    %v1648 = vld [vmem:[%s1 + $0x3248] sm:$0xff]
    %v1649 = vld [vmem:[%s1 + $0x3250] sm:$0xff]
    %v1650 = vld [vmem:[%s1 + $0x3258] sm:$0xff]
    %v1651 = vld [vmem:[%s1 + $0x3260] sm:$0xff]
    %v1652 = vld [vmem:[%s1 + $0x3268] sm:$0xff]
    %v1653 = vld [vmem:[%s1 + $0x3270] sm:$0xff]
    %v1654 = vld [vmem:[%s1 + $0x3278] sm:$0xff]
    %v1655 = vld [vmem:[%s1 + $0x3280] sm:$0xff]
    %v1656 = vld [vmem:[%s1 + $0x3288] sm:$0xff]
    %v1657 = vld [vmem:[%s1 + $0x3290] sm:$0xff]
    %v1658 = vld [vmem:[%s1 + $0x3298] sm:$0xff]
    %v1659 = vld [vmem:[%s1 + $0x32a0] sm:$0xff]
    %v1660 = vld [vmem:[%s1 + $0x32a8] sm:$0xff]
    %v1661 = vld [vmem:[%s1 + $0x32b0] sm:$0xff]
    %v1662 = vld [vmem:[%s1 + $0x32b8] sm:$0xff]
    %v1663 = vld [vmem:[%s1 + $0x32c0] sm:$0xff]
    %v1664 = vld [vmem:[%s1 + $0x32c8] sm:$0xff]
    %v1665 = vld [vmem:[%s1 + $0x32d0] sm:$0xff]
    %v1666 = vld [vmem:[%s1 + $0x32d8] sm:$0xff]
    %v1667 = vld [vmem:[%s1 + $0x32e0] sm:$0xff]
    %v1668 = vld [vmem:[%s1 + $0x32e8] sm:$0xff]
    %v1669 = vld [vmem:[%s1 + $0x32f0] sm:$0xff]
    %v1670 = vld [vmem:[%s1 + $0x32f8] sm:$0xff]
    %v1671 = vld [vmem:[%s1 + $0x3300] sm:$0xff]
    %v1672 = vld [vmem:[%s1 + $0x3308] sm:$0xff]
    %v1673 = vld [vmem:[%s1 + $0x3310] sm:$0xff]
    %v1674 = vld [vmem:[%s1 + $0x3318] sm:$0xff]
    %v1675 = vld [vmem:[%s1 + $0x3320] sm:$0xff]
    %v1676 = vld [vmem:[%s1 + $0x3328] sm:$0xff]
    %v1677 = vld [vmem:[%s1 + $0x3330] sm:$0xff]
    %v1678 = vld [vmem:[%s1 + $0x3338] sm:$0xff]
    %v1679 = vld [vmem:[%s1 + $0x3340] sm:$0xff]
    %v1680 = vld [vmem:[%s1 + $0x3348] sm:$0xff]
    %v1681 = vld [vmem:[%s1 + $0x3350] sm:$0xff]
    %v1682 = vld [vmem:[%s1 + $0x3358] sm:$0xff]
    %v1683 = vld [vmem:[%s1 + $0x3360] sm:$0xff]
    %v1684 = vld [vmem:[%s1 + $0x3368] sm:$0xff]
    %v1685 = vld [vmem:[%s1 + $0x3370] sm:$0xff]
    %v1686 = vld [vmem:[%s1 + $0x3378] sm:$0xff]
    %v1687 = vld [vmem:[%s1 + $0x3380] sm:$0xff]
    %v1688 = vld [vmem:[%s1 + $0x3388] sm:$0xff]
    %v1689 = vld [vmem:[%s1 + $0x3390] sm:$0xff]
    %v1690 = vld [vmem:[%s1 + $0x3398] sm:$0xff]
    %v1691 = vld [vmem:[%s1 + $0x33a0] sm:$0xff]
    %v1692 = vld [vmem:[%s1 + $0x33a8] sm:$0xff]
    %v1693 = vld [vmem:[%s1 + $0x33b0] sm:$0xff]
    %v1694 = vld [vmem:[%s1 + $0x33b8] sm:$0xff]
    %v1695 = vld [vmem:[%s1 + $0x33c0] sm:$0xff]
    %v1696 = vld [vmem:[%s1 + $0x33c8] sm:$0xff]
    %v1697 = vld [vmem:[%s1 + $0x33d0] sm:$0xff]
    %v1698 = vld [vmem:[%s1 + $0x33d8] sm:$0xff]
    %v1699 = vld [vmem:[%s1 + $0x33e0] sm:$0xff]
    %v1700 = vld [vmem:[%s1 + $0x33e8] sm:$0xff]
    %v1701 = vld [vmem:[%s1 + $0x33f0] sm:$0xff]
    %v1702 = vld [vmem:[%s1 + $0x33f8] sm:$0xff]
    %v1703 = vld [vmem:[%s1 + $0x3400] sm:$0xff]
    %v1704 = vld [vmem:[%s1 + $0x3408] sm:$0xff]
    %v1705 = vld [vmem:[%s1 + $0x3410] sm:$0xff]
    %v1706 = vld [vmem:[%s1 + $0x3418] sm:$0xff]
    %v1707 = vld [vmem:[%s1 + $0x3420] sm:$0xff]
    %v1708 = vld [vmem:[%s1 + $0x3428] sm:$0xff]
    %v1709 = vld [vmem:[%s1 + $0x3430] sm:$0xff]
    %v1710 = vld [vmem:[%s1 + $0x3438] sm:$0xff]
    %v1711 = vld [vmem:[%s1 + $0x3440] sm:$0xff]
    %v1712 = vld [vmem:[%s1 + $0x3448] sm:$0xff]
    %v1713 = vld [vmem:[%s1 + $0x3450] sm:$0xff]
    %v1714 = vld [vmem:[%s1 + $0x3458] sm:$0xff]
    %v1715 = vld [vmem:[%s1 + $0x3460] sm:$0xff]
    %v1716 = vld [vmem:[%s1 + $0x3468] sm:$0xff]
    %v1717 = vld [vmem:[%s1 + $0x3470] sm:$0xff]
    %v1718 = vld [vmem:[%s1 + $0x3478] sm:$0xff]
    %v1719 = vld [vmem:[%s1 + $0x3480] sm:$0xff]
    %v1720 = vld [vmem:[%s1 + $0x3488] sm:$0xff]
    %v1721 = vld [vmem:[%s1 + $0x3490] sm:$0xff]
    %v1722 = vld [vmem:[%s1 + $0x3498] sm:$0xff]
    %v1723 = vld [vmem:[%s1 + $0x34a0] sm:$0xff]
    %v1724 = vld [vmem:[%s1 + $0x34a8] sm:$0xff]
    %v1725 = vld [vmem:[%s1 + $0x34b0] sm:$0xff]
    %v1726 = vld [vmem:[%s1 + $0x34b8] sm:$0xff]
    %v1727 = vld [vmem:[%s1 + $0x34c0] sm:$0xff]
    %v1728 = vld [vmem:[%s1 + $0x34c8] sm:$0xff]
    %v1729 = vld [vmem:[%s1 + $0x34d0] sm:$0xff]
    %v1730 = vld [vmem:[%s1 + $0x34d8] sm:$0xff]
    %v1731 = vld [vmem:[%s1 + $0x34e0] sm:$0xff]
    %v1732 = vld [vmem:[%s1 + $0x34e8] sm:$0xff]
    %v1733 = vld [vmem:[%s1 + $0x34f0] sm:$0xff]
    %v1734 = vld [vmem:[%s1 + $0x34f8] sm:$0xff]
    %v1735 = vld [vmem:[%s1 + $0x3500] sm:$0xff]
    %v1736 = vld [vmem:[%s1 + $0x3508] sm:$0xff]
    %v1737 = vld [vmem:[%s1 + $0x3510] sm:$0xff]
    %v1738 = vld [vmem:[%s1 + $0x3518] sm:$0xff]
    %v1739 = vld [vmem:[%s1 + $0x3520] sm:$0xff]
    %v1740 = vld [vmem:[%s1 + $0x3528] sm:$0xff]
    %v1741 = vld [vmem:[%s1 + $0x3530] sm:$0xff]
    %v1742 = vld [vmem:[%s1 + $0x3538] sm:$0xff]
    %v1743 = vld [vmem:[%s1 + $0x3540] sm:$0xff]
    %v1744 = vld [vmem:[%s1 + $0x3548] sm:$0xff]
    %v1745 = vld [vmem:[%s1 + $0x3550] sm:$0xff]
    %v1746 = vld [vmem:[%s1 + $0x3558] sm:$0xff]
    %v1747 = vld [vmem:[%s1 + $0x3560] sm:$0xff]
    %v1748 = vld [vmem:[%s1 + $0x3568] sm:$0xff]
    %v1749 = vld [vmem:[%s1 + $0x3570] sm:$0xff]
    %v1750 = vld [vmem:[%s1 + $0x3578] sm:$0xff]
    %v1751 = vld [vmem:[%s1 + $0x3580] sm:$0xff]
    %v1752 = vld [vmem:[%s1 + $0x3588] sm:$0xff]
    %v1753 = vld [vmem:[%s1 + $0x3590] sm:$0xff]
    %v1754 = vld [vmem:[%s1 + $0x3598] sm:$0xff]
    %v1755 = vld [vmem:[%s1 + $0x35a0] sm:$0xff]
    %v1756 = vld [vmem:[%s1 + $0x35a8] sm:$0xff]
    %v1757 = vld [vmem:[%s1 + $0x35b0] sm:$0xff]
    %v1758 = vld [vmem:[%s1 + $0x35b8] sm:$0xff]
    %v1759 = vld [vmem:[%s1 + $0x35c0] sm:$0xff]
    %v1760 = vld [vmem:[%s1 + $0x35c8] sm:$0xff]
    %v1761 = vld [vmem:[%s1 + $0x35d0] sm:$0xff]
    %v1762 = vld [vmem:[%s1 + $0x35d8] sm:$0xff]
    %v1763 = vld [vmem:[%s1 + $0x35e0] sm:$0xff]
    %v1764 = vld [vmem:[%s1 + $0x35e8] sm:$0xff]
    %v1765 = vld [vmem:[%s1 + $0x35f0] sm:$0xff]
    %v1766 = vld [vmem:[%s1 + $0x35f8] sm:$0xff]
    %1767 = vmatprep.subr.mxu0 %v310
    %1768 = vmatpush1.msra.mxu0 %v309
    %1769 = vmatprep.subr.mxu0 %v292
    %1770 = vmatpush1.msra.mxu0 %v291
    %1771 = vmatprep.subr.mxu0 %v274
    %1772 = vmatpush1.msra.mxu0 %v273
    %1773 = vmatprep.subr.mxu0 %v256
    %1774 = vmatpush1.msra.mxu0 %v255
    %1775 = vmatprep.subr.mxu0 %v238
    %1776 = vmatpush1.msra.mxu0 %v237
    %1777 = vmatprep.subr.mxu0 %v220
    %1778 = vmatpush1.msra.mxu0 %v219
    %1779 = vmatprep.subr.mxu0 %v202
    %1780 = vmatpush1.msra.mxu0 %v201
    %1781 = vmatprep.subr.mxu0 %v184
    %1782 = vmatpush1.msra.mxu0 %v183
    %1783 = vmatprep.subr.mxu0 %v166
    %1784 = vmatpush1.msra.mxu0 %v165
    %1785 = vmatprep.subr.mxu0 %v148
    %1786 = vmatpush1.msra.mxu0 %v147
    %1787 = vmatprep.subr.mxu0 %v130
    %1788 = vmatpush1.msra.mxu0 %v129
    %1789 = vmatprep.subr.mxu0 %v112
    %1790 = vmatpush1.msra.mxu0 %v111
    %1791 = vmatprep.subr.mxu0 %v94
    %1792 = vmatpush1.msra.mxu0 %v93
    %1793 = vmatprep.subr.mxu0 %v76
    %1794 = vmatpush1.msra.mxu0 %v75
    %1795 = vmatprep.subr.mxu0 %v58
    %1796 = vmatpush1.msra.mxu0 %v57
    %1797 = vmatprep.subr.mxu0 %v40
    %1798 = vmatpush1.msra.mxu0 %v39
    %1799 = vmatprep.subr.mxu0 %v598
    %1800 = vmatpush2.msra.mxu0 %v597
    %1801 = vmatprep.subr.mxu0 %v580
    %1802 = vmatpush2.msra.mxu0 %v579
    %1803 = vmatprep.subr.mxu0 %v562
    %1804 = vmatpush2.msra.mxu0 %v561
    %1805 = vmatprep.subr.mxu0 %v544
    %1806 = vmatpush2.msra.mxu0 %v543
    %1807 = vmatprep.subr.mxu0 %v526
    %1808 = vmatpush2.msra.mxu0 %v525
    %1809 = vmatprep.subr.mxu0 %v508
    %1810 = vmatpush2.msra.mxu0 %v507
    %1811 = vmatprep.subr.mxu0 %v490
    %1812 = vmatpush2.msra.mxu0 %v489
    %1813 = vmatprep.subr.mxu0 %v472
    %1814 = vmatpush2.msra.mxu0 %v471
    %1815 = vmatprep.subr.mxu0 %v454
    %1816 = vmatpush2.msra.mxu0 %v453
    %1817 = vmatprep.subr.mxu0 %v436
    %1818 = vmatpush2.msra.mxu0 %v435
    %1819 = vmatprep.subr.mxu0 %v418
    %1820 = vmatpush2.msra.mxu0 %v417
    %1821 = vmatprep.subr.mxu0 %v400
    %1822 = vmatpush2.msra.mxu0 %v399
    %1823 = vmatprep.subr.mxu0 %v382
    %1824 = vmatpush2.msra.mxu0 %v381
    %1825 = vmatprep.subr.mxu0 %v364
    %1826 = vmatpush2.msra.mxu0 %v363
    %1827 = vmatprep.subr.mxu0 %v346
    %1828 = vmatpush2.msra.mxu0 %v345
    %1829 = vmatprep.subr.mxu0 %v328
    %1830 = vmatpush2.msra.mxu0 %v327
    %1831 = vmatprep.mubr.f32.mxu0 %v28
    %1832 = vmatmul.mubr.f32.gmra.mxu0 %v27
    %v1833 = vpop.f32.mrf.mxu0
    %v1834 = vadd.f32 0.0, %v1833
    %v1835 = vpop.f32.mrf.mxu0
    %v1836 = vadd.f32 0.0, %v1835
    %1837 = vmatprep.mubr.f32.mxu0 %v34
    %1838 = vmatmul.mubr.f32.gmra.mxu0 %v33
    %v1839 = vpop.f32.mrf.mxu0
    %v1840 = vadd.f32 0.0, %v1839
    %v1841 = vpop.f32.mrf.mxu0
    %v1842 = vadd.f32 0.0, %v1841
    %1843 = vdwg.mxu0
    %1844 = vmatprep.subr.mxu0 %v886
    %1845 = vmatpush1.msra.mxu0 %v885
    %1846 = vmatprep.subr.mxu0 %v868
    %1847 = vmatpush1.msra.mxu0 %v867
    %1848 = vmatprep.subr.mxu0 %v850
    %1849 = vmatpush1.msra.mxu0 %v849
    %1850 = vmatprep.subr.mxu0 %v832
    %1851 = vmatpush1.msra.mxu0 %v831
    %1852 = vmatprep.subr.mxu0 %v814
    %1853 = vmatpush1.msra.mxu0 %v813
    %1854 = vmatprep.subr.mxu0 %v796
    %1855 = vmatpush1.msra.mxu0 %v795
    %1856 = vmatprep.subr.mxu0 %v778
    %1857 = vmatpush1.msra.mxu0 %v777
    %1858 = vmatprep.subr.mxu0 %v760
    %1859 = vmatpush1.msra.mxu0 %v759
    %1860 = vmatprep.subr.mxu0 %v742
    %1861 = vmatpush1.msra.mxu0 %v741
    %1862 = vmatprep.subr.mxu0 %v724
    %1863 = vmatpush1.msra.mxu0 %v723
    %1864 = vmatprep.subr.mxu0 %v706
    %1865 = vmatpush1.msra.mxu0 %v705
    %1866 = vmatprep.subr.mxu0 %v688
    %1867 = vmatpush1.msra.mxu0 %v687
    %1868 = vmatprep.subr.mxu0 %v670
    %1869 = vmatpush1.msra.mxu0 %v669
    %1870 = vmatprep.subr.mxu0 %v652
    %1871 = vmatpush1.msra.mxu0 %v651
    %1872 = vmatprep.subr.mxu0 %v634
    %1873 = vmatpush1.msra.mxu0 %v633
    %1874 = vmatprep.subr.mxu0 %v616
    %1875 = vmatpush1.msra.mxu0 %v615
    %1876 = vmatprep.subr.mxu0 %v1174
    %1877 = vmatpush2.msra.mxu0 %v1173
    %1878 = vmatprep.subr.mxu0 %v1156
    %1879 = vmatpush2.msra.mxu0 %v1155
    %1880 = vmatprep.subr.mxu0 %v1138
    %1881 = vmatpush2.msra.mxu0 %v1137
    %1882 = vmatprep.subr.mxu0 %v1120
    %1883 = vmatpush2.msra.mxu0 %v1119
    %1884 = vmatprep.subr.mxu0 %v1102
    %1885 = vmatpush2.msra.mxu0 %v1101
    %1886 = vmatprep.subr.mxu0 %v1084
    %1887 = vmatpush2.msra.mxu0 %v1083
    %1888 = vmatprep.subr.mxu0 %v1066
    %1889 = vmatpush2.msra.mxu0 %v1065
    %1890 = vmatprep.subr.mxu0 %v1048
    %1891 = vmatpush2.msra.mxu0 %v1047
    %1892 = vmatprep.subr.mxu0 %v1030
    %1893 = vmatpush2.msra.mxu0 %v1029
    %1894 = vmatprep.subr.mxu0 %v1012
    %1895 = vmatpush2.msra.mxu0 %v1011
    %1896 = vmatprep.subr.mxu0 %v994
    %1897 = vmatpush2.msra.mxu0 %v993
    %1898 = vmatprep.subr.mxu0 %v976
    %1899 = vmatpush2.msra.mxu0 %v975
    %1900 = vmatprep.subr.mxu0 %v958
    %1901 = vmatpush2.msra.mxu0 %v957
    %1902 = vmatprep.subr.mxu0 %v940
    %1903 = vmatpush2.msra.mxu0 %v939
    %1904 = vmatprep.subr.mxu0 %v922
    %1905 = vmatpush2.msra.mxu0 %v921
    %1906 = vmatprep.subr.mxu0 %v904
    %1907 = vmatpush2.msra.mxu0 %v903
    %1908 = vmatprep.mubr.f32.mxu0 %v30
    %1909 = vmatmul.mubr.f32.gmra.mxu0 %v29
    %v1910 = vpop.f32.mrf.mxu0
    %v1911 = vadd.f32 %v1834, %v1910
    %v1912 = vpop.f32.mrf.mxu0
    %v1913 = vadd.f32 %v1836, %v1912
    %1914 = vmatprep.mubr.f32.mxu0 %v36
    %1915 = vmatmul.mubr.f32.gmra.mxu0 %v35
    %v1916 = vpop.f32.mrf.mxu0
    %v1917 = vadd.f32 %v1840, %v1916
    %v1918 = vpop.f32.mrf.mxu0
    %v1919 = vadd.f32 %v1842, %v1918
    %1920 = vdwg.mxu0
    %1921 = vmatprep.subr.mxu0 %v1462
    %1922 = vmatpush1.msra.mxu0 %v1461
    %1923 = vmatprep.subr.mxu0 %v1444
    %1924 = vmatpush1.msra.mxu0 %v1443
    %1925 = vmatprep.subr.mxu0 %v1426
    %1926 = vmatpush1.msra.mxu0 %v1425
    %1927 = vmatprep.subr.mxu0 %v1408
    %1928 = vmatpush1.msra.mxu0 %v1407
    %1929 = vmatprep.subr.mxu0 %v1390
    %1930 = vmatpush1.msra.mxu0 %v1389
    %1931 = vmatprep.subr.mxu0 %v1372
    %1932 = vmatpush1.msra.mxu0 %v1371
    %1933 = vmatprep.subr.mxu0 %v1354
    %1934 = vmatpush1.msra.mxu0 %v1353
    %1935 = vmatprep.subr.mxu0 %v1336
    %1936 = vmatpush1.msra.mxu0 %v1335
    %1937 = vmatprep.subr.mxu0 %v1318
    %1938 = vmatpush1.msra.mxu0 %v1317
    %1939 = vmatprep.subr.mxu0 %v1300
    %1940 = vmatpush1.msra.mxu0 %v1299
    %1941 = vmatprep.subr.mxu0 %v1282
    %1942 = vmatpush1.msra.mxu0 %v1281
    %1943 = vmatprep.subr.mxu0 %v1264
    %1944 = vmatpush1.msra.mxu0 %v1263
    %1945 = vmatprep.subr.mxu0 %v1246
    %1946 = vmatpush1.msra.mxu0 %v1245
    %1947 = vmatprep.subr.mxu0 %v1228
    %1948 = vmatpush1.msra.mxu0 %v1227
    %1949 = vmatprep.subr.mxu0 %v1210
    %1950 = vmatpush1.msra.mxu0 %v1209
    %1951 = vmatprep.subr.mxu0 %v1192
    %1952 = vmatpush1.msra.mxu0 %v1191
    %1953 = vmatprep.subr.mxu0 %v1750
    %1954 = vmatpush2.msra.mxu0 %v1749
    %1955 = vmatprep.subr.mxu0 %v1732
    %1956 = vmatpush2.msra.mxu0 %v1731
    %1957 = vmatprep.subr.mxu0 %v1714
    %1958 = vmatpush2.msra.mxu0 %v1713
    %1959 = vmatprep.subr.mxu0 %v1696
    %1960 = vmatpush2.msra.mxu0 %v1695
    %1961 = vmatprep.subr.mxu0 %v1678
    %1962 = vmatpush2.msra.mxu0 %v1677
    %1963 = vmatprep.subr.mxu0 %v1660
    %1964 = vmatpush2.msra.mxu0 %v1659
    %1965 = vmatprep.subr.mxu0 %v1642
    %1966 = vmatpush2.msra.mxu0 %v1641
    %1967 = vmatprep.subr.mxu0 %v1624
    %1968 = vmatpush2.msra.mxu0 %v1623
    %1969 = vmatprep.subr.mxu0 %v1606
    %1970 = vmatpush2.msra.mxu0 %v1605
    %1971 = vmatprep.subr.mxu0 %v1588
    %1972 = vmatpush2.msra.mxu0 %v1587
    %1973 = vmatprep.subr.mxu0 %v1570
    %1974 = vmatpush2.msra.mxu0 %v1569
    %1975 = vmatprep.subr.mxu0 %v1552
    %1976 = vmatpush2.msra.mxu0 %v1551
    %1977 = vmatprep.subr.mxu0 %v1534
    %1978 = vmatpush2.msra.mxu0 %v1533
    %1979 = vmatprep.subr.mxu0 %v1516
    %1980 = vmatpush2.msra.mxu0 %v1515
    %1981 = vmatprep.subr.mxu0 %v1498
    %1982 = vmatpush2.msra.mxu0 %v1497
    %1983 = vmatprep.subr.mxu0 %v1480
    %1984 = vmatpush2.msra.mxu0 %v1479
    %1985 = vmatprep.mubr.f32.mxu0 %v32
    %1986 = vmatmul.mubr.f32.gmra.mxu0 %v31
    %v1987 = vpop.f32.mrf.mxu0
    %v1988 = vadd.f32 %v1911, %v1987
    %v1989 = vpop.f32.mrf.mxu0
    %v1990 = vadd.f32 %v1913, %v1989
    %1991 = vmatprep.mubr.f32.mxu0 %v38
    %1992 = vmatmul.mubr.f32.gmra.mxu0 %v37
    %v1993 = vpop.f32.mrf.mxu0
    %v1994 = vadd.f32 %v1917, %v1993
    %v1995 = vpop.f32.mrf.mxu0
    %v1996 = vadd.f32 %v1919, %v1995
    %1997 = vdwg.mxu0
    %1998 = vmatprep.subr.mxu0 %v312
    %1999 = vmatpush1.msra.mxu0 %v311
    %2000 = vmatprep.subr.mxu0 %v294
    %2001 = vmatpush1.msra.mxu0 %v293
    %2002 = vmatprep.subr.mxu0 %v276
    %2003 = vmatpush1.msra.mxu0 %v275
    %2004 = vmatprep.subr.mxu0 %v258
    %2005 = vmatpush1.msra.mxu0 %v257
    %2006 = vmatprep.subr.mxu0 %v240
    %2007 = vmatpush1.msra.mxu0 %v239
    %2008 = vmatprep.subr.mxu0 %v222
    %2009 = vmatpush1.msra.mxu0 %v221
    %2010 = vmatprep.subr.mxu0 %v204
    %2011 = vmatpush1.msra.mxu0 %v203
    %2012 = vmatprep.subr.mxu0 %v186
    %2013 = vmatpush1.msra.mxu0 %v185
    %2014 = vmatprep.subr.mxu0 %v168
    %2015 = vmatpush1.msra.mxu0 %v167
    %2016 = vmatprep.subr.mxu0 %v150
    %2017 = vmatpush1.msra.mxu0 %v149
    %2018 = vmatprep.subr.mxu0 %v132
    %2019 = vmatpush1.msra.mxu0 %v131
    %2020 = vmatprep.subr.mxu0 %v114
    %2021 = vmatpush1.msra.mxu0 %v113
    %2022 = vmatprep.subr.mxu0 %v96
    %2023 = vmatpush1.msra.mxu0 %v95
    %2024 = vmatprep.subr.mxu0 %v78
    %2025 = vmatpush1.msra.mxu0 %v77
    %2026 = vmatprep.subr.mxu0 %v60
    %2027 = vmatpush1.msra.mxu0 %v59
    %2028 = vmatprep.subr.mxu0 %v42
    %2029 = vmatpush1.msra.mxu0 %v41
    %2030 = vmatprep.subr.mxu0 %v600
    %2031 = vmatpush2.msra.mxu0 %v599
    %2032 = vmatprep.subr.mxu0 %v582
    %2033 = vmatpush2.msra.mxu0 %v581
    %2034 = vmatprep.subr.mxu0 %v564
    %2035 = vmatpush2.msra.mxu0 %v563
    %2036 = vmatprep.subr.mxu0 %v546
    %2037 = vmatpush2.msra.mxu0 %v545
    %2038 = vmatprep.subr.mxu0 %v528
    %2039 = vmatpush2.msra.mxu0 %v527
    %2040 = vmatprep.subr.mxu0 %v510
    %2041 = vmatpush2.msra.mxu0 %v509
    %2042 = vmatprep.subr.mxu0 %v492
    %2043 = vmatpush2.msra.mxu0 %v491
    %2044 = vmatprep.subr.mxu0 %v474
    %2045 = vmatpush2.msra.mxu0 %v473
    %2046 = vmatprep.subr.mxu0 %v456
    %2047 = vmatpush2.msra.mxu0 %v455
    %2048 = vmatprep.subr.mxu0 %v438
    %2049 = vmatpush2.msra.mxu0 %v437
    %2050 = vmatprep.subr.mxu0 %v420
    %2051 = vmatpush2.msra.mxu0 %v419
    %2052 = vmatprep.subr.mxu0 %v402
    %2053 = vmatpush2.msra.mxu0 %v401
    %2054 = vmatprep.subr.mxu0 %v384
    %2055 = vmatpush2.msra.mxu0 %v383
    %2056 = vmatprep.subr.mxu0 %v366
    %2057 = vmatpush2.msra.mxu0 %v365
    %2058 = vmatprep.subr.mxu0 %v348
    %2059 = vmatpush2.msra.mxu0 %v347
    %2060 = vmatprep.subr.mxu0 %v330
    %2061 = vmatpush2.msra.mxu0 %v329
    %2062 = vmatprep.mubr.f32.mxu0 %v28
    %2063 = vmatmul.mubr.f32.gmra.mxu0 %v27
    %v2064 = vpop.f32.mrf.mxu0
    %v2065 = vadd.f32 0.0, %v2064
    %v2066 = vpop.f32.mrf.mxu0
    %v2067 = vadd.f32 0.0, %v2066
    %2068 = vmatprep.mubr.f32.mxu0 %v34
    %2069 = vmatmul.mubr.f32.gmra.mxu0 %v33
    %v2070 = vpop.f32.mrf.mxu0
    %v2071 = vadd.f32 0.0, %v2070
    %v2072 = vpop.f32.mrf.mxu0
    %v2073 = vadd.f32 0.0, %v2072
    %2074 = vdwg.mxu0
    %2075 = vmatprep.subr.mxu0 %v888
    %2076 = vmatpush1.msra.mxu0 %v887
    %2077 = vmatprep.subr.mxu0 %v870
    %2078 = vmatpush1.msra.mxu0 %v869
    %2079 = vmatprep.subr.mxu0 %v852
    %2080 = vmatpush1.msra.mxu0 %v851
    %2081 = vmatprep.subr.mxu0 %v834
    %2082 = vmatpush1.msra.mxu0 %v833
    %2083 = vmatprep.subr.mxu0 %v816
    %2084 = vmatpush1.msra.mxu0 %v815
    %2085 = vmatprep.subr.mxu0 %v798
    %2086 = vmatpush1.msra.mxu0 %v797
    %2087 = vmatprep.subr.mxu0 %v780
    %2088 = vmatpush1.msra.mxu0 %v779
    %2089 = vmatprep.subr.mxu0 %v762
    %2090 = vmatpush1.msra.mxu0 %v761
    %2091 = vmatprep.subr.mxu0 %v744
    %2092 = vmatpush1.msra.mxu0 %v743
    %2093 = vmatprep.subr.mxu0 %v726
    %2094 = vmatpush1.msra.mxu0 %v725
    %2095 = vmatprep.subr.mxu0 %v708
    %2096 = vmatpush1.msra.mxu0 %v707
    %2097 = vmatprep.subr.mxu0 %v690
    %2098 = vmatpush1.msra.mxu0 %v689
    %2099 = vmatprep.subr.mxu0 %v672
    %2100 = vmatpush1.msra.mxu0 %v671
    %2101 = vmatprep.subr.mxu0 %v654
    %2102 = vmatpush1.msra.mxu0 %v653
    %2103 = vmatprep.subr.mxu0 %v636
    %2104 = vmatpush1.msra.mxu0 %v635
    %2105 = vmatprep.subr.mxu0 %v618
    %2106 = vmatpush1.msra.mxu0 %v617
    %2107 = vmatprep.subr.mxu0 %v1176
    %2108 = vmatpush2.msra.mxu0 %v1175
    %2109 = vmatprep.subr.mxu0 %v1158
    %2110 = vmatpush2.msra.mxu0 %v1157
    %2111 = vmatprep.subr.mxu0 %v1140
    %2112 = vmatpush2.msra.mxu0 %v1139
    %2113 = vmatprep.subr.mxu0 %v1122
    %2114 = vmatpush2.msra.mxu0 %v1121
    %2115 = vmatprep.subr.mxu0 %v1104
    %2116 = vmatpush2.msra.mxu0 %v1103
    %2117 = vmatprep.subr.mxu0 %v1086
    %2118 = vmatpush2.msra.mxu0 %v1085
    %2119 = vmatprep.subr.mxu0 %v1068
    %2120 = vmatpush2.msra.mxu0 %v1067
    %2121 = vmatprep.subr.mxu0 %v1050
    %2122 = vmatpush2.msra.mxu0 %v1049
    %2123 = vmatprep.subr.mxu0 %v1032
    %2124 = vmatpush2.msra.mxu0 %v1031
    %2125 = vmatprep.subr.mxu0 %v1014
    %2126 = vmatpush2.msra.mxu0 %v1013
    %2127 = vmatprep.subr.mxu0 %v996
    %2128 = vmatpush2.msra.mxu0 %v995
    %2129 = vmatprep.subr.mxu0 %v978
    %2130 = vmatpush2.msra.mxu0 %v977
    %2131 = vmatprep.subr.mxu0 %v960
    %2132 = vmatpush2.msra.mxu0 %v959
    %2133 = vmatprep.subr.mxu0 %v942
    %2134 = vmatpush2.msra.mxu0 %v941
    %2135 = vmatprep.subr.mxu0 %v924
    %2136 = vmatpush2.msra.mxu0 %v923
    %2137 = vmatprep.subr.mxu0 %v906
    %2138 = vmatpush2.msra.mxu0 %v905
    %2139 = vmatprep.mubr.f32.mxu0 %v30
    %2140 = vmatmul.mubr.f32.gmra.mxu0 %v29
    %v2141 = vpop.f32.mrf.mxu0
    %v2142 = vadd.f32 %v2065, %v2141
    %v2143 = vpop.f32.mrf.mxu0
    %v2144 = vadd.f32 %v2067, %v2143
    %2145 = vmatprep.mubr.f32.mxu0 %v36
    %2146 = vmatmul.mubr.f32.gmra.mxu0 %v35
    %v2147 = vpop.f32.mrf.mxu0
    %v2148 = vadd.f32 %v2071, %v2147
    %v2149 = vpop.f32.mrf.mxu0
    %v2150 = vadd.f32 %v2073, %v2149
    %2151 = vdwg.mxu0
    %2152 = vmatprep.subr.mxu0 %v1464
    %2153 = vmatpush1.msra.mxu0 %v1463
    %2154 = vmatprep.subr.mxu0 %v1446
    %2155 = vmatpush1.msra.mxu0 %v1445
    %2156 = vmatprep.subr.mxu0 %v1428
    %2157 = vmatpush1.msra.mxu0 %v1427
    %2158 = vmatprep.subr.mxu0 %v1410
    %2159 = vmatpush1.msra.mxu0 %v1409
    %2160 = vmatprep.subr.mxu0 %v1392
    %2161 = vmatpush1.msra.mxu0 %v1391
    %2162 = vmatprep.subr.mxu0 %v1374
    %2163 = vmatpush1.msra.mxu0 %v1373
    %2164 = vmatprep.subr.mxu0 %v1356
    %2165 = vmatpush1.msra.mxu0 %v1355
    %2166 = vmatprep.subr.mxu0 %v1338
    %2167 = vmatpush1.msra.mxu0 %v1337
    %2168 = vmatprep.subr.mxu0 %v1320
    %2169 = vmatpush1.msra.mxu0 %v1319
    %2170 = vmatprep.subr.mxu0 %v1302
    %2171 = vmatpush1.msra.mxu0 %v1301
    %2172 = vmatprep.subr.mxu0 %v1284
    %2173 = vmatpush1.msra.mxu0 %v1283
    %2174 = vmatprep.subr.mxu0 %v1266
    %2175 = vmatpush1.msra.mxu0 %v1265
    %2176 = vmatprep.subr.mxu0 %v1248
    %2177 = vmatpush1.msra.mxu0 %v1247
    %2178 = vmatprep.subr.mxu0 %v1230
    %2179 = vmatpush1.msra.mxu0 %v1229
    %2180 = vmatprep.subr.mxu0 %v1212
    %2181 = vmatpush1.msra.mxu0 %v1211
    %2182 = vmatprep.subr.mxu0 %v1194
    %2183 = vmatpush1.msra.mxu0 %v1193
    %2184 = vmatprep.subr.mxu0 %v1752
    %2185 = vmatpush2.msra.mxu0 %v1751
    %2186 = vmatprep.subr.mxu0 %v1734
    %2187 = vmatpush2.msra.mxu0 %v1733
    %2188 = vmatprep.subr.mxu0 %v1716
    %2189 = vmatpush2.msra.mxu0 %v1715
    %2190 = vmatprep.subr.mxu0 %v1698
    %2191 = vmatpush2.msra.mxu0 %v1697
    %2192 = vmatprep.subr.mxu0 %v1680
    %2193 = vmatpush2.msra.mxu0 %v1679
    %2194 = vmatprep.subr.mxu0 %v1662
    %2195 = vmatpush2.msra.mxu0 %v1661
    %2196 = vmatprep.subr.mxu0 %v1644
    %2197 = vmatpush2.msra.mxu0 %v1643
    %2198 = vmatprep.subr.mxu0 %v1626
    %2199 = vmatpush2.msra.mxu0 %v1625
    %2200 = vmatprep.subr.mxu0 %v1608
    %2201 = vmatpush2.msra.mxu0 %v1607
    %2202 = vmatprep.subr.mxu0 %v1590
    %2203 = vmatpush2.msra.mxu0 %v1589
    %2204 = vmatprep.subr.mxu0 %v1572
    %2205 = vmatpush2.msra.mxu0 %v1571
    %2206 = vmatprep.subr.mxu0 %v1554
    %2207 = vmatpush2.msra.mxu0 %v1553
    %2208 = vmatprep.subr.mxu0 %v1536
    %2209 = vmatpush2.msra.mxu0 %v1535
    %2210 = vmatprep.subr.mxu0 %v1518
    %2211 = vmatpush2.msra.mxu0 %v1517
    %2212 = vmatprep.subr.mxu0 %v1500
    %2213 = vmatpush2.msra.mxu0 %v1499
    %2214 = vmatprep.subr.mxu0 %v1482
    %2215 = vmatpush2.msra.mxu0 %v1481
    %2216 = vmatprep.mubr.f32.mxu0 %v32
    %2217 = vmatmul.mubr.f32.gmra.mxu0 %v31
    %v2218 = vpop.f32.mrf.mxu0
    %v2219 = vadd.f32 %v2142, %v2218
    %v2220 = vpop.f32.mrf.mxu0
    %v2221 = vadd.f32 %v2144, %v2220
    %2222 = vmatprep.mubr.f32.mxu0 %v38
    %2223 = vmatmul.mubr.f32.gmra.mxu0 %v37
    %v2224 = vpop.f32.mrf.mxu0
    %v2225 = vadd.f32 %v2148, %v2224
    %v2226 = vpop.f32.mrf.mxu0
    %v2227 = vadd.f32 %v2150, %v2226
    %2228 = vdwg.mxu0
    %2229 = vmatprep.subr.mxu0 %v314
    %2230 = vmatpush1.msra.mxu0 %v313
    %2231 = vmatprep.subr.mxu0 %v296
    %2232 = vmatpush1.msra.mxu0 %v295
    %2233 = vmatprep.subr.mxu0 %v278
    %2234 = vmatpush1.msra.mxu0 %v277
    %2235 = vmatprep.subr.mxu0 %v260
    %2236 = vmatpush1.msra.mxu0 %v259
    %2237 = vmatprep.subr.mxu0 %v242
    %2238 = vmatpush1.msra.mxu0 %v241
    %2239 = vmatprep.subr.mxu0 %v224
    %2240 = vmatpush1.msra.mxu0 %v223
    %2241 = vmatprep.subr.mxu0 %v206
    %2242 = vmatpush1.msra.mxu0 %v205
    %2243 = vmatprep.subr.mxu0 %v188
    %2244 = vmatpush1.msra.mxu0 %v187
    %2245 = vmatprep.subr.mxu0 %v170
    %2246 = vmatpush1.msra.mxu0 %v169
    %2247 = vmatprep.subr.mxu0 %v152
    %2248 = vmatpush1.msra.mxu0 %v151
    %2249 = vmatprep.subr.mxu0 %v134
    %2250 = vmatpush1.msra.mxu0 %v133
    %2251 = vmatprep.subr.mxu0 %v116
    %2252 = vmatpush1.msra.mxu0 %v115
    %2253 = vmatprep.subr.mxu0 %v98
    %2254 = vmatpush1.msra.mxu0 %v97
    %2255 = vmatprep.subr.mxu0 %v80
    %2256 = vmatpush1.msra.mxu0 %v79
    %2257 = vmatprep.subr.mxu0 %v62
    %2258 = vmatpush1.msra.mxu0 %v61
    %2259 = vmatprep.subr.mxu0 %v44
    %2260 = vmatpush1.msra.mxu0 %v43
    %2261 = vmatprep.subr.mxu0 %v602
    %2262 = vmatpush2.msra.mxu0 %v601
    %2263 = vmatprep.subr.mxu0 %v584
    %2264 = vmatpush2.msra.mxu0 %v583
    %2265 = vmatprep.subr.mxu0 %v566
    %2266 = vmatpush2.msra.mxu0 %v565
    %2267 = vmatprep.subr.mxu0 %v548
    %2268 = vmatpush2.msra.mxu0 %v547
    %2269 = vmatprep.subr.mxu0 %v530
    %2270 = vmatpush2.msra.mxu0 %v529
    %2271 = vmatprep.subr.mxu0 %v512
    %2272 = vmatpush2.msra.mxu0 %v511
    %2273 = vmatprep.subr.mxu0 %v494
    %2274 = vmatpush2.msra.mxu0 %v493
    %2275 = vmatprep.subr.mxu0 %v476
    %2276 = vmatpush2.msra.mxu0 %v475
    %2277 = vmatprep.subr.mxu0 %v458
    %2278 = vmatpush2.msra.mxu0 %v457
    %2279 = vmatprep.subr.mxu0 %v440
    %2280 = vmatpush2.msra.mxu0 %v439
    %2281 = vmatprep.subr.mxu0 %v422
    %2282 = vmatpush2.msra.mxu0 %v421
    %2283 = vmatprep.subr.mxu0 %v404
    %2284 = vmatpush2.msra.mxu0 %v403
    %2285 = vmatprep.subr.mxu0 %v386
    %2286 = vmatpush2.msra.mxu0 %v385
    %2287 = vmatprep.subr.mxu0 %v368
    %2288 = vmatpush2.msra.mxu0 %v367
    %2289 = vmatprep.subr.mxu0 %v350
    %2290 = vmatpush2.msra.mxu0 %v349
    %2291 = vmatprep.subr.mxu0 %v332
    %2292 = vmatpush2.msra.mxu0 %v331
    %2293 = vmatprep.mubr.f32.mxu0 %v28
    %2294 = vmatmul.mubr.f32.gmra.mxu0 %v27
    %v2295 = vpop.f32.mrf.mxu0
    %v2296 = vadd.f32 0.0, %v2295
    %v2297 = vpop.f32.mrf.mxu0
    %v2298 = vadd.f32 0.0, %v2297
    %2299 = vmatprep.mubr.f32.mxu0 %v34
    %2300 = vmatmul.mubr.f32.gmra.mxu0 %v33
    %v2301 = vpop.f32.mrf.mxu0
    %v2302 = vadd.f32 0.0, %v2301
    %v2303 = vpop.f32.mrf.mxu0
    %v2304 = vadd.f32 0.0, %v2303
    %2305 = vdwg.mxu0
    %2306 = vmatprep.subr.mxu0 %v890
    %2307 = vmatpush1.msra.mxu0 %v889
    %2308 = vmatprep.subr.mxu0 %v872
    %2309 = vmatpush1.msra.mxu0 %v871
    %2310 = vmatprep.subr.mxu0 %v854
    %2311 = vmatpush1.msra.mxu0 %v853
    %2312 = vmatprep.subr.mxu0 %v836
    %2313 = vmatpush1.msra.mxu0 %v835
    %2314 = vmatprep.subr.mxu0 %v818
    %2315 = vmatpush1.msra.mxu0 %v817
    %2316 = vmatprep.subr.mxu0 %v800
    %2317 = vmatpush1.msra.mxu0 %v799
    %2318 = vmatprep.subr.mxu0 %v782
    %2319 = vmatpush1.msra.mxu0 %v781
    %2320 = vmatprep.subr.mxu0 %v764
    %2321 = vmatpush1.msra.mxu0 %v763
    %2322 = vmatprep.subr.mxu0 %v746
    %2323 = vmatpush1.msra.mxu0 %v745
    %2324 = vmatprep.subr.mxu0 %v728
    %2325 = vmatpush1.msra.mxu0 %v727
    %2326 = vmatprep.subr.mxu0 %v710
    %2327 = vmatpush1.msra.mxu0 %v709
    %2328 = vmatprep.subr.mxu0 %v692
    %2329 = vmatpush1.msra.mxu0 %v691
    %2330 = vmatprep.subr.mxu0 %v674
    %2331 = vmatpush1.msra.mxu0 %v673
    %2332 = vmatprep.subr.mxu0 %v656
    %2333 = vmatpush1.msra.mxu0 %v655
    %2334 = vmatprep.subr.mxu0 %v638
    %2335 = vmatpush1.msra.mxu0 %v637
    %2336 = vmatprep.subr.mxu0 %v620
    %2337 = vmatpush1.msra.mxu0 %v619
    %2338 = vmatprep.subr.mxu0 %v1178
    %2339 = vmatpush2.msra.mxu0 %v1177
    %2340 = vmatprep.subr.mxu0 %v1160
    %2341 = vmatpush2.msra.mxu0 %v1159
    %2342 = vmatprep.subr.mxu0 %v1142
    %2343 = vmatpush2.msra.mxu0 %v1141
    %2344 = vmatprep.subr.mxu0 %v1124
    %2345 = vmatpush2.msra.mxu0 %v1123
    %2346 = vmatprep.subr.mxu0 %v1106
    %2347 = vmatpush2.msra.mxu0 %v1105
    %2348 = vmatprep.subr.mxu0 %v1088
    %2349 = vmatpush2.msra.mxu0 %v1087
    %2350 = vmatprep.subr.mxu0 %v1070
    %2351 = vmatpush2.msra.mxu0 %v1069
    %2352 = vmatprep.subr.mxu0 %v1052
    %2353 = vmatpush2.msra.mxu0 %v1051
    %2354 = vmatprep.subr.mxu0 %v1034
    %2355 = vmatpush2.msra.mxu0 %v1033
    %2356 = vmatprep.subr.mxu0 %v1016
    %2357 = vmatpush2.msra.mxu0 %v1015
    %2358 = vmatprep.subr.mxu0 %v998
    %2359 = vmatpush2.msra.mxu0 %v997
    %2360 = vmatprep.subr.mxu0 %v980
    %2361 = vmatpush2.msra.mxu0 %v979
    %2362 = vmatprep.subr.mxu0 %v962
    %2363 = vmatpush2.msra.mxu0 %v961
    %2364 = vmatprep.subr.mxu0 %v944
    %2365 = vmatpush2.msra.mxu0 %v943
    %2366 = vmatprep.subr.mxu0 %v926
    %2367 = vmatpush2.msra.mxu0 %v925
    %2368 = vmatprep.subr.mxu0 %v908
    %2369 = vmatpush2.msra.mxu0 %v907
    %2370 = vmatprep.mubr.f32.mxu0 %v30
    %2371 = vmatmul.mubr.f32.gmra.mxu0 %v29
    %v2372 = vpop.f32.mrf.mxu0
    %v2373 = vadd.f32 %v2296, %v2372
    %v2374 = vpop.f32.mrf.mxu0
    %v2375 = vadd.f32 %v2298, %v2374
    %2376 = vmatprep.mubr.f32.mxu0 %v36
    %2377 = vmatmul.mubr.f32.gmra.mxu0 %v35
    %v2378 = vpop.f32.mrf.mxu0
    %v2379 = vadd.f32 %v2302, %v2378
    %v2380 = vpop.f32.mrf.mxu0
    %v2381 = vadd.f32 %v2304, %v2380
    %2382 = vdwg.mxu0
    %2383 = vmatprep.subr.mxu0 %v1466
    %2384 = vmatpush1.msra.mxu0 %v1465
    %2385 = vmatprep.subr.mxu0 %v1448
    %2386 = vmatpush1.msra.mxu0 %v1447
    %2387 = vmatprep.subr.mxu0 %v1430
    %2388 = vmatpush1.msra.mxu0 %v1429
    %2389 = vmatprep.subr.mxu0 %v1412
    %2390 = vmatpush1.msra.mxu0 %v1411
    %2391 = vmatprep.subr.mxu0 %v1394
    %2392 = vmatpush1.msra.mxu0 %v1393
    %2393 = vmatprep.subr.mxu0 %v1376
    %2394 = vmatpush1.msra.mxu0 %v1375
    %2395 = vmatprep.subr.mxu0 %v1358
    %2396 = vmatpush1.msra.mxu0 %v1357
    %2397 = vmatprep.subr.mxu0 %v1340
    %2398 = vmatpush1.msra.mxu0 %v1339
    %2399 = vmatprep.subr.mxu0 %v1322
    %2400 = vmatpush1.msra.mxu0 %v1321
    %2401 = vmatprep.subr.mxu0 %v1304
    %2402 = vmatpush1.msra.mxu0 %v1303
    %2403 = vmatprep.subr.mxu0 %v1286
    %2404 = vmatpush1.msra.mxu0 %v1285
    %2405 = vmatprep.subr.mxu0 %v1268
    %2406 = vmatpush1.msra.mxu0 %v1267
    %2407 = vmatprep.subr.mxu0 %v1250
    %2408 = vmatpush1.msra.mxu0 %v1249
    %2409 = vmatprep.subr.mxu0 %v1232
    %2410 = vmatpush1.msra.mxu0 %v1231
    %2411 = vmatprep.subr.mxu0 %v1214
    %2412 = vmatpush1.msra.mxu0 %v1213
    %2413 = vmatprep.subr.mxu0 %v1196
    %2414 = vmatpush1.msra.mxu0 %v1195
    %2415 = vmatprep.subr.mxu0 %v1754
    %2416 = vmatpush2.msra.mxu0 %v1753
    %2417 = vmatprep.subr.mxu0 %v1736
    %2418 = vmatpush2.msra.mxu0 %v1735
    %2419 = vmatprep.subr.mxu0 %v1718
    %2420 = vmatpush2.msra.mxu0 %v1717
    %2421 = vmatprep.subr.mxu0 %v1700
    %2422 = vmatpush2.msra.mxu0 %v1699
    %2423 = vmatprep.subr.mxu0 %v1682
    %2424 = vmatpush2.msra.mxu0 %v1681
    %2425 = vmatprep.subr.mxu0 %v1664
    %2426 = vmatpush2.msra.mxu0 %v1663
    %2427 = vmatprep.subr.mxu0 %v1646
    %2428 = vmatpush2.msra.mxu0 %v1645
    %2429 = vmatprep.subr.mxu0 %v1628
    %2430 = vmatpush2.msra.mxu0 %v1627
    %2431 = vmatprep.subr.mxu0 %v1610
    %2432 = vmatpush2.msra.mxu0 %v1609
    %2433 = vmatprep.subr.mxu0 %v1592
    %2434 = vmatpush2.msra.mxu0 %v1591
    %2435 = vmatprep.subr.mxu0 %v1574
    %2436 = vmatpush2.msra.mxu0 %v1573
    %2437 = vmatprep.subr.mxu0 %v1556
    %2438 = vmatpush2.msra.mxu0 %v1555
    %2439 = vmatprep.subr.mxu0 %v1538
    %2440 = vmatpush2.msra.mxu0 %v1537
    %2441 = vmatprep.subr.mxu0 %v1520
    %2442 = vmatpush2.msra.mxu0 %v1519
    %2443 = vmatprep.subr.mxu0 %v1502
    %2444 = vmatpush2.msra.mxu0 %v1501
    %2445 = vmatprep.subr.mxu0 %v1484
    %2446 = vmatpush2.msra.mxu0 %v1483
    %2447 = vmatprep.mubr.f32.mxu0 %v32
    %2448 = vmatmul.mubr.f32.gmra.mxu0 %v31
    %v2449 = vpop.f32.mrf.mxu0
    %v2450 = vadd.f32 %v2373, %v2449
    %v2451 = vpop.f32.mrf.mxu0
    %v2452 = vadd.f32 %v2375, %v2451
    %2453 = vmatprep.mubr.f32.mxu0 %v38
    %2454 = vmatmul.mubr.f32.gmra.mxu0 %v37
    %v2455 = vpop.f32.mrf.mxu0
    %v2456 = vadd.f32 %v2379, %v2455
    %v2457 = vpop.f32.mrf.mxu0
    %v2458 = vadd.f32 %v2381, %v2457
    %2459 = vdwg.mxu0
    %2460 = vmatprep.subr.mxu0 %v316
    %2461 = vmatpush1.msra.mxu0 %v315
    %2462 = vmatprep.subr.mxu0 %v298
    %2463 = vmatpush1.msra.mxu0 %v297
    %2464 = vmatprep.subr.mxu0 %v280
    %2465 = vmatpush1.msra.mxu0 %v279
    %2466 = vmatprep.subr.mxu0 %v262
    %2467 = vmatpush1.msra.mxu0 %v261
    %2468 = vmatprep.subr.mxu0 %v244
    %2469 = vmatpush1.msra.mxu0 %v243
    %2470 = vmatprep.subr.mxu0 %v226
    %2471 = vmatpush1.msra.mxu0 %v225
    %2472 = vmatprep.subr.mxu0 %v208
    %2473 = vmatpush1.msra.mxu0 %v207
    %2474 = vmatprep.subr.mxu0 %v190
    %2475 = vmatpush1.msra.mxu0 %v189
    %2476 = vmatprep.subr.mxu0 %v172
    %2477 = vmatpush1.msra.mxu0 %v171
    %2478 = vmatprep.subr.mxu0 %v154
    %2479 = vmatpush1.msra.mxu0 %v153
    %2480 = vmatprep.subr.mxu0 %v136
    %2481 = vmatpush1.msra.mxu0 %v135
    %2482 = vmatprep.subr.mxu0 %v118
    %2483 = vmatpush1.msra.mxu0 %v117
    %2484 = vmatprep.subr.mxu0 %v100
    %2485 = vmatpush1.msra.mxu0 %v99
    %2486 = vmatprep.subr.mxu0 %v82
    %2487 = vmatpush1.msra.mxu0 %v81
    %2488 = vmatprep.subr.mxu0 %v64
    %2489 = vmatpush1.msra.mxu0 %v63
    %2490 = vmatprep.subr.mxu0 %v46
    %2491 = vmatpush1.msra.mxu0 %v45
    %2492 = vmatprep.subr.mxu0 %v604
    %2493 = vmatpush2.msra.mxu0 %v603
    %2494 = vmatprep.subr.mxu0 %v586
    %2495 = vmatpush2.msra.mxu0 %v585
    %2496 = vmatprep.subr.mxu0 %v568
    %2497 = vmatpush2.msra.mxu0 %v567
    %2498 = vmatprep.subr.mxu0 %v550
    %2499 = vmatpush2.msra.mxu0 %v549
    %2500 = vmatprep.subr.mxu0 %v532
    %2501 = vmatpush2.msra.mxu0 %v531
    %2502 = vmatprep.subr.mxu0 %v514
    %2503 = vmatpush2.msra.mxu0 %v513
    %2504 = vmatprep.subr.mxu0 %v496
    %2505 = vmatpush2.msra.mxu0 %v495
    %2506 = vmatprep.subr.mxu0 %v478
    %2507 = vmatpush2.msra.mxu0 %v477
    %2508 = vmatprep.subr.mxu0 %v460
    %2509 = vmatpush2.msra.mxu0 %v459
    %2510 = vmatprep.subr.mxu0 %v442
    %2511 = vmatpush2.msra.mxu0 %v441
    %2512 = vmatprep.subr.mxu0 %v424
    %2513 = vmatpush2.msra.mxu0 %v423
    %2514 = vmatprep.subr.mxu0 %v406
    %2515 = vmatpush2.msra.mxu0 %v405
    %2516 = vmatprep.subr.mxu0 %v388
    %2517 = vmatpush2.msra.mxu0 %v387
    %2518 = vmatprep.subr.mxu0 %v370
    %2519 = vmatpush2.msra.mxu0 %v369
    %2520 = vmatprep.subr.mxu0 %v352
    %2521 = vmatpush2.msra.mxu0 %v351
    %2522 = vmatprep.subr.mxu0 %v334
    %2523 = vmatpush2.msra.mxu0 %v333
    %2524 = vmatprep.mubr.f32.mxu0 %v28
    %2525 = vmatmul.mubr.f32.gmra.mxu0 %v27
    %v2526 = vpop.f32.mrf.mxu0
    %v2527 = vadd.f32 0.0, %v2526
    %v2528 = vpop.f32.mrf.mxu0
    %v2529 = vadd.f32 0.0, %v2528
    %2530 = vmatprep.mubr.f32.mxu0 %v34
    %2531 = vmatmul.mubr.f32.gmra.mxu0 %v33
    %v2532 = vpop.f32.mrf.mxu0
    %v2533 = vadd.f32 0.0, %v2532
    %v2534 = vpop.f32.mrf.mxu0
    %v2535 = vadd.f32 0.0, %v2534
    %2536 = vdwg.mxu0
    %2537 = vmatprep.subr.mxu0 %v892
    %2538 = vmatpush1.msra.mxu0 %v891
    %2539 = vmatprep.subr.mxu0 %v874
    %2540 = vmatpush1.msra.mxu0 %v873
    %2541 = vmatprep.subr.mxu0 %v856
    %2542 = vmatpush1.msra.mxu0 %v855
    %2543 = vmatprep.subr.mxu0 %v838
    %2544 = vmatpush1.msra.mxu0 %v837
    %2545 = vmatprep.subr.mxu0 %v820
    %2546 = vmatpush1.msra.mxu0 %v819
    %2547 = vmatprep.subr.mxu0 %v802
    %2548 = vmatpush1.msra.mxu0 %v801
    %2549 = vmatprep.subr.mxu0 %v784
    %2550 = vmatpush1.msra.mxu0 %v783
    %2551 = vmatprep.subr.mxu0 %v766
    %2552 = vmatpush1.msra.mxu0 %v765
    %2553 = vmatprep.subr.mxu0 %v748
    %2554 = vmatpush1.msra.mxu0 %v747
    %2555 = vmatprep.subr.mxu0 %v730
    %2556 = vmatpush1.msra.mxu0 %v729
    %2557 = vmatprep.subr.mxu0 %v712
    %2558 = vmatpush1.msra.mxu0 %v711
    %2559 = vmatprep.subr.mxu0 %v694
    %2560 = vmatpush1.msra.mxu0 %v693
    %2561 = vmatprep.subr.mxu0 %v676
    %2562 = vmatpush1.msra.mxu0 %v675
    %2563 = vmatprep.subr.mxu0 %v658
    %2564 = vmatpush1.msra.mxu0 %v657
    %2565 = vmatprep.subr.mxu0 %v640
    %2566 = vmatpush1.msra.mxu0 %v639
    %2567 = vmatprep.subr.mxu0 %v622
    %2568 = vmatpush1.msra.mxu0 %v621
    %2569 = vmatprep.subr.mxu0 %v1180
    %2570 = vmatpush2.msra.mxu0 %v1179
    %2571 = vmatprep.subr.mxu0 %v1162
    %2572 = vmatpush2.msra.mxu0 %v1161
    %2573 = vmatprep.subr.mxu0 %v1144
    %2574 = vmatpush2.msra.mxu0 %v1143
    %2575 = vmatprep.subr.mxu0 %v1126
    %2576 = vmatpush2.msra.mxu0 %v1125
    %2577 = vmatprep.subr.mxu0 %v1108
    %2578 = vmatpush2.msra.mxu0 %v1107
    %2579 = vmatprep.subr.mxu0 %v1090
    %2580 = vmatpush2.msra.mxu0 %v1089
    %2581 = vmatprep.subr.mxu0 %v1072
    %2582 = vmatpush2.msra.mxu0 %v1071
    %2583 = vmatprep.subr.mxu0 %v1054
    %2584 = vmatpush2.msra.mxu0 %v1053
    %2585 = vmatprep.subr.mxu0 %v1036
    %2586 = vmatpush2.msra.mxu0 %v1035
    %2587 = vmatprep.subr.mxu0 %v1018
    %2588 = vmatpush2.msra.mxu0 %v1017
    %2589 = vmatprep.subr.mxu0 %v1000
    %2590 = vmatpush2.msra.mxu0 %v999
    %2591 = vmatprep.subr.mxu0 %v982
    %2592 = vmatpush2.msra.mxu0 %v981
    %2593 = vmatprep.subr.mxu0 %v964
    %2594 = vmatpush2.msra.mxu0 %v963
    %2595 = vmatprep.subr.mxu0 %v946
    %2596 = vmatpush2.msra.mxu0 %v945
    %2597 = vmatprep.subr.mxu0 %v928
    %2598 = vmatpush2.msra.mxu0 %v927
    %2599 = vmatprep.subr.mxu0 %v910
    %2600 = vmatpush2.msra.mxu0 %v909
    %2601 = vmatprep.mubr.f32.mxu0 %v30
    %2602 = vmatmul.mubr.f32.gmra.mxu0 %v29
    %v2603 = vpop.f32.mrf.mxu0
    %v2604 = vadd.f32 %v2527, %v2603
    %v2605 = vpop.f32.mrf.mxu0
    %v2606 = vadd.f32 %v2529, %v2605
    %2607 = vmatprep.mubr.f32.mxu0 %v36
    %2608 = vmatmul.mubr.f32.gmra.mxu0 %v35
    %v2609 = vpop.f32.mrf.mxu0
    %v2610 = vadd.f32 %v2533, %v2609
    %v2611 = vpop.f32.mrf.mxu0
    %v2612 = vadd.f32 %v2535, %v2611
    %2613 = vdwg.mxu0
    %2614 = vmatprep.subr.mxu0 %v1468
    %2615 = vmatpush1.msra.mxu0 %v1467
    %2616 = vmatprep.subr.mxu0 %v1450
    %2617 = vmatpush1.msra.mxu0 %v1449
    %2618 = vmatprep.subr.mxu0 %v1432
    %2619 = vmatpush1.msra.mxu0 %v1431
    %2620 = vmatprep.subr.mxu0 %v1414
    %2621 = vmatpush1.msra.mxu0 %v1413
    %2622 = vmatprep.subr.mxu0 %v1396
    %2623 = vmatpush1.msra.mxu0 %v1395
    %2624 = vmatprep.subr.mxu0 %v1378
    %2625 = vmatpush1.msra.mxu0 %v1377
    %2626 = vmatprep.subr.mxu0 %v1360
    %2627 = vmatpush1.msra.mxu0 %v1359
    %2628 = vmatprep.subr.mxu0 %v1342
    %2629 = vmatpush1.msra.mxu0 %v1341
    %2630 = vmatprep.subr.mxu0 %v1324
    %2631 = vmatpush1.msra.mxu0 %v1323
    %2632 = vmatprep.subr.mxu0 %v1306
    %2633 = vmatpush1.msra.mxu0 %v1305
    %2634 = vmatprep.subr.mxu0 %v1288
    %2635 = vmatpush1.msra.mxu0 %v1287
    %2636 = vmatprep.subr.mxu0 %v1270
    %2637 = vmatpush1.msra.mxu0 %v1269
    %2638 = vmatprep.subr.mxu0 %v1252
    %2639 = vmatpush1.msra.mxu0 %v1251
    %2640 = vmatprep.subr.mxu0 %v1234
    %2641 = vmatpush1.msra.mxu0 %v1233
    %2642 = vmatprep.subr.mxu0 %v1216
    %2643 = vmatpush1.msra.mxu0 %v1215
    %2644 = vmatprep.subr.mxu0 %v1198
    %2645 = vmatpush1.msra.mxu0 %v1197
    %2646 = vmatprep.subr.mxu0 %v1756
    %2647 = vmatpush2.msra.mxu0 %v1755
    %2648 = vmatprep.subr.mxu0 %v1738
    %2649 = vmatpush2.msra.mxu0 %v1737
    %2650 = vmatprep.subr.mxu0 %v1720
    %2651 = vmatpush2.msra.mxu0 %v1719
    %2652 = vmatprep.subr.mxu0 %v1702
    %2653 = vmatpush2.msra.mxu0 %v1701
    %2654 = vmatprep.subr.mxu0 %v1684
    %2655 = vmatpush2.msra.mxu0 %v1683
    %2656 = vmatprep.subr.mxu0 %v1666
    %2657 = vmatpush2.msra.mxu0 %v1665
    %2658 = vmatprep.subr.mxu0 %v1648
    %2659 = vmatpush2.msra.mxu0 %v1647
    %2660 = vmatprep.subr.mxu0 %v1630
    %2661 = vmatpush2.msra.mxu0 %v1629
    %2662 = vmatprep.subr.mxu0 %v1612
    %2663 = vmatpush2.msra.mxu0 %v1611
    %2664 = vmatprep.subr.mxu0 %v1594
    %2665 = vmatpush2.msra.mxu0 %v1593
    %2666 = vmatprep.subr.mxu0 %v1576
    %2667 = vmatpush2.msra.mxu0 %v1575
    %2668 = vmatprep.subr.mxu0 %v1558
    %2669 = vmatpush2.msra.mxu0 %v1557
    %2670 = vmatprep.subr.mxu0 %v1540
    %2671 = vmatpush2.msra.mxu0 %v1539
    %2672 = vmatprep.subr.mxu0 %v1522
    %2673 = vmatpush2.msra.mxu0 %v1521
    %2674 = vmatprep.subr.mxu0 %v1504
    %2675 = vmatpush2.msra.mxu0 %v1503
    %2676 = vmatprep.subr.mxu0 %v1486
    %2677 = vmatpush2.msra.mxu0 %v1485
    %2678 = vmatprep.mubr.f32.mxu0 %v32
    %2679 = vmatmul.mubr.f32.gmra.mxu0 %v31
    %v2680 = vpop.f32.mrf.mxu0
    %v2681 = vadd.f32 %v2604, %v2680
    %v2682 = vpop.f32.mrf.mxu0
    %v2683 = vadd.f32 %v2606, %v2682
    %2684 = vmatprep.mubr.f32.mxu0 %v38
    %2685 = vmatmul.mubr.f32.gmra.mxu0 %v37
    %v2686 = vpop.f32.mrf.mxu0
    %v2687 = vadd.f32 %v2610, %v2686
    %v2688 = vpop.f32.mrf.mxu0
    %v2689 = vadd.f32 %v2612, %v2688
    %2690 = vdwg.mxu0
    %2691 = vmatprep.subr.mxu0 %v318
    %2692 = vmatpush1.msra.mxu0 %v317
    %2693 = vmatprep.subr.mxu0 %v300
    %2694 = vmatpush1.msra.mxu0 %v299
    %2695 = vmatprep.subr.mxu0 %v282
    %2696 = vmatpush1.msra.mxu0 %v281
    %2697 = vmatprep.subr.mxu0 %v264
    %2698 = vmatpush1.msra.mxu0 %v263
    %2699 = vmatprep.subr.mxu0 %v246
    %2700 = vmatpush1.msra.mxu0 %v245
    %2701 = vmatprep.subr.mxu0 %v228
    %2702 = vmatpush1.msra.mxu0 %v227
    %2703 = vmatprep.subr.mxu0 %v210
    %2704 = vmatpush1.msra.mxu0 %v209
    %2705 = vmatprep.subr.mxu0 %v192
    %2706 = vmatpush1.msra.mxu0 %v191
    %2707 = vmatprep.subr.mxu0 %v174
    %2708 = vmatpush1.msra.mxu0 %v173
    %2709 = vmatprep.subr.mxu0 %v156
    %2710 = vmatpush1.msra.mxu0 %v155
    %2711 = vmatprep.subr.mxu0 %v138
    %2712 = vmatpush1.msra.mxu0 %v137
    %2713 = vmatprep.subr.mxu0 %v120
    %2714 = vmatpush1.msra.mxu0 %v119
    %2715 = vmatprep.subr.mxu0 %v102
    %2716 = vmatpush1.msra.mxu0 %v101
    %2717 = vmatprep.subr.mxu0 %v84
    %2718 = vmatpush1.msra.mxu0 %v83
    %2719 = vmatprep.subr.mxu0 %v66
    %2720 = vmatpush1.msra.mxu0 %v65
    %2721 = vmatprep.subr.mxu0 %v48
    %2722 = vmatpush1.msra.mxu0 %v47
    %2723 = vmatprep.subr.mxu0 %v606
    %2724 = vmatpush2.msra.mxu0 %v605
    %2725 = vmatprep.subr.mxu0 %v588
    %2726 = vmatpush2.msra.mxu0 %v587
    %2727 = vmatprep.subr.mxu0 %v570
    %2728 = vmatpush2.msra.mxu0 %v569
    %2729 = vmatprep.subr.mxu0 %v552
    %2730 = vmatpush2.msra.mxu0 %v551
    %2731 = vmatprep.subr.mxu0 %v534
    %2732 = vmatpush2.msra.mxu0 %v533
    %2733 = vmatprep.subr.mxu0 %v516
    %2734 = vmatpush2.msra.mxu0 %v515
    %2735 = vmatprep.subr.mxu0 %v498
    %2736 = vmatpush2.msra.mxu0 %v497
    %2737 = vmatprep.subr.mxu0 %v480
    %2738 = vmatpush2.msra.mxu0 %v479
    %2739 = vmatprep.subr.mxu0 %v462
    %2740 = vmatpush2.msra.mxu0 %v461
    %2741 = vmatprep.subr.mxu0 %v444
    %2742 = vmatpush2.msra.mxu0 %v443
    %2743 = vmatprep.subr.mxu0 %v426
    %2744 = vmatpush2.msra.mxu0 %v425
    %2745 = vmatprep.subr.mxu0 %v408
    %2746 = vmatpush2.msra.mxu0 %v407
    %2747 = vmatprep.subr.mxu0 %v390
    %2748 = vmatpush2.msra.mxu0 %v389
    %2749 = vmatprep.subr.mxu0 %v372
    %2750 = vmatpush2.msra.mxu0 %v371
    %2751 = vmatprep.subr.mxu0 %v354
    %2752 = vmatpush2.msra.mxu0 %v353
    %2753 = vmatprep.subr.mxu0 %v336
    %2754 = vmatpush2.msra.mxu0 %v335
    %2755 = vmatprep.mubr.f32.mxu0 %v28
    %2756 = vmatmul.mubr.f32.gmra.mxu0 %v27
    %v2757 = vpop.f32.mrf.mxu0
    %v2758 = vadd.f32 0.0, %v2757
    %v2759 = vpop.f32.mrf.mxu0
    %v2760 = vadd.f32 0.0, %v2759
    %2761 = vmatprep.mubr.f32.mxu0 %v34
    %2762 = vmatmul.mubr.f32.gmra.mxu0 %v33
    %v2763 = vpop.f32.mrf.mxu0
    %v2764 = vadd.f32 0.0, %v2763
    %v2765 = vpop.f32.mrf.mxu0
    %v2766 = vadd.f32 0.0, %v2765
    %2767 = vdwg.mxu0
    %2768 = vmatprep.subr.mxu0 %v894
    %2769 = vmatpush1.msra.mxu0 %v893
    %2770 = vmatprep.subr.mxu0 %v876
    %2771 = vmatpush1.msra.mxu0 %v875
    %2772 = vmatprep.subr.mxu0 %v858
    %2773 = vmatpush1.msra.mxu0 %v857
    %2774 = vmatprep.subr.mxu0 %v840
    %2775 = vmatpush1.msra.mxu0 %v839
    %2776 = vmatprep.subr.mxu0 %v822
    %2777 = vmatpush1.msra.mxu0 %v821
    %2778 = vmatprep.subr.mxu0 %v804
    %2779 = vmatpush1.msra.mxu0 %v803
    %2780 = vmatprep.subr.mxu0 %v786
    %2781 = vmatpush1.msra.mxu0 %v785
    %2782 = vmatprep.subr.mxu0 %v768
    %2783 = vmatpush1.msra.mxu0 %v767
    %2784 = vmatprep.subr.mxu0 %v750
    %2785 = vmatpush1.msra.mxu0 %v749
    %2786 = vmatprep.subr.mxu0 %v732
    %2787 = vmatpush1.msra.mxu0 %v731
    %2788 = vmatprep.subr.mxu0 %v714
    %2789 = vmatpush1.msra.mxu0 %v713
    %2790 = vmatprep.subr.mxu0 %v696
    %2791 = vmatpush1.msra.mxu0 %v695
    %2792 = vmatprep.subr.mxu0 %v678
    %2793 = vmatpush1.msra.mxu0 %v677
    %2794 = vmatprep.subr.mxu0 %v660
    %2795 = vmatpush1.msra.mxu0 %v659
    %2796 = vmatprep.subr.mxu0 %v642
    %2797 = vmatpush1.msra.mxu0 %v641
    %2798 = vmatprep.subr.mxu0 %v624
    %2799 = vmatpush1.msra.mxu0 %v623
    %2800 = vmatprep.subr.mxu0 %v1182
    %2801 = vmatpush2.msra.mxu0 %v1181
    %2802 = vmatprep.subr.mxu0 %v1164
    %2803 = vmatpush2.msra.mxu0 %v1163
    %2804 = vmatprep.subr.mxu0 %v1146
    %2805 = vmatpush2.msra.mxu0 %v1145
    %2806 = vmatprep.subr.mxu0 %v1128
    %2807 = vmatpush2.msra.mxu0 %v1127
    %2808 = vmatprep.subr.mxu0 %v1110
    %2809 = vmatpush2.msra.mxu0 %v1109
    %2810 = vmatprep.subr.mxu0 %v1092
    %2811 = vmatpush2.msra.mxu0 %v1091
    %2812 = vmatprep.subr.mxu0 %v1074
    %2813 = vmatpush2.msra.mxu0 %v1073
    %2814 = vmatprep.subr.mxu0 %v1056
    %2815 = vmatpush2.msra.mxu0 %v1055
    %2816 = vmatprep.subr.mxu0 %v1038
    %2817 = vmatpush2.msra.mxu0 %v1037
    %2818 = vmatprep.subr.mxu0 %v1020
    %2819 = vmatpush2.msra.mxu0 %v1019
    %2820 = vmatprep.subr.mxu0 %v1002
    %2821 = vmatpush2.msra.mxu0 %v1001
    %2822 = vmatprep.subr.mxu0 %v984
    %2823 = vmatpush2.msra.mxu0 %v983
    %2824 = vmatprep.subr.mxu0 %v966
    %2825 = vmatpush2.msra.mxu0 %v965
    %2826 = vmatprep.subr.mxu0 %v948
    %2827 = vmatpush2.msra.mxu0 %v947
    %2828 = vmatprep.subr.mxu0 %v930
    %2829 = vmatpush2.msra.mxu0 %v929
    %2830 = vmatprep.subr.mxu0 %v912
    %2831 = vmatpush2.msra.mxu0 %v911
    %2832 = vmatprep.mubr.f32.mxu0 %v30
    %2833 = vmatmul.mubr.f32.gmra.mxu0 %v29
    %v2834 = vpop.f32.mrf.mxu0
    %v2835 = vadd.f32 %v2758, %v2834
    %v2836 = vpop.f32.mrf.mxu0
    %v2837 = vadd.f32 %v2760, %v2836
    %2838 = vmatprep.mubr.f32.mxu0 %v36
    %2839 = vmatmul.mubr.f32.gmra.mxu0 %v35
    %v2840 = vpop.f32.mrf.mxu0
    %v2841 = vadd.f32 %v2764, %v2840
    %v2842 = vpop.f32.mrf.mxu0
    %v2843 = vadd.f32 %v2766, %v2842
    %2844 = vdwg.mxu0
    %2845 = vmatprep.subr.mxu0 %v1470
    %2846 = vmatpush1.msra.mxu0 %v1469
    %2847 = vmatprep.subr.mxu0 %v1452
    %2848 = vmatpush1.msra.mxu0 %v1451
    %2849 = vmatprep.subr.mxu0 %v1434
    %2850 = vmatpush1.msra.mxu0 %v1433
    %2851 = vmatprep.subr.mxu0 %v1416
    %2852 = vmatpush1.msra.mxu0 %v1415
    %2853 = vmatprep.subr.mxu0 %v1398
    %2854 = vmatpush1.msra.mxu0 %v1397
    %2855 = vmatprep.subr.mxu0 %v1380
    %2856 = vmatpush1.msra.mxu0 %v1379
    %2857 = vmatprep.subr.mxu0 %v1362
    %2858 = vmatpush1.msra.mxu0 %v1361
    %2859 = vmatprep.subr.mxu0 %v1344
    %2860 = vmatpush1.msra.mxu0 %v1343
    %2861 = vmatprep.subr.mxu0 %v1326
    %2862 = vmatpush1.msra.mxu0 %v1325
    %2863 = vmatprep.subr.mxu0 %v1308
    %2864 = vmatpush1.msra.mxu0 %v1307
    %2865 = vmatprep.subr.mxu0 %v1290
    %2866 = vmatpush1.msra.mxu0 %v1289
    %2867 = vmatprep.subr.mxu0 %v1272
    %2868 = vmatpush1.msra.mxu0 %v1271
    %2869 = vmatprep.subr.mxu0 %v1254
    %2870 = vmatpush1.msra.mxu0 %v1253
    %2871 = vmatprep.subr.mxu0 %v1236
    %2872 = vmatpush1.msra.mxu0 %v1235
    %2873 = vmatprep.subr.mxu0 %v1218
    %2874 = vmatpush1.msra.mxu0 %v1217
    %2875 = vmatprep.subr.mxu0 %v1200
    %2876 = vmatpush1.msra.mxu0 %v1199
    %2877 = vmatprep.subr.mxu0 %v1758
    %2878 = vmatpush2.msra.mxu0 %v1757
    %2879 = vmatprep.subr.mxu0 %v1740
    %2880 = vmatpush2.msra.mxu0 %v1739
    %2881 = vmatprep.subr.mxu0 %v1722
    %2882 = vmatpush2.msra.mxu0 %v1721
    %2883 = vmatprep.subr.mxu0 %v1704
    %2884 = vmatpush2.msra.mxu0 %v1703
    %2885 = vmatprep.subr.mxu0 %v1686
    %2886 = vmatpush2.msra.mxu0 %v1685
    %2887 = vmatprep.subr.mxu0 %v1668
    %2888 = vmatpush2.msra.mxu0 %v1667
    %2889 = vmatprep.subr.mxu0 %v1650
    %2890 = vmatpush2.msra.mxu0 %v1649
    %2891 = vmatprep.subr.mxu0 %v1632
    %2892 = vmatpush2.msra.mxu0 %v1631
    %2893 = vmatprep.subr.mxu0 %v1614
    %2894 = vmatpush2.msra.mxu0 %v1613
    %2895 = vmatprep.subr.mxu0 %v1596
    %2896 = vmatpush2.msra.mxu0 %v1595
    %2897 = vmatprep.subr.mxu0 %v1578
    %2898 = vmatpush2.msra.mxu0 %v1577
    %2899 = vmatprep.subr.mxu0 %v1560
    %2900 = vmatpush2.msra.mxu0 %v1559
    %2901 = vmatprep.subr.mxu0 %v1542
    %2902 = vmatpush2.msra.mxu0 %v1541
    %2903 = vmatprep.subr.mxu0 %v1524
    %2904 = vmatpush2.msra.mxu0 %v1523
    %2905 = vmatprep.subr.mxu0 %v1506
    %2906 = vmatpush2.msra.mxu0 %v1505
    %2907 = vmatprep.subr.mxu0 %v1488
    %2908 = vmatpush2.msra.mxu0 %v1487
    %2909 = vmatprep.mubr.f32.mxu0 %v32
    %2910 = vmatmul.mubr.f32.gmra.mxu0 %v31
    %v2911 = vpop.f32.mrf.mxu0
    %v2912 = vadd.f32 %v2835, %v2911
    %v2913 = vpop.f32.mrf.mxu0
    %v2914 = vadd.f32 %v2837, %v2913
    %2915 = vmatprep.mubr.f32.mxu0 %v38
    %2916 = vmatmul.mubr.f32.gmra.mxu0 %v37
    %v2917 = vpop.f32.mrf.mxu0
    %v2918 = vadd.f32 %v2841, %v2917
    %v2919 = vpop.f32.mrf.mxu0
    %v2920 = vadd.f32 %v2843, %v2919
    %2921 = vdwg.mxu0
    %2922 = vmatprep.subr.mxu0 %v320
    %2923 = vmatpush1.msra.mxu0 %v319
    %2924 = vmatprep.subr.mxu0 %v302
    %2925 = vmatpush1.msra.mxu0 %v301
    %2926 = vmatprep.subr.mxu0 %v284
    %2927 = vmatpush1.msra.mxu0 %v283
    %2928 = vmatprep.subr.mxu0 %v266
    %2929 = vmatpush1.msra.mxu0 %v265
    %2930 = vmatprep.subr.mxu0 %v248
    %2931 = vmatpush1.msra.mxu0 %v247
    %2932 = vmatprep.subr.mxu0 %v230
    %2933 = vmatpush1.msra.mxu0 %v229
    %2934 = vmatprep.subr.mxu0 %v212
    %2935 = vmatpush1.msra.mxu0 %v211
    %2936 = vmatprep.subr.mxu0 %v194
    %2937 = vmatpush1.msra.mxu0 %v193
    %2938 = vmatprep.subr.mxu0 %v176
    %2939 = vmatpush1.msra.mxu0 %v175
    %2940 = vmatprep.subr.mxu0 %v158
    %2941 = vmatpush1.msra.mxu0 %v157
    %2942 = vmatprep.subr.mxu0 %v140
    %2943 = vmatpush1.msra.mxu0 %v139
    %2944 = vmatprep.subr.mxu0 %v122
    %2945 = vmatpush1.msra.mxu0 %v121
    %2946 = vmatprep.subr.mxu0 %v104
    %2947 = vmatpush1.msra.mxu0 %v103
    %2948 = vmatprep.subr.mxu0 %v86
    %2949 = vmatpush1.msra.mxu0 %v85
    %2950 = vmatprep.subr.mxu0 %v68
    %2951 = vmatpush1.msra.mxu0 %v67
    %2952 = vmatprep.subr.mxu0 %v50
    %2953 = vmatpush1.msra.mxu0 %v49
    %2954 = vmatprep.subr.mxu0 %v608
    %2955 = vmatpush2.msra.mxu0 %v607
    %2956 = vmatprep.subr.mxu0 %v590
    %2957 = vmatpush2.msra.mxu0 %v589
    %2958 = vmatprep.subr.mxu0 %v572
    %2959 = vmatpush2.msra.mxu0 %v571
    %2960 = vmatprep.subr.mxu0 %v554
    %2961 = vmatpush2.msra.mxu0 %v553
    %2962 = vmatprep.subr.mxu0 %v536
    %2963 = vmatpush2.msra.mxu0 %v535
    %2964 = vmatprep.subr.mxu0 %v518
    %2965 = vmatpush2.msra.mxu0 %v517
    %2966 = vmatprep.subr.mxu0 %v500
    %2967 = vmatpush2.msra.mxu0 %v499
    %2968 = vmatprep.subr.mxu0 %v482
    %2969 = vmatpush2.msra.mxu0 %v481
    %2970 = vmatprep.subr.mxu0 %v464
    %2971 = vmatpush2.msra.mxu0 %v463
    %2972 = vmatprep.subr.mxu0 %v446
    %2973 = vmatpush2.msra.mxu0 %v445
    %2974 = vmatprep.subr.mxu0 %v428
    %2975 = vmatpush2.msra.mxu0 %v427
    %2976 = vmatprep.subr.mxu0 %v410
    %2977 = vmatpush2.msra.mxu0 %v409
    %2978 = vmatprep.subr.mxu0 %v392
    %2979 = vmatpush2.msra.mxu0 %v391
    %2980 = vmatprep.subr.mxu0 %v374
    %2981 = vmatpush2.msra.mxu0 %v373
    %2982 = vmatprep.subr.mxu0 %v356
    %2983 = vmatpush2.msra.mxu0 %v355
    %2984 = vmatprep.subr.mxu0 %v338
    %2985 = vmatpush2.msra.mxu0 %v337
    %2986 = vmatprep.mubr.f32.mxu0 %v28
    %2987 = vmatmul.mubr.f32.gmra.mxu0 %v27
    %v2988 = vpop.f32.mrf.mxu0
    %v2989 = vadd.f32 0.0, %v2988
    %v2990 = vpop.f32.mrf.mxu0
    %v2991 = vadd.f32 0.0, %v2990
    %2992 = vmatprep.mubr.f32.mxu0 %v34
    %2993 = vmatmul.mubr.f32.gmra.mxu0 %v33
    %v2994 = vpop.f32.mrf.mxu0
    %v2995 = vadd.f32 0.0, %v2994
    %v2996 = vpop.f32.mrf.mxu0
    %v2997 = vadd.f32 0.0, %v2996
    %2998 = vdwg.mxu0
    %2999 = vmatprep.subr.mxu0 %v896
    %3000 = vmatpush1.msra.mxu0 %v895
    %3001 = vmatprep.subr.mxu0 %v878
    %3002 = vmatpush1.msra.mxu0 %v877
    %3003 = vmatprep.subr.mxu0 %v860
    %3004 = vmatpush1.msra.mxu0 %v859
    %3005 = vmatprep.subr.mxu0 %v842
    %3006 = vmatpush1.msra.mxu0 %v841
    %3007 = vmatprep.subr.mxu0 %v824
    %3008 = vmatpush1.msra.mxu0 %v823
    %3009 = vmatprep.subr.mxu0 %v806
    %3010 = vmatpush1.msra.mxu0 %v805
    %3011 = vmatprep.subr.mxu0 %v788
    %3012 = vmatpush1.msra.mxu0 %v787
    %3013 = vmatprep.subr.mxu0 %v770
    %3014 = vmatpush1.msra.mxu0 %v769
    %3015 = vmatprep.subr.mxu0 %v752
    %3016 = vmatpush1.msra.mxu0 %v751
    %3017 = vmatprep.subr.mxu0 %v734
    %3018 = vmatpush1.msra.mxu0 %v733
    %3019 = vmatprep.subr.mxu0 %v716
    %3020 = vmatpush1.msra.mxu0 %v715
    %3021 = vmatprep.subr.mxu0 %v698
    %3022 = vmatpush1.msra.mxu0 %v697
    %3023 = vmatprep.subr.mxu0 %v680
    %3024 = vmatpush1.msra.mxu0 %v679
    %3025 = vmatprep.subr.mxu0 %v662
    %3026 = vmatpush1.msra.mxu0 %v661
    %3027 = vmatprep.subr.mxu0 %v644
    %3028 = vmatpush1.msra.mxu0 %v643
    %3029 = vmatprep.subr.mxu0 %v626
    %3030 = vmatpush1.msra.mxu0 %v625
    %3031 = vmatprep.subr.mxu0 %v1184
    %3032 = vmatpush2.msra.mxu0 %v1183
    %3033 = vmatprep.subr.mxu0 %v1166
    %3034 = vmatpush2.msra.mxu0 %v1165
    %3035 = vmatprep.subr.mxu0 %v1148
    %3036 = vmatpush2.msra.mxu0 %v1147
    %3037 = vmatprep.subr.mxu0 %v1130
    %3038 = vmatpush2.msra.mxu0 %v1129
    %3039 = vmatprep.subr.mxu0 %v1112
    %3040 = vmatpush2.msra.mxu0 %v1111
    %3041 = vmatprep.subr.mxu0 %v1094
    %3042 = vmatpush2.msra.mxu0 %v1093
    %3043 = vmatprep.subr.mxu0 %v1076
    %3044 = vmatpush2.msra.mxu0 %v1075
    %3045 = vmatprep.subr.mxu0 %v1058
    %3046 = vmatpush2.msra.mxu0 %v1057
    %3047 = vmatprep.subr.mxu0 %v1040
    %3048 = vmatpush2.msra.mxu0 %v1039
    %3049 = vmatprep.subr.mxu0 %v1022
    %3050 = vmatpush2.msra.mxu0 %v1021
    %3051 = vmatprep.subr.mxu0 %v1004
    %3052 = vmatpush2.msra.mxu0 %v1003
    %3053 = vmatprep.subr.mxu0 %v986
    %3054 = vmatpush2.msra.mxu0 %v985
    %3055 = vmatprep.subr.mxu0 %v968
    %3056 = vmatpush2.msra.mxu0 %v967
    %3057 = vmatprep.subr.mxu0 %v950
    %3058 = vmatpush2.msra.mxu0 %v949
    %3059 = vmatprep.subr.mxu0 %v932
    %3060 = vmatpush2.msra.mxu0 %v931
    %3061 = vmatprep.subr.mxu0 %v914
    %3062 = vmatpush2.msra.mxu0 %v913
    %3063 = vmatprep.mubr.f32.mxu0 %v30
    %3064 = vmatmul.mubr.f32.gmra.mxu0 %v29
    %v3065 = vpop.f32.mrf.mxu0
    %v3066 = vadd.f32 %v2989, %v3065
    %v3067 = vpop.f32.mrf.mxu0
    %v3068 = vadd.f32 %v2991, %v3067
    %3069 = vmatprep.mubr.f32.mxu0 %v36
    %3070 = vmatmul.mubr.f32.gmra.mxu0 %v35
    %v3071 = vpop.f32.mrf.mxu0
    %v3072 = vadd.f32 %v2995, %v3071
    %v3073 = vpop.f32.mrf.mxu0
    %v3074 = vadd.f32 %v2997, %v3073
    %3075 = vdwg.mxu0
    %3076 = vmatprep.subr.mxu0 %v1472
    %3077 = vmatpush1.msra.mxu0 %v1471
    %3078 = vmatprep.subr.mxu0 %v1454
    %3079 = vmatpush1.msra.mxu0 %v1453
    %3080 = vmatprep.subr.mxu0 %v1436
    %3081 = vmatpush1.msra.mxu0 %v1435
    %3082 = vmatprep.subr.mxu0 %v1418
    %3083 = vmatpush1.msra.mxu0 %v1417
    %3084 = vmatprep.subr.mxu0 %v1400
    %3085 = vmatpush1.msra.mxu0 %v1399
    %3086 = vmatprep.subr.mxu0 %v1382
    %3087 = vmatpush1.msra.mxu0 %v1381
    %3088 = vmatprep.subr.mxu0 %v1364
    %3089 = vmatpush1.msra.mxu0 %v1363
    %3090 = vmatprep.subr.mxu0 %v1346
    %3091 = vmatpush1.msra.mxu0 %v1345
    %3092 = vmatprep.subr.mxu0 %v1328
    %3093 = vmatpush1.msra.mxu0 %v1327
    %3094 = vmatprep.subr.mxu0 %v1310
    %3095 = vmatpush1.msra.mxu0 %v1309
    %3096 = vmatprep.subr.mxu0 %v1292
    %3097 = vmatpush1.msra.mxu0 %v1291
    %3098 = vmatprep.subr.mxu0 %v1274
    %3099 = vmatpush1.msra.mxu0 %v1273
    %3100 = vmatprep.subr.mxu0 %v1256
    %3101 = vmatpush1.msra.mxu0 %v1255
    %3102 = vmatprep.subr.mxu0 %v1238
    %3103 = vmatpush1.msra.mxu0 %v1237
    %3104 = vmatprep.subr.mxu0 %v1220
    %3105 = vmatpush1.msra.mxu0 %v1219
    %3106 = vmatprep.subr.mxu0 %v1202
    %3107 = vmatpush1.msra.mxu0 %v1201
    %3108 = vmatprep.subr.mxu0 %v1760
    %3109 = vmatpush2.msra.mxu0 %v1759
    %3110 = vmatprep.subr.mxu0 %v1742
    %3111 = vmatpush2.msra.mxu0 %v1741
    %3112 = vmatprep.subr.mxu0 %v1724
    %3113 = vmatpush2.msra.mxu0 %v1723
    %3114 = vmatprep.subr.mxu0 %v1706
    %3115 = vmatpush2.msra.mxu0 %v1705
    %3116 = vmatprep.subr.mxu0 %v1688
    %3117 = vmatpush2.msra.mxu0 %v1687
    %3118 = vmatprep.subr.mxu0 %v1670
    %3119 = vmatpush2.msra.mxu0 %v1669
    %3120 = vmatprep.subr.mxu0 %v1652
    %3121 = vmatpush2.msra.mxu0 %v1651
    %3122 = vmatprep.subr.mxu0 %v1634
    %3123 = vmatpush2.msra.mxu0 %v1633
    %3124 = vmatprep.subr.mxu0 %v1616
    %3125 = vmatpush2.msra.mxu0 %v1615
    %3126 = vmatprep.subr.mxu0 %v1598
    %3127 = vmatpush2.msra.mxu0 %v1597
    %3128 = vmatprep.subr.mxu0 %v1580
    %3129 = vmatpush2.msra.mxu0 %v1579
    %3130 = vmatprep.subr.mxu0 %v1562
    %3131 = vmatpush2.msra.mxu0 %v1561
    %3132 = vmatprep.subr.mxu0 %v1544
    %3133 = vmatpush2.msra.mxu0 %v1543
    %3134 = vmatprep.subr.mxu0 %v1526
    %3135 = vmatpush2.msra.mxu0 %v1525
    %3136 = vmatprep.subr.mxu0 %v1508
    %3137 = vmatpush2.msra.mxu0 %v1507
    %3138 = vmatprep.subr.mxu0 %v1490
    %3139 = vmatpush2.msra.mxu0 %v1489
    %3140 = vmatprep.mubr.f32.mxu0 %v32
    %3141 = vmatmul.mubr.f32.gmra.mxu0 %v31
    %v3142 = vpop.f32.mrf.mxu0
    %v3143 = vadd.f32 %v3066, %v3142
    %v3144 = vpop.f32.mrf.mxu0
    %v3145 = vadd.f32 %v3068, %v3144
    %3146 = vmatprep.mubr.f32.mxu0 %v38
    %3147 = vmatmul.mubr.f32.gmra.mxu0 %v37
    %v3148 = vpop.f32.mrf.mxu0
    %v3149 = vadd.f32 %v3072, %v3148
    %v3150 = vpop.f32.mrf.mxu0
    %v3151 = vadd.f32 %v3074, %v3150
    %3152 = vdwg.mxu0
    %3153 = vmatprep.subr.mxu0 %v322
    %3154 = vmatpush1.msra.mxu0 %v321
    %3155 = vmatprep.subr.mxu0 %v304
    %3156 = vmatpush1.msra.mxu0 %v303
    %3157 = vmatprep.subr.mxu0 %v286
    %3158 = vmatpush1.msra.mxu0 %v285
    %3159 = vmatprep.subr.mxu0 %v268
    %3160 = vmatpush1.msra.mxu0 %v267
    %3161 = vmatprep.subr.mxu0 %v250
    %3162 = vmatpush1.msra.mxu0 %v249
    %3163 = vmatprep.subr.mxu0 %v232
    %3164 = vmatpush1.msra.mxu0 %v231
    %3165 = vmatprep.subr.mxu0 %v214
    %3166 = vmatpush1.msra.mxu0 %v213
    %3167 = vmatprep.subr.mxu0 %v196
    %3168 = vmatpush1.msra.mxu0 %v195
    %3169 = vmatprep.subr.mxu0 %v178
    %3170 = vmatpush1.msra.mxu0 %v177
    %3171 = vmatprep.subr.mxu0 %v160
    %3172 = vmatpush1.msra.mxu0 %v159
    %3173 = vmatprep.subr.mxu0 %v142
    %3174 = vmatpush1.msra.mxu0 %v141
    %3175 = vmatprep.subr.mxu0 %v124
    %3176 = vmatpush1.msra.mxu0 %v123
    %3177 = vmatprep.subr.mxu0 %v106
    %3178 = vmatpush1.msra.mxu0 %v105
    %3179 = vmatprep.subr.mxu0 %v88
    %3180 = vmatpush1.msra.mxu0 %v87
    %3181 = vmatprep.subr.mxu0 %v70
    %3182 = vmatpush1.msra.mxu0 %v69
    %3183 = vmatprep.subr.mxu0 %v52
    %3184 = vmatpush1.msra.mxu0 %v51
    %3185 = vmatprep.subr.mxu0 %v610
    %3186 = vmatpush2.msra.mxu0 %v609
    %3187 = vmatprep.subr.mxu0 %v592
    %3188 = vmatpush2.msra.mxu0 %v591
    %3189 = vmatprep.subr.mxu0 %v574
    %3190 = vmatpush2.msra.mxu0 %v573
    %3191 = vmatprep.subr.mxu0 %v556
    %3192 = vmatpush2.msra.mxu0 %v555
    %3193 = vmatprep.subr.mxu0 %v538
    %3194 = vmatpush2.msra.mxu0 %v537
    %3195 = vmatprep.subr.mxu0 %v520
    %3196 = vmatpush2.msra.mxu0 %v519
    %3197 = vmatprep.subr.mxu0 %v502
    %3198 = vmatpush2.msra.mxu0 %v501
    %3199 = vmatprep.subr.mxu0 %v484
    %3200 = vmatpush2.msra.mxu0 %v483
    %3201 = vmatprep.subr.mxu0 %v466
    %3202 = vmatpush2.msra.mxu0 %v465
    %3203 = vmatprep.subr.mxu0 %v448
    %3204 = vmatpush2.msra.mxu0 %v447
    %3205 = vmatprep.subr.mxu0 %v430
    %3206 = vmatpush2.msra.mxu0 %v429
    %3207 = vmatprep.subr.mxu0 %v412
    %3208 = vmatpush2.msra.mxu0 %v411
    %3209 = vmatprep.subr.mxu0 %v394
    %3210 = vmatpush2.msra.mxu0 %v393
    %3211 = vmatprep.subr.mxu0 %v376
    %3212 = vmatpush2.msra.mxu0 %v375
    %3213 = vmatprep.subr.mxu0 %v358
    %3214 = vmatpush2.msra.mxu0 %v357
    %3215 = vmatprep.subr.mxu0 %v340
    %3216 = vmatpush2.msra.mxu0 %v339
    %3217 = vmatprep.mubr.f32.mxu0 %v28
    %3218 = vmatmul.mubr.f32.gmra.mxu0 %v27
    %v3219 = vpop.f32.mrf.mxu0
    %v3220 = vadd.f32 0.0, %v3219
    %v3221 = vpop.f32.mrf.mxu0
    %v3222 = vadd.f32 0.0, %v3221
    %3223 = vmatprep.mubr.f32.mxu0 %v34
    %3224 = vmatmul.mubr.f32.gmra.mxu0 %v33
    %v3225 = vpop.f32.mrf.mxu0
    %v3226 = vadd.f32 0.0, %v3225
    %v3227 = vpop.f32.mrf.mxu0
    %v3228 = vadd.f32 0.0, %v3227
    %3229 = vdwg.mxu0
    %3230 = vmatprep.subr.mxu0 %v898
    %3231 = vmatpush1.msra.mxu0 %v897
    %3232 = vmatprep.subr.mxu0 %v880
    %3233 = vmatpush1.msra.mxu0 %v879
    %3234 = vmatprep.subr.mxu0 %v862
    %3235 = vmatpush1.msra.mxu0 %v861
    %3236 = vmatprep.subr.mxu0 %v844
    %3237 = vmatpush1.msra.mxu0 %v843
    %3238 = vmatprep.subr.mxu0 %v826
    %3239 = vmatpush1.msra.mxu0 %v825
    %3240 = vmatprep.subr.mxu0 %v808
    %3241 = vmatpush1.msra.mxu0 %v807
    %3242 = vmatprep.subr.mxu0 %v790
    %3243 = vmatpush1.msra.mxu0 %v789
    %3244 = vmatprep.subr.mxu0 %v772
    %3245 = vmatpush1.msra.mxu0 %v771
    %3246 = vmatprep.subr.mxu0 %v754
    %3247 = vmatpush1.msra.mxu0 %v753
    %3248 = vmatprep.subr.mxu0 %v736
    %3249 = vmatpush1.msra.mxu0 %v735
    %3250 = vmatprep.subr.mxu0 %v718
    %3251 = vmatpush1.msra.mxu0 %v717
    %3252 = vmatprep.subr.mxu0 %v700
    %3253 = vmatpush1.msra.mxu0 %v699
    %3254 = vmatprep.subr.mxu0 %v682
    %3255 = vmatpush1.msra.mxu0 %v681
    %3256 = vmatprep.subr.mxu0 %v664
    %3257 = vmatpush1.msra.mxu0 %v663
    %3258 = vmatprep.subr.mxu0 %v646
    %3259 = vmatpush1.msra.mxu0 %v645
    %3260 = vmatprep.subr.mxu0 %v628
    %3261 = vmatpush1.msra.mxu0 %v627
    %3262 = vmatprep.subr.mxu0 %v1186
    %3263 = vmatpush2.msra.mxu0 %v1185
    %3264 = vmatprep.subr.mxu0 %v1168
    %3265 = vmatpush2.msra.mxu0 %v1167
    %3266 = vmatprep.subr.mxu0 %v1150
    %3267 = vmatpush2.msra.mxu0 %v1149
    %3268 = vmatprep.subr.mxu0 %v1132
    %3269 = vmatpush2.msra.mxu0 %v1131
    %3270 = vmatprep.subr.mxu0 %v1114
    %3271 = vmatpush2.msra.mxu0 %v1113
    %3272 = vmatprep.subr.mxu0 %v1096
    %3273 = vmatpush2.msra.mxu0 %v1095
    %3274 = vmatprep.subr.mxu0 %v1078
    %3275 = vmatpush2.msra.mxu0 %v1077
    %3276 = vmatprep.subr.mxu0 %v1060
    %3277 = vmatpush2.msra.mxu0 %v1059
    %3278 = vmatprep.subr.mxu0 %v1042
    %3279 = vmatpush2.msra.mxu0 %v1041
    %3280 = vmatprep.subr.mxu0 %v1024
    %3281 = vmatpush2.msra.mxu0 %v1023
    %3282 = vmatprep.subr.mxu0 %v1006
    %3283 = vmatpush2.msra.mxu0 %v1005
    %3284 = vmatprep.subr.mxu0 %v988
    %3285 = vmatpush2.msra.mxu0 %v987
    %3286 = vmatprep.subr.mxu0 %v970
    %3287 = vmatpush2.msra.mxu0 %v969
    %3288 = vmatprep.subr.mxu0 %v952
    %3289 = vmatpush2.msra.mxu0 %v951
    %3290 = vmatprep.subr.mxu0 %v934
    %3291 = vmatpush2.msra.mxu0 %v933
    %3292 = vmatprep.subr.mxu0 %v916
    %3293 = vmatpush2.msra.mxu0 %v915
    %3294 = vmatprep.mubr.f32.mxu0 %v30
    %3295 = vmatmul.mubr.f32.gmra.mxu0 %v29
    %v3296 = vpop.f32.mrf.mxu0
    %v3297 = vadd.f32 %v3220, %v3296
    %v3298 = vpop.f32.mrf.mxu0
    %v3299 = vadd.f32 %v3222, %v3298
    %3300 = vmatprep.mubr.f32.mxu0 %v36
    %3301 = vmatmul.mubr.f32.gmra.mxu0 %v35
    %v3302 = vpop.f32.mrf.mxu0
    %v3303 = vadd.f32 %v3226, %v3302
    %v3304 = vpop.f32.mrf.mxu0
    %v3305 = vadd.f32 %v3228, %v3304
    %3306 = vdwg.mxu0
    %3307 = vmatprep.subr.mxu0 %v1474
    %3308 = vmatpush1.msra.mxu0 %v1473
    %3309 = vmatprep.subr.mxu0 %v1456
    %3310 = vmatpush1.msra.mxu0 %v1455
    %3311 = vmatprep.subr.mxu0 %v1438
    %3312 = vmatpush1.msra.mxu0 %v1437
    %3313 = vmatprep.subr.mxu0 %v1420
    %3314 = vmatpush1.msra.mxu0 %v1419
    %3315 = vmatprep.subr.mxu0 %v1402
    %3316 = vmatpush1.msra.mxu0 %v1401
    %3317 = vmatprep.subr.mxu0 %v1384
    %3318 = vmatpush1.msra.mxu0 %v1383
    %3319 = vmatprep.subr.mxu0 %v1366
    %3320 = vmatpush1.msra.mxu0 %v1365
    %3321 = vmatprep.subr.mxu0 %v1348
    %3322 = vmatpush1.msra.mxu0 %v1347
    %3323 = vmatprep.subr.mxu0 %v1330
    %3324 = vmatpush1.msra.mxu0 %v1329
    %3325 = vmatprep.subr.mxu0 %v1312
    %3326 = vmatpush1.msra.mxu0 %v1311
    %3327 = vmatprep.subr.mxu0 %v1294
    %3328 = vmatpush1.msra.mxu0 %v1293
    %3329 = vmatprep.subr.mxu0 %v1276
    %3330 = vmatpush1.msra.mxu0 %v1275
    %3331 = vmatprep.subr.mxu0 %v1258
    %3332 = vmatpush1.msra.mxu0 %v1257
    %3333 = vmatprep.subr.mxu0 %v1240
    %3334 = vmatpush1.msra.mxu0 %v1239
    %3335 = vmatprep.subr.mxu0 %v1222
    %3336 = vmatpush1.msra.mxu0 %v1221
    %3337 = vmatprep.subr.mxu0 %v1204
    %3338 = vmatpush1.msra.mxu0 %v1203
    %3339 = vmatprep.subr.mxu0 %v1762
    %3340 = vmatpush2.msra.mxu0 %v1761
    %3341 = vmatprep.subr.mxu0 %v1744
    %3342 = vmatpush2.msra.mxu0 %v1743
    %3343 = vmatprep.subr.mxu0 %v1726
    %3344 = vmatpush2.msra.mxu0 %v1725
    %3345 = vmatprep.subr.mxu0 %v1708
    %3346 = vmatpush2.msra.mxu0 %v1707
    %3347 = vmatprep.subr.mxu0 %v1690
    %3348 = vmatpush2.msra.mxu0 %v1689
    %3349 = vmatprep.subr.mxu0 %v1672
    %3350 = vmatpush2.msra.mxu0 %v1671
    %3351 = vmatprep.subr.mxu0 %v1654
    %3352 = vmatpush2.msra.mxu0 %v1653
    %3353 = vmatprep.subr.mxu0 %v1636
    %3354 = vmatpush2.msra.mxu0 %v1635
    %3355 = vmatprep.subr.mxu0 %v1618
    %3356 = vmatpush2.msra.mxu0 %v1617
    %3357 = vmatprep.subr.mxu0 %v1600
    %3358 = vmatpush2.msra.mxu0 %v1599
    %3359 = vmatprep.subr.mxu0 %v1582
    %3360 = vmatpush2.msra.mxu0 %v1581
    %3361 = vmatprep.subr.mxu0 %v1564
    %3362 = vmatpush2.msra.mxu0 %v1563
    %3363 = vmatprep.subr.mxu0 %v1546
    %3364 = vmatpush2.msra.mxu0 %v1545
    %3365 = vmatprep.subr.mxu0 %v1528
    %3366 = vmatpush2.msra.mxu0 %v1527
    %3367 = vmatprep.subr.mxu0 %v1510
    %3368 = vmatpush2.msra.mxu0 %v1509
    %3369 = vmatprep.subr.mxu0 %v1492
    %3370 = vmatpush2.msra.mxu0 %v1491
    %3371 = vmatprep.mubr.f32.mxu0 %v32
    %3372 = vmatmul.mubr.f32.gmra.mxu0 %v31
    %v3373 = vpop.f32.mrf.mxu0
    %v3374 = vadd.f32 %v3297, %v3373
    %v3375 = vpop.f32.mrf.mxu0
    %v3376 = vadd.f32 %v3299, %v3375
    %3377 = vmatprep.mubr.f32.mxu0 %v38
    %3378 = vmatmul.mubr.f32.gmra.mxu0 %v37
    %v3379 = vpop.f32.mrf.mxu0
    %v3380 = vadd.f32 %v3303, %v3379
    %v3381 = vpop.f32.mrf.mxu0
    %v3382 = vadd.f32 %v3305, %v3381
    %3383 = vdwg.mxu0
    %3384 = vmatprep.subr.mxu0 %v324
    %3385 = vmatpush1.msra.mxu0 %v323
    %3386 = vmatprep.subr.mxu0 %v306
    %3387 = vmatpush1.msra.mxu0 %v305
    %3388 = vmatprep.subr.mxu0 %v288
    %3389 = vmatpush1.msra.mxu0 %v287
    %3390 = vmatprep.subr.mxu0 %v270
    %3391 = vmatpush1.msra.mxu0 %v269
    %3392 = vmatprep.subr.mxu0 %v252
    %3393 = vmatpush1.msra.mxu0 %v251
    %3394 = vmatprep.subr.mxu0 %v234
    %3395 = vmatpush1.msra.mxu0 %v233
    %3396 = vmatprep.subr.mxu0 %v216
    %3397 = vmatpush1.msra.mxu0 %v215
    %3398 = vmatprep.subr.mxu0 %v198
    %3399 = vmatpush1.msra.mxu0 %v197
    %3400 = vmatprep.subr.mxu0 %v180
    %3401 = vmatpush1.msra.mxu0 %v179
    %3402 = vmatprep.subr.mxu0 %v162
    %3403 = vmatpush1.msra.mxu0 %v161
    %3404 = vmatprep.subr.mxu0 %v144
    %3405 = vmatpush1.msra.mxu0 %v143
    %3406 = vmatprep.subr.mxu0 %v126
    %3407 = vmatpush1.msra.mxu0 %v125
    %3408 = vmatprep.subr.mxu0 %v108
    %3409 = vmatpush1.msra.mxu0 %v107
    %3410 = vmatprep.subr.mxu0 %v90
    %3411 = vmatpush1.msra.mxu0 %v89
    %3412 = vmatprep.subr.mxu0 %v72
    %3413 = vmatpush1.msra.mxu0 %v71
    %3414 = vmatprep.subr.mxu0 %v54
    %3415 = vmatpush1.msra.mxu0 %v53
    %3416 = vmatprep.subr.mxu0 %v612
    %3417 = vmatpush2.msra.mxu0 %v611
    %3418 = vmatprep.subr.mxu0 %v594
    %3419 = vmatpush2.msra.mxu0 %v593
    %3420 = vmatprep.subr.mxu0 %v576
    %3421 = vmatpush2.msra.mxu0 %v575
    %3422 = vmatprep.subr.mxu0 %v558
    %3423 = vmatpush2.msra.mxu0 %v557
    %3424 = vmatprep.subr.mxu0 %v540
    %3425 = vmatpush2.msra.mxu0 %v539
    %3426 = vmatprep.subr.mxu0 %v522
    %3427 = vmatpush2.msra.mxu0 %v521
    %3428 = vmatprep.subr.mxu0 %v504
    %3429 = vmatpush2.msra.mxu0 %v503
    %3430 = vmatprep.subr.mxu0 %v486
    %3431 = vmatpush2.msra.mxu0 %v485
    %3432 = vmatprep.subr.mxu0 %v468
    %3433 = vmatpush2.msra.mxu0 %v467
    %3434 = vmatprep.subr.mxu0 %v450
    %3435 = vmatpush2.msra.mxu0 %v449
    %3436 = vmatprep.subr.mxu0 %v432
    %3437 = vmatpush2.msra.mxu0 %v431
    %3438 = vmatprep.subr.mxu0 %v414
    %3439 = vmatpush2.msra.mxu0 %v413
    %3440 = vmatprep.subr.mxu0 %v396
    %3441 = vmatpush2.msra.mxu0 %v395
    %3442 = vmatprep.subr.mxu0 %v378
    %3443 = vmatpush2.msra.mxu0 %v377
    %3444 = vmatprep.subr.mxu0 %v360
    %3445 = vmatpush2.msra.mxu0 %v359
    %3446 = vmatprep.subr.mxu0 %v342
    %3447 = vmatpush2.msra.mxu0 %v341
    %3448 = vmatprep.mubr.f32.mxu0 %v28
    %3449 = vmatmul.mubr.f32.gmra.mxu0 %v27
    %v3450 = vpop.f32.mrf.mxu0
    %v3451 = vadd.f32 0.0, %v3450
    %v3452 = vpop.f32.mrf.mxu0
    %v3453 = vadd.f32 0.0, %v3452
    %3454 = vmatprep.mubr.f32.mxu0 %v34
    %3455 = vmatmul.mubr.f32.gmra.mxu0 %v33
    %v3456 = vpop.f32.mrf.mxu0
    %v3457 = vadd.f32 0.0, %v3456
    %v3458 = vpop.f32.mrf.mxu0
    %v3459 = vadd.f32 0.0, %v3458
    %3460 = vdwg.mxu0
    %3461 = vmatprep.subr.mxu0 %v900
    %3462 = vmatpush1.msra.mxu0 %v899
    %3463 = vmatprep.subr.mxu0 %v882
    %3464 = vmatpush1.msra.mxu0 %v881
    %3465 = vmatprep.subr.mxu0 %v864
    %3466 = vmatpush1.msra.mxu0 %v863
    %3467 = vmatprep.subr.mxu0 %v846
    %3468 = vmatpush1.msra.mxu0 %v845
    %3469 = vmatprep.subr.mxu0 %v828
    %3470 = vmatpush1.msra.mxu0 %v827
    %3471 = vmatprep.subr.mxu0 %v810
    %3472 = vmatpush1.msra.mxu0 %v809
    %3473 = vmatprep.subr.mxu0 %v792
    %3474 = vmatpush1.msra.mxu0 %v791
    %3475 = vmatprep.subr.mxu0 %v774
    %3476 = vmatpush1.msra.mxu0 %v773
    %3477 = vmatprep.subr.mxu0 %v756
    %3478 = vmatpush1.msra.mxu0 %v755
    %3479 = vmatprep.subr.mxu0 %v738
    %3480 = vmatpush1.msra.mxu0 %v737
    %3481 = vmatprep.subr.mxu0 %v720
    %3482 = vmatpush1.msra.mxu0 %v719
    %3483 = vmatprep.subr.mxu0 %v702
    %3484 = vmatpush1.msra.mxu0 %v701
    %3485 = vmatprep.subr.mxu0 %v684
    %3486 = vmatpush1.msra.mxu0 %v683
    %3487 = vmatprep.subr.mxu0 %v666
    %3488 = vmatpush1.msra.mxu0 %v665
    %3489 = vmatprep.subr.mxu0 %v648
    %3490 = vmatpush1.msra.mxu0 %v647
    %3491 = vmatprep.subr.mxu0 %v630
    %3492 = vmatpush1.msra.mxu0 %v629
    %3493 = vmatprep.subr.mxu0 %v1188
    %3494 = vmatpush2.msra.mxu0 %v1187
    %3495 = vmatprep.subr.mxu0 %v1170
    %3496 = vmatpush2.msra.mxu0 %v1169
    %3497 = vmatprep.subr.mxu0 %v1152
    %3498 = vmatpush2.msra.mxu0 %v1151
    %3499 = vmatprep.subr.mxu0 %v1134
    %3500 = vmatpush2.msra.mxu0 %v1133
    %3501 = vmatprep.subr.mxu0 %v1116
    %3502 = vmatpush2.msra.mxu0 %v1115
    %3503 = vmatprep.subr.mxu0 %v1098
    %3504 = vmatpush2.msra.mxu0 %v1097
    %3505 = vmatprep.subr.mxu0 %v1080
    %3506 = vmatpush2.msra.mxu0 %v1079
    %3507 = vmatprep.subr.mxu0 %v1062
    %3508 = vmatpush2.msra.mxu0 %v1061
    %3509 = vmatprep.subr.mxu0 %v1044
    %3510 = vmatpush2.msra.mxu0 %v1043
    %3511 = vmatprep.subr.mxu0 %v1026
    %3512 = vmatpush2.msra.mxu0 %v1025
    %3513 = vmatprep.subr.mxu0 %v1008
    %3514 = vmatpush2.msra.mxu0 %v1007
    %3515 = vmatprep.subr.mxu0 %v990
    %3516 = vmatpush2.msra.mxu0 %v989
    %3517 = vmatprep.subr.mxu0 %v972
    %3518 = vmatpush2.msra.mxu0 %v971
    %3519 = vmatprep.subr.mxu0 %v954
    %3520 = vmatpush2.msra.mxu0 %v953
    %3521 = vmatprep.subr.mxu0 %v936
    %3522 = vmatpush2.msra.mxu0 %v935
    %3523 = vmatprep.subr.mxu0 %v918
    %3524 = vmatpush2.msra.mxu0 %v917
    %3525 = vmatprep.mubr.f32.mxu0 %v30
    %3526 = vmatmul.mubr.f32.gmra.mxu0 %v29
    %v3527 = vpop.f32.mrf.mxu0
    %v3528 = vadd.f32 %v3451, %v3527
    %v3529 = vpop.f32.mrf.mxu0
    %v3530 = vadd.f32 %v3453, %v3529
    %3531 = vmatprep.mubr.f32.mxu0 %v36
    %3532 = vmatmul.mubr.f32.gmra.mxu0 %v35
    %v3533 = vpop.f32.mrf.mxu0
    %v3534 = vadd.f32 %v3457, %v3533
    %v3535 = vpop.f32.mrf.mxu0
    %v3536 = vadd.f32 %v3459, %v3535
    %3537 = vdwg.mxu0
    %3538 = vmatprep.subr.mxu0 %v1476
    %3539 = vmatpush1.msra.mxu0 %v1475
    %3540 = vmatprep.subr.mxu0 %v1458
    %3541 = vmatpush1.msra.mxu0 %v1457
    %3542 = vmatprep.subr.mxu0 %v1440
    %3543 = vmatpush1.msra.mxu0 %v1439
    %3544 = vmatprep.subr.mxu0 %v1422
    %3545 = vmatpush1.msra.mxu0 %v1421
    %3546 = vmatprep.subr.mxu0 %v1404
    %3547 = vmatpush1.msra.mxu0 %v1403
    %3548 = vmatprep.subr.mxu0 %v1386
    %3549 = vmatpush1.msra.mxu0 %v1385
    %3550 = vmatprep.subr.mxu0 %v1368
    %3551 = vmatpush1.msra.mxu0 %v1367
    %3552 = vmatprep.subr.mxu0 %v1350
    %3553 = vmatpush1.msra.mxu0 %v1349
    %3554 = vmatprep.subr.mxu0 %v1332
    %3555 = vmatpush1.msra.mxu0 %v1331
    %3556 = vmatprep.subr.mxu0 %v1314
    %3557 = vmatpush1.msra.mxu0 %v1313
    %3558 = vmatprep.subr.mxu0 %v1296
    %3559 = vmatpush1.msra.mxu0 %v1295
    %3560 = vmatprep.subr.mxu0 %v1278
    %3561 = vmatpush1.msra.mxu0 %v1277
    %3562 = vmatprep.subr.mxu0 %v1260
    %3563 = vmatpush1.msra.mxu0 %v1259
    %3564 = vmatprep.subr.mxu0 %v1242
    %3565 = vmatpush1.msra.mxu0 %v1241
    %3566 = vmatprep.subr.mxu0 %v1224
    %3567 = vmatpush1.msra.mxu0 %v1223
    %3568 = vmatprep.subr.mxu0 %v1206
    %3569 = vmatpush1.msra.mxu0 %v1205
    %3570 = vmatprep.subr.mxu0 %v1764
    %3571 = vmatpush2.msra.mxu0 %v1763
    %3572 = vmatprep.subr.mxu0 %v1746
    %3573 = vmatpush2.msra.mxu0 %v1745
    %3574 = vmatprep.subr.mxu0 %v1728
    %3575 = vmatpush2.msra.mxu0 %v1727
    %3576 = vmatprep.subr.mxu0 %v1710
    %3577 = vmatpush2.msra.mxu0 %v1709
    %3578 = vmatprep.subr.mxu0 %v1692
    %3579 = vmatpush2.msra.mxu0 %v1691
    %3580 = vmatprep.subr.mxu0 %v1674
    %3581 = vmatpush2.msra.mxu0 %v1673
    %3582 = vmatprep.subr.mxu0 %v1656
    %3583 = vmatpush2.msra.mxu0 %v1655
    %3584 = vmatprep.subr.mxu0 %v1638
    %3585 = vmatpush2.msra.mxu0 %v1637
    %3586 = vmatprep.subr.mxu0 %v1620
    %3587 = vmatpush2.msra.mxu0 %v1619
    %3588 = vmatprep.subr.mxu0 %v1602
    %3589 = vmatpush2.msra.mxu0 %v1601
    %3590 = vmatprep.subr.mxu0 %v1584
    %3591 = vmatpush2.msra.mxu0 %v1583
    %3592 = vmatprep.subr.mxu0 %v1566
    %3593 = vmatpush2.msra.mxu0 %v1565
    %3594 = vmatprep.subr.mxu0 %v1548
    %3595 = vmatpush2.msra.mxu0 %v1547
    %3596 = vmatprep.subr.mxu0 %v1530
    %3597 = vmatpush2.msra.mxu0 %v1529
    %3598 = vmatprep.subr.mxu0 %v1512
    %3599 = vmatpush2.msra.mxu0 %v1511
    %3600 = vmatprep.subr.mxu0 %v1494
    %3601 = vmatpush2.msra.mxu0 %v1493
    %3602 = vmatprep.mubr.f32.mxu0 %v32
    %3603 = vmatmul.mubr.f32.gmra.mxu0 %v31
    %v3604 = vpop.f32.mrf.mxu0
    %v3605 = vadd.f32 %v3528, %v3604
    %v3606 = vpop.f32.mrf.mxu0
    %v3607 = vadd.f32 %v3530, %v3606
    %3608 = vmatprep.mubr.f32.mxu0 %v38
    %3609 = vmatmul.mubr.f32.gmra.mxu0 %v37
    %v3610 = vpop.f32.mrf.mxu0
    %v3611 = vadd.f32 %v3534, %v3610
    %v3612 = vpop.f32.mrf.mxu0
    %v3613 = vadd.f32 %v3536, %v3612
    %3614 = vdwg.mxu0
    %3615 = vmatprep.subr.mxu0 %v326
    %3616 = vmatpush1.msra.mxu0 %v325
    %3617 = vmatprep.subr.mxu0 %v308
    %3618 = vmatpush1.msra.mxu0 %v307
    %3619 = vmatprep.subr.mxu0 %v290
    %3620 = vmatpush1.msra.mxu0 %v289
    %3621 = vmatprep.subr.mxu0 %v272
    %3622 = vmatpush1.msra.mxu0 %v271
    %3623 = vmatprep.subr.mxu0 %v254
    %3624 = vmatpush1.msra.mxu0 %v253
    %3625 = vmatprep.subr.mxu0 %v236
    %3626 = vmatpush1.msra.mxu0 %v235
    %3627 = vmatprep.subr.mxu0 %v218
    %3628 = vmatpush1.msra.mxu0 %v217
    %3629 = vmatprep.subr.mxu0 %v200
    %3630 = vmatpush1.msra.mxu0 %v199
    %3631 = vmatprep.subr.mxu0 %v182
    %3632 = vmatpush1.msra.mxu0 %v181
    %3633 = vmatprep.subr.mxu0 %v164
    %3634 = vmatpush1.msra.mxu0 %v163
    %3635 = vmatprep.subr.mxu0 %v146
    %3636 = vmatpush1.msra.mxu0 %v145
    %3637 = vmatprep.subr.mxu0 %v128
    %3638 = vmatpush1.msra.mxu0 %v127
    %3639 = vmatprep.subr.mxu0 %v110
    %3640 = vmatpush1.msra.mxu0 %v109
    %3641 = vmatprep.subr.mxu0 %v92
    %3642 = vmatpush1.msra.mxu0 %v91
    %3643 = vmatprep.subr.mxu0 %v74
    %3644 = vmatpush1.msra.mxu0 %v73
    %3645 = vmatprep.subr.mxu0 %v56
    %3646 = vmatpush1.msra.mxu0 %v55
    %3647 = vmatprep.subr.mxu0 %v614
    %3648 = vmatpush2.msra.mxu0 %v613
    %3649 = vmatprep.subr.mxu0 %v596
    %3650 = vmatpush2.msra.mxu0 %v595
    %3651 = vmatprep.subr.mxu0 %v578
    %3652 = vmatpush2.msra.mxu0 %v577
    %3653 = vmatprep.subr.mxu0 %v560
    %3654 = vmatpush2.msra.mxu0 %v559
    %3655 = vmatprep.subr.mxu0 %v542
    %3656 = vmatpush2.msra.mxu0 %v541
    %3657 = vmatprep.subr.mxu0 %v524
    %3658 = vmatpush2.msra.mxu0 %v523
    %3659 = vmatprep.subr.mxu0 %v506
    %3660 = vmatpush2.msra.mxu0 %v505
    %3661 = vmatprep.subr.mxu0 %v488
    %3662 = vmatpush2.msra.mxu0 %v487
    %3663 = vmatprep.subr.mxu0 %v470
    %3664 = vmatpush2.msra.mxu0 %v469
    %3665 = vmatprep.subr.mxu0 %v452
    %3666 = vmatpush2.msra.mxu0 %v451
    %3667 = vmatprep.subr.mxu0 %v434
    %3668 = vmatpush2.msra.mxu0 %v433
    %3669 = vmatprep.subr.mxu0 %v416
    %3670 = vmatpush2.msra.mxu0 %v415
    %3671 = vmatprep.subr.mxu0 %v398
    %3672 = vmatpush2.msra.mxu0 %v397
    %3673 = vmatprep.subr.mxu0 %v380
    %3674 = vmatpush2.msra.mxu0 %v379
    %3675 = vmatprep.subr.mxu0 %v362
    %3676 = vmatpush2.msra.mxu0 %v361
    %3677 = vmatprep.subr.mxu0 %v344
    %3678 = vmatpush2.msra.mxu0 %v343
    %3679 = vmatprep.mubr.f32.mxu0 %v28
    %3680 = vmatmul.mubr.f32.gmra.mxu0 %v27
    %v3681 = vpop.f32.mrf.mxu0
    %v3682 = vadd.f32 0.0, %v3681
    %v3683 = vpop.f32.mrf.mxu0
    %v3684 = vadd.f32 0.0, %v3683
    %3685 = vmatprep.mubr.f32.mxu0 %v34
    %3686 = vmatmul.mubr.f32.gmra.mxu0 %v33
    %v3687 = vpop.f32.mrf.mxu0
    %v3688 = vadd.f32 0.0, %v3687
    %v3689 = vpop.f32.mrf.mxu0
    %v3690 = vadd.f32 0.0, %v3689
    %3691 = vdwg.mxu0
    %3692 = vmatprep.subr.mxu0 %v902
    %3693 = vmatpush1.msra.mxu0 %v901
    %3694 = vmatprep.subr.mxu0 %v884
    %3695 = vmatpush1.msra.mxu0 %v883
    %3696 = vmatprep.subr.mxu0 %v866
    %3697 = vmatpush1.msra.mxu0 %v865
    %3698 = vmatprep.subr.mxu0 %v848
    %3699 = vmatpush1.msra.mxu0 %v847
    %3700 = vmatprep.subr.mxu0 %v830
    %3701 = vmatpush1.msra.mxu0 %v829
    %3702 = vmatprep.subr.mxu0 %v812
    %3703 = vmatpush1.msra.mxu0 %v811
    %3704 = vmatprep.subr.mxu0 %v794
    %3705 = vmatpush1.msra.mxu0 %v793
    %3706 = vmatprep.subr.mxu0 %v776
    %3707 = vmatpush1.msra.mxu0 %v775
    %3708 = vmatprep.subr.mxu0 %v758
    %3709 = vmatpush1.msra.mxu0 %v757
    %3710 = vmatprep.subr.mxu0 %v740
    %3711 = vmatpush1.msra.mxu0 %v739
    %3712 = vmatprep.subr.mxu0 %v722
    %3713 = vmatpush1.msra.mxu0 %v721
    %3714 = vmatprep.subr.mxu0 %v704
    %3715 = vmatpush1.msra.mxu0 %v703
    %3716 = vmatprep.subr.mxu0 %v686
    %3717 = vmatpush1.msra.mxu0 %v685
    %3718 = vmatprep.subr.mxu0 %v668
    %3719 = vmatpush1.msra.mxu0 %v667
    %3720 = vmatprep.subr.mxu0 %v650
    %3721 = vmatpush1.msra.mxu0 %v649
    %3722 = vmatprep.subr.mxu0 %v632
    %3723 = vmatpush1.msra.mxu0 %v631
    %3724 = vmatprep.subr.mxu0 %v1190
    %3725 = vmatpush2.msra.mxu0 %v1189
    %3726 = vmatprep.subr.mxu0 %v1172
    %3727 = vmatpush2.msra.mxu0 %v1171
    %3728 = vmatprep.subr.mxu0 %v1154
    %3729 = vmatpush2.msra.mxu0 %v1153
    %3730 = vmatprep.subr.mxu0 %v1136
    %3731 = vmatpush2.msra.mxu0 %v1135
    %3732 = vmatprep.subr.mxu0 %v1118
    %3733 = vmatpush2.msra.mxu0 %v1117
    %3734 = vmatprep.subr.mxu0 %v1100
    %3735 = vmatpush2.msra.mxu0 %v1099
    %3736 = vmatprep.subr.mxu0 %v1082
    %3737 = vmatpush2.msra.mxu0 %v1081
    %3738 = vmatprep.subr.mxu0 %v1064
    %3739 = vmatpush2.msra.mxu0 %v1063
    %3740 = vmatprep.subr.mxu0 %v1046
    %3741 = vmatpush2.msra.mxu0 %v1045
    %3742 = vmatprep.subr.mxu0 %v1028
    %3743 = vmatpush2.msra.mxu0 %v1027
    %3744 = vmatprep.subr.mxu0 %v1010
    %3745 = vmatpush2.msra.mxu0 %v1009
    %3746 = vmatprep.subr.mxu0 %v992
    %3747 = vmatpush2.msra.mxu0 %v991
    %3748 = vmatprep.subr.mxu0 %v974
    %3749 = vmatpush2.msra.mxu0 %v973
    %3750 = vmatprep.subr.mxu0 %v956
    %3751 = vmatpush2.msra.mxu0 %v955
    %3752 = vmatprep.subr.mxu0 %v938
    %3753 = vmatpush2.msra.mxu0 %v937
    %3754 = vmatprep.subr.mxu0 %v920
    %3755 = vmatpush2.msra.mxu0 %v919
    %3756 = vmatprep.mubr.f32.mxu0 %v30
    %3757 = vmatmul.mubr.f32.gmra.mxu0 %v29
    %v3758 = vpop.f32.mrf.mxu0
    %v3759 = vadd.f32 %v3682, %v3758
    %v3760 = vpop.f32.mrf.mxu0
    %v3761 = vadd.f32 %v3684, %v3760
    %3762 = vmatprep.mubr.f32.mxu0 %v36
    %3763 = vmatmul.mubr.f32.gmra.mxu0 %v35
    %v3764 = vpop.f32.mrf.mxu0
    %v3765 = vadd.f32 %v3688, %v3764
    %v3766 = vpop.f32.mrf.mxu0
    %v3767 = vadd.f32 %v3690, %v3766
    %3768 = vdwg.mxu0
    %3769 = vmatprep.subr.mxu0 %v1478
    %3770 = vmatpush1.msra.mxu0 %v1477
    %3771 = vmatprep.subr.mxu0 %v1460
    %3772 = vmatpush1.msra.mxu0 %v1459
    %3773 = vmatprep.subr.mxu0 %v1442
    %3774 = vmatpush1.msra.mxu0 %v1441
    %3775 = vmatprep.subr.mxu0 %v1424
    %3776 = vmatpush1.msra.mxu0 %v1423
    %3777 = vmatprep.subr.mxu0 %v1406
    %3778 = vmatpush1.msra.mxu0 %v1405
    %3779 = vmatprep.subr.mxu0 %v1388
    %3780 = vmatpush1.msra.mxu0 %v1387
    %3781 = vmatprep.subr.mxu0 %v1370
    %3782 = vmatpush1.msra.mxu0 %v1369
    %3783 = vmatprep.subr.mxu0 %v1352
    %3784 = vmatpush1.msra.mxu0 %v1351
    %3785 = vmatprep.subr.mxu0 %v1334
    %3786 = vmatpush1.msra.mxu0 %v1333
    %3787 = vmatprep.subr.mxu0 %v1316
    %3788 = vmatpush1.msra.mxu0 %v1315
    %3789 = vmatprep.subr.mxu0 %v1298
    %3790 = vmatpush1.msra.mxu0 %v1297
    %3791 = vmatprep.subr.mxu0 %v1280
    %3792 = vmatpush1.msra.mxu0 %v1279
    %3793 = vmatprep.subr.mxu0 %v1262
    %3794 = vmatpush1.msra.mxu0 %v1261
    %3795 = vmatprep.subr.mxu0 %v1244
    %3796 = vmatpush1.msra.mxu0 %v1243
    %3797 = vmatprep.subr.mxu0 %v1226
    %3798 = vmatpush1.msra.mxu0 %v1225
    %3799 = vmatprep.subr.mxu0 %v1208
    %3800 = vmatpush1.msra.mxu0 %v1207
    %3801 = vmatprep.subr.mxu0 %v1766
    %3802 = vmatpush2.msra.mxu0 %v1765
    %3803 = vmatprep.subr.mxu0 %v1748
    %3804 = vmatpush2.msra.mxu0 %v1747
    %3805 = vmatprep.subr.mxu0 %v1730
    %3806 = vmatpush2.msra.mxu0 %v1729
    %3807 = vmatprep.subr.mxu0 %v1712
    %3808 = vmatpush2.msra.mxu0 %v1711
    %3809 = vmatprep.subr.mxu0 %v1694
    %3810 = vmatpush2.msra.mxu0 %v1693
    %3811 = vmatprep.subr.mxu0 %v1676
    %3812 = vmatpush2.msra.mxu0 %v1675
    %3813 = vmatprep.subr.mxu0 %v1658
    %3814 = vmatpush2.msra.mxu0 %v1657
    %3815 = vmatprep.subr.mxu0 %v1640
    %3816 = vmatpush2.msra.mxu0 %v1639
    %3817 = vmatprep.subr.mxu0 %v1622
    %3818 = vmatpush2.msra.mxu0 %v1621
    %3819 = vmatprep.subr.mxu0 %v1604
    %3820 = vmatpush2.msra.mxu0 %v1603
    %3821 = vmatprep.subr.mxu0 %v1586
    %3822 = vmatpush2.msra.mxu0 %v1585
    %3823 = vmatprep.subr.mxu0 %v1568
    %3824 = vmatpush2.msra.mxu0 %v1567
    %3825 = vmatprep.subr.mxu0 %v1550
    %3826 = vmatpush2.msra.mxu0 %v1549
    %3827 = vmatprep.subr.mxu0 %v1532
    %3828 = vmatpush2.msra.mxu0 %v1531
    %3829 = vmatprep.subr.mxu0 %v1514
    %3830 = vmatpush2.msra.mxu0 %v1513
    %3831 = vmatprep.subr.mxu0 %v1496
    %3832 = vmatpush2.msra.mxu0 %v1495
    %3833 = vmatprep.mubr.f32.mxu0 %v32
    %3834 = vmatmul.mubr.f32.gmra.mxu0 %v31
    %v3835 = vpop.f32.mrf.mxu0
    %v3836 = vadd.f32 %v3759, %v3835
    %v3837 = vpop.f32.mrf.mxu0
    %v3838 = vadd.f32 %v3761, %v3837
    %3839 = vmatprep.mubr.f32.mxu0 %v38
    %3840 = vmatmul.mubr.f32.gmra.mxu0 %v37
    %v3841 = vpop.f32.mrf.mxu0
    %v3842 = vadd.f32 %v3765, %v3841
    %v3843 = vpop.f32.mrf.mxu0
    %v3844 = vadd.f32 %v3767, %v3843
    %3845 = vdwg.mxu0
    %v3850 = vrot.slane %v2219, 1
    %v3851 = vrot.slane %v2221, 1
    %v3852 = vrot.slane %v2225, 1
    %v3853 = vrot.slane %v2227, 1
    %v3858 = vadd.f32 %v1988, %v3850
    %v3859 = vadd.f32 %v1990, %v3851
    %v3860 = vadd.f32 %v1994, %v3852
    %v3861 = vadd.f32 %v1996, %v3853
    %vm3862 = vcmask 1046528
    %v3863 = vsel %vm3862, %v3858, -inf
    %v3864 = vrot.slane %v3863, 4
    %v3865 = vmax.f32 %v3863, %v3864
    %v3866 = vrot.slane %v3865, 2
    %v3867 = vmax.f32 %v3865, %v3866
    %v3868 = vrot.slane %v3867, 1
    %v3869 = vmax.f32 %v3867, %v3868
    %v3870 = vsel %vm3862, %v3859, -inf
    %v3871 = vrot.slane %v3870, 4
    %v3872 = vmax.f32 %v3870, %v3871
    %v3873 = vrot.slane %v3872, 2
    %v3874 = vmax.f32 %v3872, %v3873
    %v3875 = vrot.slane %v3874, 1
    %v3876 = vmax.f32 %v3874, %v3875
    %v3877 = vsel %vm3862, %v3860, -inf
    %v3878 = vrot.slane %v3877, 4
    %v3879 = vmax.f32 %v3877, %v3878
    %v3880 = vrot.slane %v3879, 2
    %v3881 = vmax.f32 %v3879, %v3880
    %v3882 = vrot.slane %v3881, 1
    %v3883 = vmax.f32 %v3881, %v3882
    %v3884 = vsel %vm3862, %v3861, -inf
    %v3885 = vrot.slane %v3884, 4
    %v3886 = vmax.f32 %v3884, %v3885
    %v3887 = vrot.slane %v3886, 2
    %v3888 = vmax.f32 %v3886, %v3887
    %v3889 = vrot.slane %v3888, 1
    %v3890 = vmax.f32 %v3888, %v3889
    %v3891 = vld [vmem:[%s2] sm:$0x3]
    %v3893 = vlaneseq
    %v3894 = vshrl.u32 %v3893, 7
    %v3895 = vsub.s32 0, %v3894
    %v3896 = vrot.slane %v3891, %v3895
    %v3897 = vlaneseq
    %v3898 = vshrl.u32 %v3897, 7
    %v3899 = vsub.s32 1, %v3898
    %v3900 = vrot.slane %v3891, %v3899
    %v3903 = vadd.f32 %v3869, %v3896
    %v3904 = vadd.f32 %v3876, %v3900
    %v3905 = vadd.f32 %v3883, %v3896
    %v3906 = vadd.f32 %v3890, %v3900
    %v3907 = vmax.f32 %v3903, 0.0
    %v3908 = vmax.f32 %v3904, 0.0
    %v3909 = vmax.f32 %v3905, 0.0
    %v3910 = vmax.f32 %v3906, 0.0
    %v3915 = vcombine.low %v3907, %v3908
    %v3917 = vunpack.c.l.s4 1983009808
    %v3918 = vunpack.c.0.s8 %v3917
    %v3919 = vlaneseq
    %v3920 = vshrl.u32 %v3919, 7
    %v3921 = vsub.s32 %v3918, %v3920
    %v3922 = vrot.slane %v3915, %v3921
    %v3923 = vcombine.low %v3909, %v3910
    %v3925 = vunpack.c.l.s4 1983009808
    %v3926 = vunpack.c.0.s8 %v3925
    %v3927 = vlaneseq
    %v3928 = vshrl.u32 %v3927, 7
    %v3929 = vsub.s32 %v3926, %v3928
    %v3930 = vrot.slane %v3923, %v3929
    %vm3931 = vcmask 1044484
    %v3932 = vsel %vm3931, %v3922, %v3922
    %vm3933 = vcmask 1046534
    %v3934 = vsel %vm3933, %v3922, %v3932
    %v3935 = vrot.slane %v3930, 7
    %vm3936 = vcmask 1041409
    %v3937 = vsel %vm3936, %v3935, %v3934
    %vm3938 = vcmask 1043459
    %v3939 = vsel %vm3938, %v3935, %v3937
    %vm3940 = vcmask 1045509
    %v3941 = vsel %vm3940, %v3935, %v3939
    %vm3942 = vcmask 1047559
    %v3943 = vsel %vm3942, %v3935, %v3941
    %3945 = vst [vmem:[#allocation2] sm:$0xf] %v3943
    %v3950 = vrot.slane %v2681, 1
    %v3951 = vrot.slane %v2683, 1
    %v3952 = vrot.slane %v2687, 1
    %v3953 = vrot.slane %v2689, 1
    %v3958 = vadd.f32 %v2450, %v3950
    %v3959 = vadd.f32 %v2452, %v3951
    %v3960 = vadd.f32 %v2456, %v3952
    %v3961 = vadd.f32 %v2458, %v3953
    %v3966 = vrot.slane %v2912, 2
    %v3967 = vrot.slane %v2914, 2
    %v3968 = vrot.slane %v2918, 2
    %v3969 = vrot.slane %v2920, 2
    %v3974 = vadd.f32 %v3958, %v3966
    %v3975 = vadd.f32 %v3959, %v3967
    %v3976 = vadd.f32 %v3960, %v3968
    %v3977 = vadd.f32 %v3961, %v3969
    %vm3978 = vcmask 1045504
    %v3979 = vsel %vm3978, %v3974, -inf
    %v3980 = vrot.slane %v3979, 4
    %v3981 = vmax.f32 %v3979, %v3980
    %v3982 = vrot.slane %v3981, 2
    %v3983 = vmax.f32 %v3981, %v3982
    %v3984 = vrot.slane %v3983, 1
    %v3985 = vmax.f32 %v3983, %v3984
    %v3986 = vsel %vm3978, %v3975, -inf
    %v3987 = vrot.slane %v3986, 4
    %v3988 = vmax.f32 %v3986, %v3987
    %v3989 = vrot.slane %v3988, 2
    %v3990 = vmax.f32 %v3988, %v3989
    %v3991 = vrot.slane %v3990, 1
    %v3992 = vmax.f32 %v3990, %v3991
    %v3993 = vsel %vm3978, %v3976, -inf
    %v3994 = vrot.slane %v3993, 4
    %v3995 = vmax.f32 %v3993, %v3994
    %v3996 = vrot.slane %v3995, 2
    %v3997 = vmax.f32 %v3995, %v3996
    %v3998 = vrot.slane %v3997, 1
    %v3999 = vmax.f32 %v3997, %v3998
    %v4000 = vsel %vm3978, %v3977, -inf
    %v4001 = vrot.slane %v4000, 4
    %v4002 = vmax.f32 %v4000, %v4001
    %v4003 = vrot.slane %v4002, 2
    %v4004 = vmax.f32 %v4002, %v4003
    %v4005 = vrot.slane %v4004, 1
    %v4006 = vmax.f32 %v4004, %v4005
    %v4007 = vld [vmem:[%s3] sm:$0x3]
    %v4009 = vlaneseq
    %v4010 = vshrl.u32 %v4009, 7
    %v4011 = vsub.s32 0, %v4010
    %v4012 = vrot.slane %v4007, %v4011
    %v4013 = vlaneseq
    %v4014 = vshrl.u32 %v4013, 7
    %v4015 = vsub.s32 1, %v4014
    %v4016 = vrot.slane %v4007, %v4015
    %v4019 = vadd.f32 %v3985, %v4012
    %v4020 = vadd.f32 %v3992, %v4016
    %v4021 = vadd.f32 %v3999, %v4012
    %v4022 = vadd.f32 %v4006, %v4016
    %v4023 = vmax.f32 %v4019, 0.0
    %v4024 = vmax.f32 %v4020, 0.0
    %v4025 = vmax.f32 %v4021, 0.0
    %v4026 = vmax.f32 %v4022, 0.0
    %v4031 = vcombine.low %v4023, %v4024
    %v4033 = vunpack.c.l.s4 1983009808
    %v4034 = vunpack.c.0.s8 %v4033
    %v4035 = vlaneseq
    %v4036 = vshrl.u32 %v4035, 7
    %v4037 = vsub.s32 %v4034, %v4036
    %v4038 = vrot.slane %v4031, %v4037
    %v4039 = vcombine.low %v4025, %v4026
    %v4041 = vunpack.c.l.s4 1983009808
    %v4042 = vunpack.c.0.s8 %v4041
    %v4043 = vlaneseq
    %v4044 = vshrl.u32 %v4043, 7
    %v4045 = vsub.s32 %v4042, %v4044
    %v4046 = vrot.slane %v4039, %v4045
    %v4047 = vsel %vm3931, %v4038, %v4038
    %v4048 = vsel %vm3933, %v4038, %v4047
    %v4049 = vrot.slane %v4046, 7
    %v4050 = vsel %vm3936, %v4049, %v4048
    %v4051 = vsel %vm3938, %v4049, %v4050
    %v4052 = vsel %vm3940, %v4049, %v4051
    %v4053 = vsel %vm3942, %v4049, %v4052
    %4055 = vst [vmem:[#allocation2 + $0x4] sm:$0xf] %v4053
    %v4060 = vrot.slane %v3374, 1
    %v4061 = vrot.slane %v3376, 1
    %v4062 = vrot.slane %v3380, 1
    %v4063 = vrot.slane %v3382, 1
    %v4068 = vadd.f32 %v3143, %v4060
    %v4069 = vadd.f32 %v3145, %v4061
    %v4070 = vadd.f32 %v3149, %v4062
    %v4071 = vadd.f32 %v3151, %v4063
    %v4076 = vrot.slane %v3605, 2
    %v4077 = vrot.slane %v3607, 2
    %v4078 = vrot.slane %v3611, 2
    %v4079 = vrot.slane %v3613, 2
    %v4084 = vadd.f32 %v4068, %v4076
    %v4085 = vadd.f32 %v4069, %v4077
    %v4086 = vadd.f32 %v4070, %v4078
    %v4087 = vadd.f32 %v4071, %v4079
    %v4092 = vrot.slane %v3836, 3
    %v4093 = vrot.slane %v3838, 3
    %v4094 = vrot.slane %v3842, 3
    %v4095 = vrot.slane %v3844, 3
    %v4100 = vadd.f32 %v4084, %v4092
    %v4101 = vadd.f32 %v4085, %v4093
    %v4102 = vadd.f32 %v4086, %v4094
    %v4103 = vadd.f32 %v4087, %v4095
    %vm4104 = vcmask 1044480
    %v4105 = vsel %vm4104, %v4100, -inf
    %v4106 = vrot.slane %v4105, 4
    %v4107 = vmax.f32 %v4105, %v4106
    %v4108 = vrot.slane %v4107, 2
    %v4109 = vmax.f32 %v4107, %v4108
    %v4110 = vrot.slane %v4109, 1
    %v4111 = vmax.f32 %v4109, %v4110
    %v4112 = vsel %vm4104, %v4101, -inf
    %v4113 = vrot.slane %v4112, 4
    %v4114 = vmax.f32 %v4112, %v4113
    %v4115 = vrot.slane %v4114, 2
    %v4116 = vmax.f32 %v4114, %v4115
    %v4117 = vrot.slane %v4116, 1
    %v4118 = vmax.f32 %v4116, %v4117
    %v4119 = vsel %vm4104, %v4102, -inf
    %v4120 = vrot.slane %v4119, 4
    %v4121 = vmax.f32 %v4119, %v4120
    %v4122 = vrot.slane %v4121, 2
    %v4123 = vmax.f32 %v4121, %v4122
    %v4124 = vrot.slane %v4123, 1
    %v4125 = vmax.f32 %v4123, %v4124
    %v4126 = vsel %vm4104, %v4103, -inf
    %v4127 = vrot.slane %v4126, 4
    %v4128 = vmax.f32 %v4126, %v4127
    %v4129 = vrot.slane %v4128, 2
    %v4130 = vmax.f32 %v4128, %v4129
    %v4131 = vrot.slane %v4130, 1
    %v4132 = vmax.f32 %v4130, %v4131
    %v4133 = vld [vmem:[%s4] sm:$0x3]
    %v4135 = vlaneseq
    %v4136 = vshrl.u32 %v4135, 7
    %v4137 = vsub.s32 0, %v4136
    %v4138 = vrot.slane %v4133, %v4137
    %v4139 = vlaneseq
    %v4140 = vshrl.u32 %v4139, 7
    %v4141 = vsub.s32 1, %v4140
    %v4142 = vrot.slane %v4133, %v4141
    %v4145 = vadd.f32 %v4111, %v4138
    %v4146 = vadd.f32 %v4118, %v4142
    %v4147 = vadd.f32 %v4125, %v4138
    %v4148 = vadd.f32 %v4132, %v4142
    %v4149 = vmax.f32 %v4145, 0.0
    %v4150 = vmax.f32 %v4146, 0.0
    %v4151 = vmax.f32 %v4147, 0.0
    %v4152 = vmax.f32 %v4148, 0.0
    %v4157 = vcombine.low %v4149, %v4150
    %v4159 = vunpack.c.l.s4 1983009808
    %v4160 = vunpack.c.0.s8 %v4159
    %v4161 = vlaneseq
    %v4162 = vshrl.u32 %v4161, 7
    %v4163 = vsub.s32 %v4160, %v4162
    %v4164 = vrot.slane %v4157, %v4163
    %v4165 = vcombine.low %v4151, %v4152
    %v4167 = vunpack.c.l.s4 1983009808
    %v4168 = vunpack.c.0.s8 %v4167
    %v4169 = vlaneseq
    %v4170 = vshrl.u32 %v4169, 7
    %v4171 = vsub.s32 %v4168, %v4170
    %v4172 = vrot.slane %v4165, %v4171
    %v4173 = vsel %vm3931, %v4164, %v4164
    %v4174 = vsel %vm3933, %v4164, %v4173
    %v4175 = vrot.slane %v4172, 7
    %v4176 = vsel %vm3936, %v4175, %v4174
    %v4177 = vsel %vm3938, %v4175, %v4176
    %v4178 = vsel %vm3940, %v4175, %v4177
    %v4179 = vsel %vm3942, %v4175, %v4178
    %4181 = vst [vmem:[#allocation2 + $0x8] sm:$0xf] %v4179
    %v4182 = vld [vmem:[#allocation2] sm:$0xff]
    %v4183 = vld [vmem:[#allocation2 + $0x8] sm:$0xf]
    %v4184 = vld [vmem:[%s5] sm:$0xff]
    %v4185 = vld [vmem:[%s5 + $0x8] sm:$0xff]
    %v4186 = vld [vmem:[%s5 + $0x10] sm:$0xff]
    %v4187 = vld [vmem:[%s5 + $0x18] sm:$0xff]
    %v4188 = vld [vmem:[%s5 + $0x20] sm:$0xff]
    %v4189 = vld [vmem:[%s5 + $0x28] sm:$0xff]
    %v4190 = vld [vmem:[%s5 + $0x30] sm:$0xff]
    %v4191 = vld [vmem:[%s5 + $0x38] sm:$0xff]
    %v4192 = vld [vmem:[%s5 + $0x40] sm:$0xff]
    %v4193 = vld [vmem:[%s5 + $0x48] sm:$0xff]
    %v4194 = vld [vmem:[%s5 + $0x50] sm:$0xff]
    %v4195 = vld [vmem:[%s5 + $0x58] sm:$0xff]
    %v4196 = vld [vmem:[%s5 + $0x60] sm:$0xff]
    %v4197 = vld [vmem:[%s5 + $0x68] sm:$0xff]
    %v4198 = vld [vmem:[%s5 + $0x70] sm:$0xff]
    %v4199 = vld [vmem:[%s5 + $0x78] sm:$0xff]
    %v4200 = vld [vmem:[%s5 + $0x80] sm:$0xff]
    %v4201 = vld [vmem:[%s5 + $0x88] sm:$0xff]
    %v4202 = vld [vmem:[%s5 + $0x90] sm:$0xff]
    %v4203 = vld [vmem:[%s5 + $0x98] sm:$0xff]
    %v4204 = vld [vmem:[%s5 + $0xa0] sm:$0xff]
    %v4205 = vld [vmem:[%s5 + $0xa8] sm:$0xff]
    %v4206 = vld [vmem:[%s5 + $0xb0] sm:$0xff]
    %v4207 = vld [vmem:[%s5 + $0xb8] sm:$0xff]
    %v4208 = vld [vmem:[%s5 + $0xc0] sm:$0xff]
    %v4209 = vld [vmem:[%s5 + $0xc8] sm:$0xff]
    %v4210 = vld [vmem:[%s5 + $0xd0] sm:$0xff]
    %v4211 = vld [vmem:[%s5 + $0xd8] sm:$0xff]
    %v4212 = vld [vmem:[%s5 + $0xe0] sm:$0xff]
    %v4213 = vld [vmem:[%s5 + $0xe8] sm:$0xff]
    %v4214 = vld [vmem:[%s5 + $0xf0] sm:$0xff]
    %v4215 = vld [vmem:[%s5 + $0xf8] sm:$0xff]
    %v4216 = vld [vmem:[%s5 + $0x100] sm:$0xff]
    %v4217 = vld [vmem:[%s5 + $0x108] sm:$0xff]
    %v4218 = vld [vmem:[%s5 + $0x110] sm:$0xff]
    %v4219 = vld [vmem:[%s5 + $0x118] sm:$0xff]
    %v4220 = vld [vmem:[%s5 + $0x120] sm:$0xff]
    %v4221 = vld [vmem:[%s5 + $0x128] sm:$0xff]
    %v4222 = vld [vmem:[%s5 + $0x130] sm:$0xff]
    %v4223 = vld [vmem:[%s5 + $0x138] sm:$0xff]
    %v4224 = vld [vmem:[%s5 + $0x140] sm:$0xff]
    %v4225 = vld [vmem:[%s5 + $0x148] sm:$0xff]
    %v4226 = vld [vmem:[%s5 + $0x150] sm:$0xff]
    %v4227 = vld [vmem:[%s5 + $0x158] sm:$0xff]
    %v4228 = vld [vmem:[%s5 + $0x160] sm:$0xff]
    %v4229 = vld [vmem:[%s5 + $0x168] sm:$0xff]
    %v4230 = vld [vmem:[%s5 + $0x170] sm:$0xff]
    %v4231 = vld [vmem:[%s5 + $0x178] sm:$0xff]
    %v4232 = vld [vmem:[%s5 + $0x180] sm:$0xff]
    %v4233 = vld [vmem:[%s5 + $0x188] sm:$0xff]
    %v4234 = vld [vmem:[%s5 + $0x190] sm:$0xff]
    %v4235 = vld [vmem:[%s5 + $0x198] sm:$0xff]
    %v4236 = vld [vmem:[%s5 + $0x1a0] sm:$0xff]
    %v4237 = vld [vmem:[%s5 + $0x1a8] sm:$0xff]
    %v4238 = vld [vmem:[%s5 + $0x1b0] sm:$0xff]
    %v4239 = vld [vmem:[%s5 + $0x1b8] sm:$0xff]
    %v4240 = vld [vmem:[%s5 + $0x1c0] sm:$0xff]
    %v4241 = vld [vmem:[%s5 + $0x1c8] sm:$0xff]
    %v4242 = vld [vmem:[%s5 + $0x1d0] sm:$0xff]
    %v4243 = vld [vmem:[%s5 + $0x1d8] sm:$0xff]
    %v4244 = vld [vmem:[%s5 + $0x1e0] sm:$0xff]
    %v4245 = vld [vmem:[%s5 + $0x1e8] sm:$0xff]
    %v4246 = vld [vmem:[%s5 + $0x1f0] sm:$0xff]
    %v4247 = vld [vmem:[%s5 + $0x1f8] sm:$0xff]
    %v4248 = vld [vmem:[%s5 + $0x200] sm:$0xff]
    %v4249 = vld [vmem:[%s5 + $0x208] sm:$0xff]
    %v4250 = vld [vmem:[%s5 + $0x210] sm:$0xff]
    %v4251 = vld [vmem:[%s5 + $0x218] sm:$0xff]
    %v4252 = vld [vmem:[%s5 + $0x220] sm:$0xff]
    %v4253 = vld [vmem:[%s5 + $0x228] sm:$0xff]
    %v4254 = vld [vmem:[%s5 + $0x230] sm:$0xff]
    %v4255 = vld [vmem:[%s5 + $0x238] sm:$0xff]
    %v4256 = vld [vmem:[%s5 + $0x240] sm:$0xff]
    %v4257 = vld [vmem:[%s5 + $0x248] sm:$0xff]
    %v4258 = vld [vmem:[%s5 + $0x250] sm:$0xff]
    %v4259 = vld [vmem:[%s5 + $0x258] sm:$0xff]
    %v4260 = vld [vmem:[%s5 + $0x260] sm:$0xff]
    %v4261 = vld [vmem:[%s5 + $0x268] sm:$0xff]
    %v4262 = vld [vmem:[%s5 + $0x270] sm:$0xff]
    %v4263 = vld [vmem:[%s5 + $0x278] sm:$0xff]
    %v4264 = vld [vmem:[%s5 + $0x280] sm:$0xff]
    %v4265 = vld [vmem:[%s5 + $0x288] sm:$0xff]
    %v4266 = vld [vmem:[%s5 + $0x290] sm:$0xff]
    %v4267 = vld [vmem:[%s5 + $0x298] sm:$0xff]
    %v4268 = vld [vmem:[%s5 + $0x2a0] sm:$0xff]
    %v4269 = vld [vmem:[%s5 + $0x2a8] sm:$0xff]
    %v4270 = vld [vmem:[%s5 + $0x2b0] sm:$0xff]
    %v4271 = vld [vmem:[%s5 + $0x2b8] sm:$0xff]
    %v4272 = vld [vmem:[%s5 + $0x2c0] sm:$0xff]
    %v4273 = vld [vmem:[%s5 + $0x2c8] sm:$0xff]
    %v4274 = vld [vmem:[%s5 + $0x2d0] sm:$0xff]
    %v4275 = vld [vmem:[%s5 + $0x2d8] sm:$0xff]
    %v4276 = vld [vmem:[%s5 + $0x2e0] sm:$0xff]
    %v4277 = vld [vmem:[%s5 + $0x2e8] sm:$0xff]
    %v4278 = vld [vmem:[%s5 + $0x2f0] sm:$0xff]
    %v4279 = vld [vmem:[%s5 + $0x2f8] sm:$0xff]
    %v4280 = vld [vmem:[%s6] sm:$0x1]
    %v4282 = vlaneseq
    %v4283 = vshrl.u32 %v4282, 7
    %v4284 = vsub.s32 0, %v4283
    %v4285 = vrot.slane %v4280, %v4284
    %v4289 = vcombine.high %v4182, %v4182
    %v4291 = vunpack.c.l.s4 1983009808
    %v4292 = vunpack.c.0.s8 %v4291
    %v4293 = vlaneseq
    %v4294 = vshrl.u32 %v4293, 7
    %v4295 = vsub.s32 %v4292, %v4294
    %v4296 = vrot.slane %v4182, %v4295
    %v4298 = vunpack.c.l.s4 1983009808
    %v4299 = vunpack.c.0.s8 %v4298
    %v4300 = vlaneseq
    %v4301 = vshrl.u32 %v4300, 7
    %v4302 = vsub.s32 %v4299, %v4301
    %v4303 = vrot.slane %v4289, %v4302
    %v4304 = vcombine.high %v4296, %v4296
    %v4305 = vcombine.high %v4303, %v4303
    %v4307 = vunpack.c.l.s4 1983009808
    %v4308 = vunpack.c.0.s8 %v4307
    %v4309 = vlaneseq
    %v4310 = vshrl.u32 %v4309, 7
    %v4311 = vsub.s32 %v4308, %v4310
    %v4312 = vrot.slane %v4183, %v4311
    %v4313 = vcombine.high %v4312, %v4312
    %4320 = vmatprep.subr.mxu0 0.0
    %4321 = vmatpush1.msra.mxu0 %v4199
    %4322 = vmatprep.subr.mxu0 0.0
    %4323 = vmatpush1.msra.mxu0 %v4198
    %4324 = vmatprep.subr.mxu0 0.0
    %4325 = vmatpush1.msra.mxu0 %v4197
    %4326 = vmatprep.subr.mxu0 0.0
    %4327 = vmatpush1.msra.mxu0 %v4196
    %4328 = vmatprep.subr.mxu0 0.0
    %4329 = vmatpush1.msra.mxu0 %v4195
    %4330 = vmatprep.subr.mxu0 0.0
    %4331 = vmatpush1.msra.mxu0 %v4194
    %4332 = vmatprep.subr.mxu0 0.0
    %4333 = vmatpush1.msra.mxu0 %v4193
    %4334 = vmatprep.subr.mxu0 0.0
    %4335 = vmatpush1.msra.mxu0 %v4192
    %4336 = vmatprep.subr.mxu0 0.0
    %4337 = vmatpush1.msra.mxu0 %v4191
    %4338 = vmatprep.subr.mxu0 0.0
    %4339 = vmatpush1.msra.mxu0 %v4190
    %4340 = vmatprep.subr.mxu0 0.0
    %4341 = vmatpush1.msra.mxu0 %v4189
    %4342 = vmatprep.subr.mxu0 0.0
    %4343 = vmatpush1.msra.mxu0 %v4188
    %4344 = vmatprep.subr.mxu0 0.0
    %4345 = vmatpush1.msra.mxu0 %v4187
    %4346 = vmatprep.subr.mxu0 0.0
    %4347 = vmatpush1.msra.mxu0 %v4186
    %4348 = vmatprep.subr.mxu0 0.0
    %4349 = vmatpush1.msra.mxu0 %v4185
    %4350 = vmatprep.subr.mxu0 0.0
    %4351 = vmatpush1.msra.mxu0 %v4184
    %4352 = vmatprep.subr.mxu0 0.0
    %4353 = vmatpush2.msra.mxu0 %v4215
    %4354 = vmatprep.subr.mxu0 0.0
    %4355 = vmatpush2.msra.mxu0 %v4214
    %4356 = vmatprep.subr.mxu0 0.0
    %4357 = vmatpush2.msra.mxu0 %v4213
    %4358 = vmatprep.subr.mxu0 0.0
    %4359 = vmatpush2.msra.mxu0 %v4212
    %4360 = vmatprep.subr.mxu0 0.0
    %4361 = vmatpush2.msra.mxu0 %v4211
    %4362 = vmatprep.subr.mxu0 0.0
    %4363 = vmatpush2.msra.mxu0 %v4210
    %4364 = vmatprep.subr.mxu0 0.0
    %4365 = vmatpush2.msra.mxu0 %v4209
    %4366 = vmatprep.subr.mxu0 0.0
    %4367 = vmatpush2.msra.mxu0 %v4208
    %4368 = vmatprep.subr.mxu0 0.0
    %4369 = vmatpush2.msra.mxu0 %v4207
    %4370 = vmatprep.subr.mxu0 0.0
    %4371 = vmatpush2.msra.mxu0 %v4206
    %4372 = vmatprep.subr.mxu0 0.0
    %4373 = vmatpush2.msra.mxu0 %v4205
    %4374 = vmatprep.subr.mxu0 0.0
    %4375 = vmatpush2.msra.mxu0 %v4204
    %4376 = vmatprep.subr.mxu0 0.0
    %4377 = vmatpush2.msra.mxu0 %v4203
    %4378 = vmatprep.subr.mxu0 0.0
    %4379 = vmatpush2.msra.mxu0 %v4202
    %4380 = vmatprep.subr.mxu0 0.0
    %4381 = vmatpush2.msra.mxu0 %v4201
    %4382 = vmatprep.subr.mxu0 0.0
    %4383 = vmatpush2.msra.mxu0 %v4200
    %4384 = vmatprep.mubr.f32.mxu0 %v4304
    %4385 = vmatmul.mubr.f32.gmra.mxu0 %v4296
    %v4386 = vpop.f32.mrf.mxu0
    %v4387 = vadd.f32 %v4285, %v4386
    %v4388 = vpop.f32.mrf.mxu0
    %4389 = vdwg.mxu0
    %4390 = vmatprep.subr.mxu0 0.0
    %4391 = vmatpush1.msra.mxu0 %v4231
    %4392 = vmatprep.subr.mxu0 0.0
    %4393 = vmatpush1.msra.mxu0 %v4230
    %4394 = vmatprep.subr.mxu0 0.0
    %4395 = vmatpush1.msra.mxu0 %v4229
    %4396 = vmatprep.subr.mxu0 0.0
    %4397 = vmatpush1.msra.mxu0 %v4228
    %4398 = vmatprep.subr.mxu0 0.0
    %4399 = vmatpush1.msra.mxu0 %v4227
    %4400 = vmatprep.subr.mxu0 0.0
    %4401 = vmatpush1.msra.mxu0 %v4226
    %4402 = vmatprep.subr.mxu0 0.0
    %4403 = vmatpush1.msra.mxu0 %v4225
    %4404 = vmatprep.subr.mxu0 0.0
    %4405 = vmatpush1.msra.mxu0 %v4224
    %4406 = vmatprep.subr.mxu0 0.0
    %4407 = vmatpush1.msra.mxu0 %v4223
    %4408 = vmatprep.subr.mxu0 0.0
    %4409 = vmatpush1.msra.mxu0 %v4222
    %4410 = vmatprep.subr.mxu0 0.0
    %4411 = vmatpush1.msra.mxu0 %v4221
    %4412 = vmatprep.subr.mxu0 0.0
    %4413 = vmatpush1.msra.mxu0 %v4220
    %4414 = vmatprep.subr.mxu0 0.0
    %4415 = vmatpush1.msra.mxu0 %v4219
    %4416 = vmatprep.subr.mxu0 0.0
    %4417 = vmatpush1.msra.mxu0 %v4218
    %4418 = vmatprep.subr.mxu0 0.0
    %4419 = vmatpush1.msra.mxu0 %v4217
    %4420 = vmatprep.subr.mxu0 0.0
    %4421 = vmatpush1.msra.mxu0 %v4216
    %4422 = vmatprep.subr.mxu0 0.0
    %4423 = vmatpush2.msra.mxu0 %v4247
    %4424 = vmatprep.subr.mxu0 0.0
    %4425 = vmatpush2.msra.mxu0 %v4246
    %4426 = vmatprep.subr.mxu0 0.0
    %4427 = vmatpush2.msra.mxu0 %v4245
    %4428 = vmatprep.subr.mxu0 0.0
    %4429 = vmatpush2.msra.mxu0 %v4244
    %4430 = vmatprep.subr.mxu0 0.0
    %4431 = vmatpush2.msra.mxu0 %v4243
    %4432 = vmatprep.subr.mxu0 0.0
    %4433 = vmatpush2.msra.mxu0 %v4242
    %4434 = vmatprep.subr.mxu0 0.0
    %4435 = vmatpush2.msra.mxu0 %v4241
    %4436 = vmatprep.subr.mxu0 0.0
    %4437 = vmatpush2.msra.mxu0 %v4240
    %4438 = vmatprep.subr.mxu0 0.0
    %4439 = vmatpush2.msra.mxu0 %v4239
    %4440 = vmatprep.subr.mxu0 0.0
    %4441 = vmatpush2.msra.mxu0 %v4238
    %4442 = vmatprep.subr.mxu0 0.0
    %4443 = vmatpush2.msra.mxu0 %v4237
    %4444 = vmatprep.subr.mxu0 0.0
    %4445 = vmatpush2.msra.mxu0 %v4236
    %4446 = vmatprep.subr.mxu0 0.0
    %4447 = vmatpush2.msra.mxu0 %v4235
    %4448 = vmatprep.subr.mxu0 0.0
    %4449 = vmatpush2.msra.mxu0 %v4234
    %4450 = vmatprep.subr.mxu0 0.0
    %4451 = vmatpush2.msra.mxu0 %v4233
    %4452 = vmatprep.subr.mxu0 0.0
    %4453 = vmatpush2.msra.mxu0 %v4232
    %4454 = vmatprep.mubr.f32.mxu0 %v4305
    %4455 = vmatmul.mubr.f32.gmra.mxu0 %v4303
    %v4456 = vpop.f32.mrf.mxu0
    %v4457 = vadd.f32 %v4387, %v4456
    %v4458 = vpop.f32.mrf.mxu0
    %4459 = vdwg.mxu0
    %4460 = vmatprep.subr.mxu0 0.0
    %4461 = vmatpush1.msra.mxu0 %v4263
    %4462 = vmatprep.subr.mxu0 0.0
    %4463 = vmatpush1.msra.mxu0 %v4262
    %4464 = vmatprep.subr.mxu0 0.0
    %4465 = vmatpush1.msra.mxu0 %v4261
    %4466 = vmatprep.subr.mxu0 0.0
    %4467 = vmatpush1.msra.mxu0 %v4260
    %4468 = vmatprep.subr.mxu0 0.0
    %4469 = vmatpush1.msra.mxu0 %v4259
    %4470 = vmatprep.subr.mxu0 0.0
    %4471 = vmatpush1.msra.mxu0 %v4258
    %4472 = vmatprep.subr.mxu0 0.0
    %4473 = vmatpush1.msra.mxu0 %v4257
    %4474 = vmatprep.subr.mxu0 0.0
    %4475 = vmatpush1.msra.mxu0 %v4256
    %4476 = vmatprep.subr.mxu0 0.0
    %4477 = vmatpush1.msra.mxu0 %v4255
    %4478 = vmatprep.subr.mxu0 0.0
    %4479 = vmatpush1.msra.mxu0 %v4254
    %4480 = vmatprep.subr.mxu0 0.0
    %4481 = vmatpush1.msra.mxu0 %v4253
    %4482 = vmatprep.subr.mxu0 0.0
    %4483 = vmatpush1.msra.mxu0 %v4252
    %4484 = vmatprep.subr.mxu0 0.0
    %4485 = vmatpush1.msra.mxu0 %v4251
    %4486 = vmatprep.subr.mxu0 0.0
    %4487 = vmatpush1.msra.mxu0 %v4250
    %4488 = vmatprep.subr.mxu0 0.0
    %4489 = vmatpush1.msra.mxu0 %v4249
    %4490 = vmatprep.subr.mxu0 0.0
    %4491 = vmatpush1.msra.mxu0 %v4248
    %4492 = vmatprep.subr.mxu0 0.0
    %4493 = vmatpush2.msra.mxu0 %v4279
    %4494 = vmatprep.subr.mxu0 0.0
    %4495 = vmatpush2.msra.mxu0 %v4278
    %4496 = vmatprep.subr.mxu0 0.0
    %4497 = vmatpush2.msra.mxu0 %v4277
    %4498 = vmatprep.subr.mxu0 0.0
    %4499 = vmatpush2.msra.mxu0 %v4276
    %4500 = vmatprep.subr.mxu0 0.0
    %4501 = vmatpush2.msra.mxu0 %v4275
    %4502 = vmatprep.subr.mxu0 0.0
    %4503 = vmatpush2.msra.mxu0 %v4274
    %4504 = vmatprep.subr.mxu0 0.0
    %4505 = vmatpush2.msra.mxu0 %v4273
    %4506 = vmatprep.subr.mxu0 0.0
    %4507 = vmatpush2.msra.mxu0 %v4272
    %4508 = vmatprep.subr.mxu0 0.0
    %4509 = vmatpush2.msra.mxu0 %v4271
    %4510 = vmatprep.subr.mxu0 0.0
    %4511 = vmatpush2.msra.mxu0 %v4270
    %4512 = vmatprep.subr.mxu0 0.0
    %4513 = vmatpush2.msra.mxu0 %v4269
    %4514 = vmatprep.subr.mxu0 0.0
    %4515 = vmatpush2.msra.mxu0 %v4268
    %4516 = vmatprep.subr.mxu0 0.0
    %4517 = vmatpush2.msra.mxu0 %v4267
    %4518 = vmatprep.subr.mxu0 0.0
    %4519 = vmatpush2.msra.mxu0 %v4266
    %4520 = vmatprep.subr.mxu0 0.0
    %4521 = vmatpush2.msra.mxu0 %v4265
    %4522 = vmatprep.subr.mxu0 0.0
    %4523 = vmatpush2.msra.mxu0 %v4264
    %4524 = vmatprep.mubr.f32.mxu0 %v4313
    %4525 = vmatmul.mubr.f32.gmra.mxu0 %v4312
    %v4526 = vpop.f32.mrf.mxu0
    %v4527 = vadd.f32 %v4457, %v4526
    %v4528 = vpop.f32.mrf.mxu0
    %4529 = vdwg.mxu0
    %vm4530 = vcmask 1041408
    %v4531 = vsel %vm4530, %v4527, -inf
    %4532 = vmax.xlane.f32.xlu0 %v4531
    %v4533 = vpop.xlane.xlu0 %4532
    %v4534 = vsub.f32 %v4527, %v4533
    %v4535 = vmul.f32 %v4534, 1.442695
    %v4536 = vpow.pop %v4535
    %v4537 = vsel %vm4530, %v4536, 0.0
    %4538 = vadd.xlane.f32.xlu0 %v4537
    %v4539 = vpop.xlane.xlu0 %4538
    %v4540 = vrcp.pop %v4539
    %v4541 = vmul.f32 %v4536, %v4540
    %4542 = vst [vmem:[#allocation3] sm:$0x3] %v4541
    // Predicated region
    $region30: #{cnn_forward.1} parent=1 // pred_check
      _
    $region31: #{cnn_forward.1} parent=1 // pred_check_branch
      %4544 = sbr.rel (0) target = $region33
    $region32: #{cnn_forward.1} parent=1 // pred_region
      %s4546 = ssub.s32 32, 32
      %4547 = vsyncadd [#allocation4], %s4546
      %s4549 = sshll.u32 [#allocation3], 4
      %s4550 = int_to_ptr.vmem [resolvable:$true] %s4549
      %4552 = dma.vmem_to_hbm [thread:$0]  %s4550, 32, %s7, [#allocation4]
    $region33: #{cnn_forward.1} parent=1 // pred_fallthru
      _
    // Predicated region
    $region34: #{cnn_forward.1} parent=1 // pred_check
      _
    $region35: #{cnn_forward.1} parent=1 // pred_check_branch
      %4554 = sbr.rel (0) target = $region37
    $region36: #{cnn_forward.1} parent=1 // pred_region
      %4555 = dma.done [#allocation4], 32
    $region37: #{cnn_forward.1} parent=1 // pred_fallthru
      _
    %4556 = vsyncpa [#allocation4], 1

</llo_original>
